<compile_context>
chip_gen: v7x
topology: tpu7x:2x2x1
jax: 0.10.0
libtpu: 0.0.40
codegen_flags: <defaults>
</compile_context>

<pallas_src>
import functools

import jax
import jax.numpy as jnp
from jax import lax
from jax.experimental import pallas as pl
from jax.experimental.pallas import tpu as pltpu


def _conv_kx1_kernel(x_ref, w_ref, b_ref, o_ref, *, K, stride, Cin, Cout,
                     H_out, G8, TM, lrelu):
    """Conv2d (K,1)/(stride,1) along H + bias + LeakyReLU(0.1) for TM rows.

    x_ref: (TM*G8, stride*Cin)  padded rows grouped by `stride`; per local row
                                m, group g lives at sublane m*G8 + g, and the
                                lane block r*Cin:(r+1)*Cin holds padded row
                                stride*g + r.
    w_ref: (K*Cin, Cout)        tap-major flattened weights.
    b_ref: (1, Cout)
    o_ref: (TM, H_out, Cout)
    """
    gmax = (K - 1) // stride
    R = TM * G8 - gmax            # rows of the flattened "virtual im2col";
                                  # row m*G8 + h is output (m, h), rows with
                                  # h >= H_out are junk and never stored.
    xm = x_ref[...]               # (TM*G8, stride*Cin)
    wv = w_ref[...]               # (K*Cin, Cout)

    acc = jnp.zeros((R, Cout), jnp.float32)
    if Cin == 1:
        # Layer 0: contraction depth K*Cin == K is tiny -> keep it on the VPU
        # as broadcast FMAs; an MXU dot here would pay the full row-push cost
        # for <2% systolic-depth utilization.
        for kh in range(K):                                # static, K <= 5
            g0, r = kh // stride, kh % stride
            tap = xm[g0:g0 + R, r:r + 1]                   # (R, 1)
            acc = acc + tap * wv[kh:kh + 1, :]             # (R, Cout) VPU FMA
    else:
        # Taps sharing the same group offset g0 sit in contiguous lane slots
        # [0, cnt*Cin) of the stride-grouped layout, so they fuse into one
        # deep matmul: 2 dots (depth 3*Cin and 2*Cin) for the stride-3 layers
        # instead of K depth-Cin dots.
        for g0 in range(gmax + 1):                         # static, <= K
            cnt = min(stride, K - g0 * stride)
            piece = xm[g0:g0 + R, :cnt * Cin]              # (R, cnt*Cin)
            wp = wv[g0 * stride * Cin:(g0 * stride + cnt) * Cin, :]
            acc = acc + jnp.dot(piece, wp,
                                preferred_element_type=jnp.float32)

    acc = acc + b_ref[...]                                 # (1, Cout) broadcast
    if lrelu:
        acc = jnp.where(acc >= 0, acc, 0.1 * acc)          # LeakyReLU(0.1)
    acc = acc.astype(o_ref.dtype)

    # Valid output rows for local row m live at acc[m*G8 : m*G8 + H_out]
    # (m*G8 is 8-aligned by construction).
    for m in range(TM):                                    # static, TM <= 8
        o_ref[m] = acc[m * G8:m * G8 + H_out, :]


def _pick_tm(M):
    """Largest divisor of M that is <= 8 and leaves >= 2 grid tiles (megacore)."""
    cap = min(8, max(1, M // 2))
    for d in range(cap, 0, -1):
        if M % d == 0:
            return d
    return 1


def conv_kx1(x_mhc, w_flat, b, *, K, stride, pad, lrelu, tm):
    """x_mhc: (M, H, Cin) -> (M, H_out, Cout)."""
    M, H, Cin = x_mhc.shape
    Cout = w_flat.shape[1]
    H_out = (H + 2 * pad - K) // stride + 1

    Hp = H + 2 * pad
    G = -(-Hp // stride)              # groups of `stride` padded rows
    G8 = -(-G // 8) * 8               # round groups up to an 8-sublane multiple

    # conv zero-padding + zero rows up to G8*stride, then group rows by
    # `stride` so every kernel tap maps to a (row-offset, lane-slot) slice.
    # Flattening (M, G8) lets one matmul cover a whole TM-row tile.
    xg = jnp.pad(x_mhc, ((0, 0), (pad, G8 * stride - H - pad), (0, 0)))
    xg = xg.reshape(M * G8, stride * Cin)

    kernel = functools.partial(_conv_kx1_kernel, K=K, stride=stride, Cin=Cin,
                               Cout=Cout, H_out=H_out, G8=G8, TM=tm,
                               lrelu=lrelu)
    n_blk = M // tm
    return pl.pallas_call(
        kernel,
        out_shape=jax.ShapeDtypeStruct((M, H_out, Cout), jnp.float32),
        grid=(n_blk,),
        in_specs=[
            pl.BlockSpec((tm * G8, stride * Cin), lambda m: (m, 0)),
            pl.BlockSpec((K * Cin, Cout), lambda m: (0, 0)),
            pl.BlockSpec((1, Cout), lambda m: (0, 0)),
        ],
        out_specs=pl.BlockSpec((tm, H_out, Cout), lambda m: (m, 0, 0)),
        compiler_params=pltpu.CompilerParams(
            dimension_semantics=("parallel",)),
    )(xg, w_flat, b.reshape(1, Cout))


def make_params(key, in_channels, out_channels):
    """Deterministic synthetic parameters, shapes exactly as in the nn.Module."""
    cfgs = []
    cur = 32
    cin = in_channels
    for _ in range(4):
        cfgs.append(dict(cin=cin, cout=cur, K=5, stride=3, pad=2, lrelu=True))
        cin = cur
        cur = min(cur * 4, out_channels)
    cfgs.append(dict(cin=out_channels, cout=out_channels, K=5, stride=1, pad=2,
                     lrelu=True))
    cfgs.append(dict(cin=out_channels, cout=1, K=3, stride=1, pad=1,
                     lrelu=False))  # out_layer (no activation)
    params = []
    for i, c in enumerate(cfgs):
        kw, kb = jax.random.split(jax.random.fold_in(key, i))
        w = jax.random.normal(kw, (c["K"], c["cin"], c["cout"]), jnp.float32) * 0.1
        bb = jax.random.normal(kb, (c["cout"],), jnp.float32) * 0.1
        params.append((w, bb))
    return cfgs, params


def period_discriminator_forward(x, cfgs, params, periods):
    """x: (B, C, T) -> (flatten(out), [feature matrices in NCHW])."""
    B, C, T = x.shape
    if T % periods != 0:
        # mirrors F.pad(..., 'reflect'); like PyTorch it requires pad < T.
        p = periods - T % periods
        x = jnp.pad(x, ((0, 0), (0, 0), (0, p)), mode="reflect")
        T += p
    H = T // periods
    M = B * periods
    x4 = x.reshape(B, C, H, periods)                                  # NCHW
    xm = jnp.transpose(x4, (0, 3, 2, 1)).reshape(M, H, C)             # (M,H,C)

    tm = _pick_tm(M)
    feats = []
    for c, (w, bb) in zip(cfgs, params):
        w_flat = w.reshape(c["K"] * c["cin"], c["cout"])
        xm = conv_kx1(xm, w_flat, bb, K=c["K"], stride=c["stride"],
                      pad=c["pad"], lrelu=c["lrelu"], tm=tm)
        Ht, Ct = xm.shape[1], xm.shape[2]
        feats.append(jnp.transpose(xm.reshape(B, periods, Ht, Ct), (0, 3, 2, 1)))

    H_last = xm.shape[1]  # final xm: (M, H_last, 1)
    flat = jnp.transpose(xm.reshape(B, periods, H_last), (0, 2, 1)).reshape(
        B, H_last * periods)
    return flat, feats


def reference_forward(x, cfgs, params, periods):
    """Pure-JAX (XLA conv) reference mirroring the PyTorch forward."""
    B, C, T = x.shape
    if T % periods != 0:
        p = periods - T % periods
        x = jnp.pad(x, ((0, 0), (0, 0), (0, p)), mode="reflect")
        T += p
    h = x.reshape(B, C, T // periods, periods)
    feats = []
    for c, (w, bb) in zip(cfgs, params):
        w_oihw = jnp.transpose(w, (2, 1, 0))[:, :, :, None]  # (Cout, Cin, K, 1)
        h = lax.conv_general_dilated(
            h, w_oihw, window_strides=(c["stride"], 1),
            padding=((c["pad"], c["pad"]), (0, 0)),
            dimension_numbers=("NCHW", "OIHW", "NCHW")) + bb.reshape(1, -1, 1, 1)
        if c["lrelu"]:
            h = jnp.where(h >= 0, h, 0.1 * h)
        feats.append(h)
    return h.reshape(B, -1), feats


if __name__ == "__main__":
    key = jax.random.PRNGKey(0)
    B, in_channels, T = 2, 1, 122       # T % periods != 0 -> exercises reflect pad
    periods, out_channels = 4, 64

    cfgs, params = make_params(jax.random.fold_in(key, 123), in_channels,
                               out_channels)
    x = jax.random.normal(jax.random.fold_in(key, 7), (B, in_channels, T),
                          jnp.float32)

    fwd = jax.jit(lambda xx: period_discriminator_forward(xx, cfgs, params,
                                                          periods))
    flat, feats = fwd(x)
    jax.block_until_ready(flat)

    ref_flat, ref_feats = reference_forward(x, cfgs, params, periods)
    assert flat.shape == ref_flat.shape, (flat.shape, ref_flat.shape)
    assert jnp.allclose(flat, ref_flat, atol=2e-4, rtol=2e-4)
    assert len(feats) == len(ref_feats) == 6
    for f, rf in zip(feats, ref_feats):
        assert f.shape == rf.shape, (f.shape, rf.shape)
        assert jnp.allclose(f, rf, atol=2e-4, rtol=2e-4)

    print("KERNEL_OK")
</pallas_src>

<mosaic_0001>
module attributes {stable_mosaic.version = 11 : i64} {
  func.func @_conv_kx1_kernel(%arg0: i32, %arg1: memref<64x3xf32, #tpu.memory_space<vmem>>, %arg2: memref<5x32xf32, #tpu.memory_space<vmem>>, %arg3: memref<1x32xf32, #tpu.memory_space<vmem>>, %arg4: memref<4x11x32xf32, #tpu.memory_space<vmem>>) attributes {dimension_semantics = [#tpu.dimension_semantics<parallel>], iteration_bounds = array<i64: 2>, scalar_prefetch = 0 : i64, scratch_operands = 0 : i64, tpu.core_type = #tpu.core_type<tc>, window_params = [{transform_indices = @transform_0, window_bounds = array<i64: 64, 3>}, {pipeline_mode = #tpu.pipeline_mode<synchronous>, transform_indices = @transform_1, window_bounds = array<i64: 5, 32>}, {pipeline_mode = #tpu.pipeline_mode<synchronous>, transform_indices = @transform_2, window_bounds = array<i64: 1, 32>}, {transform_indices = @transform_3, window_bounds = array<i64: 4, 11, 32>}]} {
    %c0 = arith.constant 0 : index
    %c0_0 = arith.constant 0 : index
    %0 = vector.load %arg1[%c0, %c0_0] : memref<64x3xf32, #tpu.memory_space<vmem>>, vector<64x3xf32>
    %c0_1 = arith.constant 0 : index
    %c0_2 = arith.constant 0 : index
    %1 = vector.load %arg2[%c0_1, %c0_2] : memref<5x32xf32, #tpu.memory_space<vmem>>, vector<5x32xf32>
    %cst = arith.constant 0.000000e+00 : f32
    %2 = vector.broadcast %cst : f32 to vector<63x32xf32>
    %3 = vector.extract_strided_slice %0 {offsets = [0, 0], sizes = [63, 1], strides = [1, 1]} : vector<64x3xf32> to vector<63x1xf32>
    %4 = vector.extract_strided_slice %1 {offsets = [0, 0], sizes = [1, 32], strides = [1, 1]} : vector<5x32xf32> to vector<1x32xf32>
    %5 = vector.broadcast %3 : vector<63x1xf32> to vector<63x32xf32>
    %6 = vector.broadcast %4 : vector<1x32xf32> to vector<63x32xf32>
    %7 = arith.mulf %5, %6 : vector<63x32xf32>
    %8 = arith.addf %2, %7 : vector<63x32xf32>
    %9 = vector.extract_strided_slice %0 {offsets = [0, 1], sizes = [63, 1], strides = [1, 1]} : vector<64x3xf32> to vector<63x1xf32>
    %10 = vector.extract_strided_slice %1 {offsets = [1, 0], sizes = [1, 32], strides = [1, 1]} : vector<5x32xf32> to vector<1x32xf32>
    %11 = vector.broadcast %9 : vector<63x1xf32> to vector<63x32xf32>
    %12 = vector.broadcast %10 : vector<1x32xf32> to vector<63x32xf32>
    %13 = arith.mulf %11, %12 : vector<63x32xf32>
    %14 = arith.addf %8, %13 : vector<63x32xf32>
    %15 = vector.extract_strided_slice %0 {offsets = [0, 2], sizes = [63, 1], strides = [1, 1]} : vector<64x3xf32> to vector<63x1xf32>
    %16 = vector.extract_strided_slice %1 {offsets = [2, 0], sizes = [1, 32], strides = [1, 1]} : vector<5x32xf32> to vector<1x32xf32>
    %17 = vector.broadcast %15 : vector<63x1xf32> to vector<63x32xf32>
    %18 = vector.broadcast %16 : vector<1x32xf32> to vector<63x32xf32>
    %19 = arith.mulf %17, %18 : vector<63x32xf32>
    %20 = arith.addf %14, %19 : vector<63x32xf32>
    %21 = vector.extract_strided_slice %0 {offsets = [1, 0], sizes = [63, 1], strides = [1, 1]} : vector<64x3xf32> to vector<63x1xf32>
    %22 = vector.extract_strided_slice %1 {offsets = [3, 0], sizes = [1, 32], strides = [1, 1]} : vector<5x32xf32> to vector<1x32xf32>
    %23 = vector.broadcast %21 : vector<63x1xf32> to vector<63x32xf32>
    %24 = vector.broadcast %22 : vector<1x32xf32> to vector<63x32xf32>
    %25 = arith.mulf %23, %24 : vector<63x32xf32>
    %26 = arith.addf %20, %25 : vector<63x32xf32>
    %27 = vector.extract_strided_slice %0 {offsets = [1, 1], sizes = [63, 1], strides = [1, 1]} : vector<64x3xf32> to vector<63x1xf32>
    %28 = vector.extract_strided_slice %1 {offsets = [4, 0], sizes = [1, 32], strides = [1, 1]} : vector<5x32xf32> to vector<1x32xf32>
    %29 = vector.broadcast %27 : vector<63x1xf32> to vector<63x32xf32>
    %30 = vector.broadcast %28 : vector<1x32xf32> to vector<63x32xf32>
    %31 = arith.mulf %29, %30 : vector<63x32xf32>
    %32 = arith.addf %26, %31 : vector<63x32xf32>
    %c0_3 = arith.constant 0 : index
    %c0_4 = arith.constant 0 : index
    %33 = vector.load %arg3[%c0_3, %c0_4] : memref<1x32xf32, #tpu.memory_space<vmem>>, vector<1x32xf32>
    %34 = vector.broadcast %33 : vector<1x32xf32> to vector<63x32xf32>
    %35 = arith.addf %32, %34 : vector<63x32xf32>
    %cst_5 = arith.constant 0.000000e+00 : f32
    %36 = vector.broadcast %cst_5 : f32 to vector<63x32xf32>
    %37 = arith.cmpf oge, %35, %36 : vector<63x32xf32>
    %cst_6 = arith.constant 1.000000e-01 : f32
    %38 = vector.broadcast %cst_6 : f32 to vector<63x32xf32>
    %39 = arith.mulf %38, %35 : vector<63x32xf32>
    %40 = arith.select %37, %35, %39 : vector<63x32xi1>, vector<63x32xf32>
    %41 = vector.extract_strided_slice %40 {offsets = [0, 0], sizes = [11, 32], strides = [1, 1]} : vector<63x32xf32> to vector<11x32xf32>
    %c0_7 = arith.constant 0 : index
    %c0_8 = arith.constant 0 : index
    %c0_9 = arith.constant 0 : index
    %42 = vector.load %arg4[%c0_7, %c0_8, %c0_9] : memref<4x11x32xf32, #tpu.memory_space<vmem>>, vector<1x11x32xf32>
    %43 = vector.shape_cast %42 : vector<1x11x32xf32> to vector<11x32xf32>
    %44 = vector.shape_cast %41 : vector<11x32xf32> to vector<1x11x32xf32>
    tpu.vector_store %arg4[%c0_7, %c0_8, %c0_9], %44 {strides = array<i32>} : memref<4x11x32xf32, #tpu.memory_space<vmem>>, vector<1x11x32xf32>,
    %45 = vector.extract_strided_slice %40 {offsets = [16, 0], sizes = [11, 32], strides = [1, 1]} : vector<63x32xf32> to vector<11x32xf32>
    %c1 = arith.constant 1 : index
    %c0_10 = arith.constant 0 : index
    %c0_11 = arith.constant 0 : index
    %46 = vector.load %arg4[%c1, %c0_10, %c0_11] : memref<4x11x32xf32, #tpu.memory_space<vmem>>, vector<1x11x32xf32>
    %47 = vector.shape_cast %46 : vector<1x11x32xf32> to vector<11x32xf32>
    %48 = vector.shape_cast %45 : vector<11x32xf32> to vector<1x11x32xf32>
    tpu.vector_store %arg4[%c1, %c0_10, %c0_11], %48 {strides = array<i32>} : memref<4x11x32xf32, #tpu.memory_space<vmem>>, vector<1x11x32xf32>,
    %49 = vector.extract_strided_slice %40 {offsets = [32, 0], sizes = [11, 32], strides = [1, 1]} : vector<63x32xf32> to vector<11x32xf32>
    %c2 = arith.constant 2 : index
    %c0_12 = arith.constant 0 : index
    %c0_13 = arith.constant 0 : index
    %50 = vector.load %arg4[%c2, %c0_12, %c0_13] : memref<4x11x32xf32, #tpu.memory_space<vmem>>, vector<1x11x32xf32>
    %51 = vector.shape_cast %50 : vector<1x11x32xf32> to vector<11x32xf32>
    %52 = vector.shape_cast %49 : vector<11x32xf32> to vector<1x11x32xf32>
    tpu.vector_store %arg4[%c2, %c0_12, %c0_13], %52 {strides = array<i32>} : memref<4x11x32xf32, #tpu.memory_space<vmem>>, vector<1x11x32xf32>,
    %53 = vector.extract_strided_slice %40 {offsets = [48, 0], sizes = [11, 32], strides = [1, 1]} : vector<63x32xf32> to vector<11x32xf32>
    %c3 = arith.constant 3 : index
    %c0_14 = arith.constant 0 : index
    %c0_15 = arith.constant 0 : index
    %54 = vector.load %arg4[%c3, %c0_14, %c0_15] : memref<4x11x32xf32, #tpu.memory_space<vmem>>, vector<1x11x32xf32>
    %55 = vector.shape_cast %54 : vector<1x11x32xf32> to vector<11x32xf32>
    %56 = vector.shape_cast %53 : vector<11x32xf32> to vector<1x11x32xf32>
    tpu.vector_store %arg4[%c3, %c0_14, %c0_15], %56 {strides = array<i32>} : memref<4x11x32xf32, #tpu.memory_space<vmem>>, vector<1x11x32xf32>,
    return
  }
  func.func @transform_0(%arg0: i32) -> (i32, i32) {
    %c0_i32 = arith.constant 0 : i32
    %c0_i32_0 = arith.constant 0 : i32
    return %arg0, %c0_i32 : i32, i32
  }
  func.func @transform_1(%arg0: i32) -> (i32, i32) {
    %c0_i32 = arith.constant 0 : i32
    %c0_i32_0 = arith.constant 0 : i32
    %c0_i32_1 = arith.constant 0 : i32
    return %c0_i32, %c0_i32_0 : i32, i32
  }
  func.func @transform_2(%arg0: i32) -> (i32, i32) {
    %c0_i32 = arith.constant 0 : i32
    %c0_i32_0 = arith.constant 0 : i32
    %c0_i32_1 = arith.constant 0 : i32
    return %c0_i32, %c0_i32_0 : i32, i32
  }
  func.func @transform_3(%arg0: i32) -> (i32, i32, i32) {
    %c0_i32 = arith.constant 0 : i32
    %c0_i32_0 = arith.constant 0 : i32
    %c0_i32_1 = arith.constant 0 : i32
    return %arg0, %c0_i32, %c0_i32_0 : i32, i32, i32
  }
}

module attributes {stable_mosaic.version = 11 : i64} {
  func.func @_conv_kx1_kernel(%arg0: i32, %arg1: memref<32x96xf32, #tpu.memory_space<vmem>>, %arg2: memref<160x64xf32, #tpu.memory_space<vmem>>, %arg3: memref<1x64xf32, #tpu.memory_space<vmem>>, %arg4: memref<4x4x64xf32, #tpu.memory_space<vmem>>) attributes {dimension_semantics = [#tpu.dimension_semantics<parallel>], iteration_bounds = array<i64: 2>, scalar_prefetch = 0 : i64, scratch_operands = 0 : i64, tpu.core_type = #tpu.core_type<tc>, window_params = [{transform_indices = @transform_0, window_bounds = array<i64: 32, 96>}, {pipeline_mode = #tpu.pipeline_mode<synchronous>, transform_indices = @transform_1, window_bounds = array<i64: 160, 64>}, {pipeline_mode = #tpu.pipeline_mode<synchronous>, transform_indices = @transform_2, window_bounds = array<i64: 1, 64>}, {transform_indices = @transform_3, window_bounds = array<i64: 4, 4, 64>}]} {
    %c0 = arith.constant 0 : index
    %c0_0 = arith.constant 0 : index
    %0 = vector.load %arg1[%c0, %c0_0] : memref<32x96xf32, #tpu.memory_space<vmem>>, vector<32x96xf32>
    %c0_1 = arith.constant 0 : index
    %c0_2 = arith.constant 0 : index
    %1 = vector.load %arg2[%c0_1, %c0_2] : memref<160x64xf32, #tpu.memory_space<vmem>>, vector<160x64xf32>
    %cst = arith.constant 0.000000e+00 : f32
    %2 = vector.broadcast %cst : f32 to vector<31x64xf32>
    %3 = vector.extract_strided_slice %0 {offsets = [0, 0], sizes = [31, 96], strides = [1, 1]} : vector<32x96xf32> to vector<31x96xf32>
    %4 = vector.extract_strided_slice %1 {offsets = [0, 0], sizes = [96, 64], strides = [1, 1]} : vector<160x64xf32> to vector<96x64xf32>
    %cst_3 = arith.constant dense<0.000000e+00> : vector<31x64xf32>
    %5 = tpu.matmul %3, %4, %cst_3 {dimension_numbers = #tpu.dot_dimension_numbers<[1], [0], [0], [1], [0, 0, 1, 1], [], []>} : vector<31x96xf32>, vector<96x64xf32>, vector<31x64xf32> -> vector<31x64xf32>
    %6 = arith.addf %2, %5 : vector<31x64xf32>
    %7 = vector.extract_strided_slice %0 {offsets = [1, 0], sizes = [31, 64], strides = [1, 1]} : vector<32x96xf32> to vector<31x64xf32>
    %8 = vector.extract_strided_slice %1 {offsets = [96, 0], sizes = [64, 64], strides = [1, 1]} : vector<160x64xf32> to vector<64x64xf32>
    %cst_4 = arith.constant dense<0.000000e+00> : vector<31x64xf32>
    %9 = tpu.matmul %7, %8, %cst_4 {dimension_numbers = #tpu.dot_dimension_numbers<[1], [0], [0], [1], [0, 0, 1, 1], [], []>} : vector<31x64xf32>, vector<64x64xf32>, vector<31x64xf32> -> vector<31x64xf32>
    %10 = arith.addf %6, %9 : vector<31x64xf32>
    %c0_5 = arith.constant 0 : index
    %c0_6 = arith.constant 0 : index
    %11 = vector.load %arg3[%c0_5, %c0_6] : memref<1x64xf32, #tpu.memory_space<vmem>>, vector<1x64xf32>
    %12 = vector.broadcast %11 : vector<1x64xf32> to vector<31x64xf32>
    %13 = arith.addf %10, %12 : vector<31x64xf32>
    %cst_7 = arith.constant 0.000000e+00 : f32
    %14 = vector.broadcast %cst_7 : f32 to vector<31x64xf32>
    %15 = arith.cmpf oge, %13, %14 : vector<31x64xf32>
    %cst_8 = arith.constant 1.000000e-01 : f32
    %16 = vector.broadcast %cst_8 : f32 to vector<31x64xf32>
    %17 = arith.mulf %16, %13 : vector<31x64xf32>
    %18 = arith.select %15, %13, %17 : vector<31x64xi1>, vector<31x64xf32>
    %19 = vector.extract_strided_slice %18 {offsets = [0, 0], sizes = [4, 64], strides = [1, 1]} : vector<31x64xf32> to vector<4x64xf32>
    %c0_9 = arith.constant 0 : index
    %c0_10 = arith.constant 0 : index
    %c0_11 = arith.constant 0 : index
    %20 = vector.load %arg4[%c0_9, %c0_10, %c0_11] : memref<4x4x64xf32, #tpu.memory_space<vmem>>, vector<1x4x64xf32>
    %21 = vector.shape_cast %20 : vector<1x4x64xf32> to vector<4x64xf32>
    %22 = vector.shape_cast %19 : vector<4x64xf32> to vector<1x4x64xf32>
    tpu.vector_store %arg4[%c0_9, %c0_10, %c0_11], %22 {strides = array<i32>} : memref<4x4x64xf32, #tpu.memory_space<vmem>>, vector<1x4x64xf32>,
    %23 = vector.extract_strided_slice %18 {offsets = [8, 0], sizes = [4, 64], strides = [1, 1]} : vector<31x64xf32> to vector<4x64xf32>
    %c1 = arith.constant 1 : index
    %c0_12 = arith.constant 0 : index
    %c0_13 = arith.constant 0 : index
    %24 = vector.load %arg4[%c1, %c0_12, %c0_13] : memref<4x4x64xf32, #tpu.memory_space<vmem>>, vector<1x4x64xf32>
    %25 = vector.shape_cast %24 : vector<1x4x64xf32> to vector<4x64xf32>
    %26 = vector.shape_cast %23 : vector<4x64xf32> to vector<1x4x64xf32>
    tpu.vector_store %arg4[%c1, %c0_12, %c0_13], %26 {strides = array<i32>} : memref<4x4x64xf32, #tpu.memory_space<vmem>>, vector<1x4x64xf32>,
    %27 = vector.extract_strided_slice %18 {offsets = [16, 0], sizes = [4, 64], strides = [1, 1]} : vector<31x64xf32> to vector<4x64xf32>
    %c2 = arith.constant 2 : index
    %c0_14 = arith.constant 0 : index
    %c0_15 = arith.constant 0 : index
    %28 = vector.load %arg4[%c2, %c0_14, %c0_15] : memref<4x4x64xf32, #tpu.memory_space<vmem>>, vector<1x4x64xf32>
    %29 = vector.shape_cast %28 : vector<1x4x64xf32> to vector<4x64xf32>
    %30 = vector.shape_cast %27 : vector<4x64xf32> to vector<1x4x64xf32>
    tpu.vector_store %arg4[%c2, %c0_14, %c0_15], %30 {strides = array<i32>} : memref<4x4x64xf32, #tpu.memory_space<vmem>>, vector<1x4x64xf32>,
    %31 = vector.extract_strided_slice %18 {offsets = [24, 0], sizes = [4, 64], strides = [1, 1]} : vector<31x64xf32> to vector<4x64xf32>
    %c3 = arith.constant 3 : index
    %c0_16 = arith.constant 0 : index
    %c0_17 = arith.constant 0 : index
    %32 = vector.load %arg4[%c3, %c0_16, %c0_17] : memref<4x4x64xf32, #tpu.memory_space<vmem>>, vector<1x4x64xf32>
    %33 = vector.shape_cast %32 : vector<1x4x64xf32> to vector<4x64xf32>
    %34 = vector.shape_cast %31 : vector<4x64xf32> to vector<1x4x64xf32>
    tpu.vector_store %arg4[%c3, %c0_16, %c0_17], %34 {strides = array<i32>} : memref<4x4x64xf32, #tpu.memory_space<vmem>>, vector<1x4x64xf32>,
    return
  }
  func.func @transform_0(%arg0: i32) -> (i32, i32) {
    %c0_i32 = arith.constant 0 : i32
    %c0_i32_0 = arith.constant 0 : i32
    return %arg0, %c0_i32 : i32, i32
  }
  func.func @transform_1(%arg0: i32) -> (i32, i32) {
    %c0_i32 = arith.constant 0 : i32
    %c0_i32_0 = arith.constant 0 : i32
    %c0_i32_1 = arith.constant 0 : i32
    return %c0_i32, %c0_i32_0 : i32, i32
  }
  func.func @transform_2(%arg0: i32) -> (i32, i32) {
    %c0_i32 = arith.constant 0 : i32
    %c0_i32_0 = arith.constant 0 : i32
    %c0_i32_1 = arith.constant 0 : i32
    return %c0_i32, %c0_i32_0 : i32, i32
  }
  func.func @transform_3(%arg0: i32) -> (i32, i32, i32) {
    %c0_i32 = arith.constant 0 : i32
    %c0_i32_0 = arith.constant 0 : i32
    %c0_i32_1 = arith.constant 0 : i32
    return %arg0, %c0_i32, %c0_i32_0 : i32, i32, i32
  }
}

module attributes {stable_mosaic.version = 11 : i64} {
  func.func @_conv_kx1_kernel(%arg0: i32, %arg1: memref<32x192xf32, #tpu.memory_space<vmem>>, %arg2: memref<320x64xf32, #tpu.memory_space<vmem>>, %arg3: memref<1x64xf32, #tpu.memory_space<vmem>>, %arg4: memref<4x1x64xf32, #tpu.memory_space<vmem>>) attributes {dimension_semantics = [#tpu.dimension_semantics<parallel>], iteration_bounds = array<i64: 2>, scalar_prefetch = 0 : i64, scratch_operands = 0 : i64, tpu.core_type = #tpu.core_type<tc>, window_params = [{transform_indices = @transform_0, window_bounds = array<i64: 32, 192>}, {pipeline_mode = #tpu.pipeline_mode<synchronous>, transform_indices = @transform_1, window_bounds = array<i64: 320, 64>}, {pipeline_mode = #tpu.pipeline_mode<synchronous>, transform_indices = @transform_2, window_bounds = array<i64: 1, 64>}, {transform_indices = @transform_3, window_bounds = array<i64: 4, 1, 64>}]} {
    %c0 = arith.constant 0 : index
    %c0_0 = arith.constant 0 : index
    %0 = vector.load %arg1[%c0, %c0_0] : memref<32x192xf32, #tpu.memory_space<vmem>>, vector<32x192xf32>
    %c0_1 = arith.constant 0 : index
    %c0_2 = arith.constant 0 : index
    %1 = vector.load %arg2[%c0_1, %c0_2] : memref<320x64xf32, #tpu.memory_space<vmem>>, vector<320x64xf32>
    %cst = arith.constant 0.000000e+00 : f32
    %2 = vector.broadcast %cst : f32 to vector<31x64xf32>
    %3 = vector.extract_strided_slice %0 {offsets = [0, 0], sizes = [31, 192], strides = [1, 1]} : vector<32x192xf32> to vector<31x192xf32>
    %4 = vector.extract_strided_slice %1 {offsets = [0, 0], sizes = [192, 64], strides = [1, 1]} : vector<320x64xf32> to vector<192x64xf32>
    %cst_3 = arith.constant dense<0.000000e+00> : vector<31x64xf32>
    %5 = tpu.matmul %3, %4, %cst_3 {dimension_numbers = #tpu.dot_dimension_numbers<[1], [0], [0], [1], [0, 0, 1, 1], [], []>} : vector<31x192xf32>, vector<192x64xf32>, vector<31x64xf32> -> vector<31x64xf32>
    %6 = arith.addf %2, %5 : vector<31x64xf32>
    %7 = vector.extract_strided_slice %0 {offsets = [1, 0], sizes = [31, 128], strides = [1, 1]} : vector<32x192xf32> to vector<31x128xf32>
    %8 = vector.extract_strided_slice %1 {offsets = [192, 0], sizes = [128, 64], strides = [1, 1]} : vector<320x64xf32> to vector<128x64xf32>
    %cst_4 = arith.constant dense<0.000000e+00> : vector<31x64xf32>
    %9 = tpu.matmul %7, %8, %cst_4 {dimension_numbers = #tpu.dot_dimension_numbers<[1], [0], [0], [1], [0, 0, 1, 1], [], []>} : vector<31x128xf32>, vector<128x64xf32>, vector<31x64xf32> -> vector<31x64xf32>
    %10 = arith.addf %6, %9 : vector<31x64xf32>
    %c0_5 = arith.constant 0 : index
    %c0_6 = arith.constant 0 : index
    %11 = vector.load %arg3[%c0_5, %c0_6] : memref<1x64xf32, #tpu.memory_space<vmem>>, vector<1x64xf32>
    %12 = vector.broadcast %11 : vector<1x64xf32> to vector<31x64xf32>
    %13 = arith.addf %10, %12 : vector<31x64xf32>
    %cst_7 = arith.constant 0.000000e+00 : f32
    %14 = vector.broadcast %cst_7 : f32 to vector<31x64xf32>
    %15 = arith.cmpf oge, %13, %14 : vector<31x64xf32>
    %cst_8 = arith.constant 1.000000e-01 : f32
    %16 = vector.broadcast %cst_8 : f32 to vector<31x64xf32>
    %17 = arith.mulf %16, %13 : vector<31x64xf32>
    %18 = arith.select %15, %13, %17 : vector<31x64xi1>, vector<31x64xf32>
    %19 = vector.extract_strided_slice %18 {offsets = [0, 0], sizes = [1, 64], strides = [1, 1]} : vector<31x64xf32> to vector<1x64xf32>
    %c0_9 = arith.constant 0 : index
    %c0_10 = arith.constant 0 : index
    %c0_11 = arith.constant 0 : index
    %20 = vector.load %arg4[%c0_9, %c0_10, %c0_11] : memref<4x1x64xf32, #tpu.memory_space<vmem>>, vector<1x1x64xf32>
    %21 = vector.shape_cast %20 : vector<1x1x64xf32> to vector<1x64xf32>
    %22 = vector.shape_cast %19 : vector<1x64xf32> to vector<1x1x64xf32>
    tpu.vector_store %arg4[%c0_9, %c0_10, %c0_11], %22 {strides = array<i32>} : memref<4x1x64xf32, #tpu.memory_space<vmem>>, vector<1x1x64xf32>,
    %23 = vector.extract_strided_slice %18 {offsets = [8, 0], sizes = [1, 64], strides = [1, 1]} : vector<31x64xf32> to vector<1x64xf32>
    %c1 = arith.constant 1 : index
    %c0_12 = arith.constant 0 : index
    %c0_13 = arith.constant 0 : index
    %24 = vector.load %arg4[%c1, %c0_12, %c0_13] : memref<4x1x64xf32, #tpu.memory_space<vmem>>, vector<1x1x64xf32>
    %25 = vector.shape_cast %24 : vector<1x1x64xf32> to vector<1x64xf32>
    %26 = vector.shape_cast %23 : vector<1x64xf32> to vector<1x1x64xf32>
    tpu.vector_store %arg4[%c1, %c0_12, %c0_13], %26 {strides = array<i32>} : memref<4x1x64xf32, #tpu.memory_space<vmem>>, vector<1x1x64xf32>,
    %27 = vector.extract_strided_slice %18 {offsets = [16, 0], sizes = [1, 64], strides = [1, 1]} : vector<31x64xf32> to vector<1x64xf32>
    %c2 = arith.constant 2 : index
    %c0_14 = arith.constant 0 : index
    %c0_15 = arith.constant 0 : index
    %28 = vector.load %arg4[%c2, %c0_14, %c0_15] : memref<4x1x64xf32, #tpu.memory_space<vmem>>, vector<1x1x64xf32>
    %29 = vector.shape_cast %28 : vector<1x1x64xf32> to vector<1x64xf32>
    %30 = vector.shape_cast %27 : vector<1x64xf32> to vector<1x1x64xf32>
    tpu.vector_store %arg4[%c2, %c0_14, %c0_15], %30 {strides = array<i32>} : memref<4x1x64xf32, #tpu.memory_space<vmem>>, vector<1x1x64xf32>,
    %31 = vector.extract_strided_slice %18 {offsets = [24, 0], sizes = [1, 64], strides = [1, 1]} : vector<31x64xf32> to vector<1x64xf32>
    %c3 = arith.constant 3 : index
    %c0_16 = arith.constant 0 : index
    %c0_17 = arith.constant 0 : index
    %32 = vector.load %arg4[%c3, %c0_16, %c0_17] : memref<4x1x64xf32, #tpu.memory_space<vmem>>, vector<1x1x64xf32>
    %33 = vector.shape_cast %32 : vector<1x1x64xf32> to vector<1x64xf32>
    %34 = vector.shape_cast %31 : vector<1x64xf32> to vector<1x1x64xf32>
    tpu.vector_store %arg4[%c3, %c0_16, %c0_17], %34 {strides = array<i32>} : memref<4x1x64xf32, #tpu.memory_space<vmem>>, vector<1x1x64xf32>,
    return
  }
  func.func @transform_0(%arg0: i32) -> (i32, i32) {
    %c0_i32 = arith.constant 0 : i32
    %c0_i32_0 = arith.constant 0 : i32
    return %arg0, %c0_i32 : i32, i32
  }
  func.func @transform_1(%arg0: i32) -> (i32, i32) {
    %c0_i32 = arith.constant 0 : i32
    %c0_i32_0 = arith.constant 0 : i32
    %c0_i32_1 = arith.constant 0 : i32
    return %c0_i32, %c0_i32_0 : i32, i32
  }
  func.func @transform_2(%arg0: i32) -> (i32, i32) {
    %c0_i32 = arith.constant 0 : i32
    %c0_i32_0 = arith.constant 0 : i32
    %c0_i32_1 = arith.constant 0 : i32
    return %c0_i32, %c0_i32_0 : i32, i32
  }
  func.func @transform_3(%arg0: i32) -> (i32, i32, i32) {
    %c0_i32 = arith.constant 0 : i32
    %c0_i32_0 = arith.constant 0 : i32
    %c0_i32_1 = arith.constant 0 : i32
    return %arg0, %c0_i32, %c0_i32_0 : i32, i32, i32
  }
}

module attributes {stable_mosaic.version = 11 : i64} {
  func.func @_conv_kx1_kernel(%arg0: i32, %arg1: memref<32x192xf32, #tpu.memory_space<vmem>>, %arg2: memref<320x64xf32, #tpu.memory_space<vmem>>, %arg3: memref<1x64xf32, #tpu.memory_space<vmem>>, %arg4: memref<4x2x64xf32, #tpu.memory_space<vmem>>) attributes {dimension_semantics = [#tpu.dimension_semantics<parallel>], iteration_bounds = array<i64: 2>, scalar_prefetch = 0 : i64, scratch_operands = 0 : i64, tpu.core_type = #tpu.core_type<tc>, window_params = [{transform_indices = @transform_0, window_bounds = array<i64: 32, 192>}, {pipeline_mode = #tpu.pipeline_mode<synchronous>, transform_indices = @transform_1, window_bounds = array<i64: 320, 64>}, {pipeline_mode = #tpu.pipeline_mode<synchronous>, transform_indices = @transform_2, window_bounds = array<i64: 1, 64>}, {transform_indices = @transform_3, window_bounds = array<i64: 4, 2, 64>}]} {
    %c0 = arith.constant 0 : index
    %c0_0 = arith.constant 0 : index
    %0 = vector.load %arg1[%c0, %c0_0] : memref<32x192xf32, #tpu.memory_space<vmem>>, vector<32x192xf32>
    %c0_1 = arith.constant 0 : index
    %c0_2 = arith.constant 0 : index
    %1 = vector.load %arg2[%c0_1, %c0_2] : memref<320x64xf32, #tpu.memory_space<vmem>>, vector<320x64xf32>
    %cst = arith.constant 0.000000e+00 : f32
    %2 = vector.broadcast %cst : f32 to vector<31x64xf32>
    %3 = vector.extract_strided_slice %0 {offsets = [0, 0], sizes = [31, 192], strides = [1, 1]} : vector<32x192xf32> to vector<31x192xf32>
    %4 = vector.extract_strided_slice %1 {offsets = [0, 0], sizes = [192, 64], strides = [1, 1]} : vector<320x64xf32> to vector<192x64xf32>
    %cst_3 = arith.constant dense<0.000000e+00> : vector<31x64xf32>
    %5 = tpu.matmul %3, %4, %cst_3 {dimension_numbers = #tpu.dot_dimension_numbers<[1], [0], [0], [1], [0, 0, 1, 1], [], []>} : vector<31x192xf32>, vector<192x64xf32>, vector<31x64xf32> -> vector<31x64xf32>
    %6 = arith.addf %2, %5 : vector<31x64xf32>
    %7 = vector.extract_strided_slice %0 {offsets = [1, 0], sizes = [31, 128], strides = [1, 1]} : vector<32x192xf32> to vector<31x128xf32>
    %8 = vector.extract_strided_slice %1 {offsets = [192, 0], sizes = [128, 64], strides = [1, 1]} : vector<320x64xf32> to vector<128x64xf32>
    %cst_4 = arith.constant dense<0.000000e+00> : vector<31x64xf32>
    %9 = tpu.matmul %7, %8, %cst_4 {dimension_numbers = #tpu.dot_dimension_numbers<[1], [0], [0], [1], [0, 0, 1, 1], [], []>} : vector<31x128xf32>, vector<128x64xf32>, vector<31x64xf32> -> vector<31x64xf32>
    %10 = arith.addf %6, %9 : vector<31x64xf32>
    %c0_5 = arith.constant 0 : index
    %c0_6 = arith.constant 0 : index
    %11 = vector.load %arg3[%c0_5, %c0_6] : memref<1x64xf32, #tpu.memory_space<vmem>>, vector<1x64xf32>
    %12 = vector.broadcast %11 : vector<1x64xf32> to vector<31x64xf32>
    %13 = arith.addf %10, %12 : vector<31x64xf32>
    %cst_7 = arith.constant 0.000000e+00 : f32
    %14 = vector.broadcast %cst_7 : f32 to vector<31x64xf32>
    %15 = arith.cmpf oge, %13, %14 : vector<31x64xf32>
    %cst_8 = arith.constant 1.000000e-01 : f32
    %16 = vector.broadcast %cst_8 : f32 to vector<31x64xf32>
    %17 = arith.mulf %16, %13 : vector<31x64xf32>
    %18 = arith.select %15, %13, %17 : vector<31x64xi1>, vector<31x64xf32>
    %19 = vector.extract_strided_slice %18 {offsets = [0, 0], sizes = [2, 64], strides = [1, 1]} : vector<31x64xf32> to vector<2x64xf32>
    %c0_9 = arith.constant 0 : index
    %c0_10 = arith.constant 0 : index
    %c0_11 = arith.constant 0 : index
    %20 = vector.load %arg4[%c0_9, %c0_10, %c0_11] : memref<4x2x64xf32, #tpu.memory_space<vmem>>, vector<1x2x64xf32>
    %21 = vector.shape_cast %20 : vector<1x2x64xf32> to vector<2x64xf32>
    %22 = vector.shape_cast %19 : vector<2x64xf32> to vector<1x2x64xf32>
    tpu.vector_store %arg4[%c0_9, %c0_10, %c0_11], %22 {strides = array<i32>} : memref<4x2x64xf32, #tpu.memory_space<vmem>>, vector<1x2x64xf32>,
    %23 = vector.extract_strided_slice %18 {offsets = [8, 0], sizes = [2, 64], strides = [1, 1]} : vector<31x64xf32> to vector<2x64xf32>
    %c1 = arith.constant 1 : index
    %c0_12 = arith.constant 0 : index
    %c0_13 = arith.constant 0 : index
    %24 = vector.load %arg4[%c1, %c0_12, %c0_13] : memref<4x2x64xf32, #tpu.memory_space<vmem>>, vector<1x2x64xf32>
    %25 = vector.shape_cast %24 : vector<1x2x64xf32> to vector<2x64xf32>
    %26 = vector.shape_cast %23 : vector<2x64xf32> to vector<1x2x64xf32>
    tpu.vector_store %arg4[%c1, %c0_12, %c0_13], %26 {strides = array<i32>} : memref<4x2x64xf32, #tpu.memory_space<vmem>>, vector<1x2x64xf32>,
    %27 = vector.extract_strided_slice %18 {offsets = [16, 0], sizes = [2, 64], strides = [1, 1]} : vector<31x64xf32> to vector<2x64xf32>
    %c2 = arith.constant 2 : index
    %c0_14 = arith.constant 0 : index
    %c0_15 = arith.constant 0 : index
    %28 = vector.load %arg4[%c2, %c0_14, %c0_15] : memref<4x2x64xf32, #tpu.memory_space<vmem>>, vector<1x2x64xf32>
    %29 = vector.shape_cast %28 : vector<1x2x64xf32> to vector<2x64xf32>
    %30 = vector.shape_cast %27 : vector<2x64xf32> to vector<1x2x64xf32>
    tpu.vector_store %arg4[%c2, %c0_14, %c0_15], %30 {strides = array<i32>} : memref<4x2x64xf32, #tpu.memory_space<vmem>>, vector<1x2x64xf32>,
    %31 = vector.extract_strided_slice %18 {offsets = [24, 0], sizes = [2, 64], strides = [1, 1]} : vector<31x64xf32> to vector<2x64xf32>
    %c3 = arith.constant 3 : index
    %c0_16 = arith.constant 0 : index
    %c0_17 = arith.constant 0 : index
    %32 = vector.load %arg4[%c3, %c0_16, %c0_17] : memref<4x2x64xf32, #tpu.memory_space<vmem>>, vector<1x2x64xf32>
    %33 = vector.shape_cast %32 : vector<1x2x64xf32> to vector<2x64xf32>
    %34 = vector.shape_cast %31 : vector<2x64xf32> to vector<1x2x64xf32>
    tpu.vector_store %arg4[%c3, %c0_16, %c0_17], %34 {strides = array<i32>} : memref<4x2x64xf32, #tpu.memory_space<vmem>>, vector<1x2x64xf32>,
    return
  }
  func.func @transform_0(%arg0: i32) -> (i32, i32) {
    %c0_i32 = arith.constant 0 : i32
    %c0_i32_0 = arith.constant 0 : i32
    return %arg0, %c0_i32 : i32, i32
  }
  func.func @transform_1(%arg0: i32) -> (i32, i32) {
    %c0_i32 = arith.constant 0 : i32
    %c0_i32_0 = arith.constant 0 : i32
    %c0_i32_1 = arith.constant 0 : i32
    return %c0_i32, %c0_i32_0 : i32, i32
  }
  func.func @transform_2(%arg0: i32) -> (i32, i32) {
    %c0_i32 = arith.constant 0 : i32
    %c0_i32_0 = arith.constant 0 : i32
    %c0_i32_1 = arith.constant 0 : i32
    return %c0_i32, %c0_i32_0 : i32, i32
  }
  func.func @transform_3(%arg0: i32) -> (i32, i32, i32) {
    %c0_i32 = arith.constant 0 : i32
    %c0_i32_0 = arith.constant 0 : i32
    %c0_i32_1 = arith.constant 0 : i32
    return %arg0, %c0_i32, %c0_i32_0 : i32, i32, i32
  }
}

module attributes {stable_mosaic.version = 11 : i64} {
  func.func @_conv_kx1_kernel(%arg0: i32, %arg1: memref<32x64xf32, #tpu.memory_space<vmem>>, %arg2: memref<192x1xf32, #tpu.memory_space<vmem>>, %arg3: memref<1x1xf32, #tpu.memory_space<vmem>>, %arg4: memref<4x1x1xf32, #tpu.memory_space<vmem>>) attributes {dimension_semantics = [#tpu.dimension_semantics<parallel>], iteration_bounds = array<i64: 2>, scalar_prefetch = 0 : i64, scratch_operands = 0 : i64, tpu.core_type = #tpu.core_type<tc>, window_params = [{transform_indices = @transform_0, window_bounds = array<i64: 32, 64>}, {pipeline_mode = #tpu.pipeline_mode<synchronous>, transform_indices = @transform_1, window_bounds = array<i64: 192, 1>}, {pipeline_mode = #tpu.pipeline_mode<synchronous>, transform_indices = @transform_2, window_bounds = array<i64: 1, 1>}, {transform_indices = @transform_3, window_bounds = array<i64: 4, 1, 1>}]} {
    %c0 = arith.constant 0 : index
    %c0_0 = arith.constant 0 : index
    %0 = vector.load %arg1[%c0, %c0_0] : memref<32x64xf32, #tpu.memory_space<vmem>>, vector<32x64xf32>
    %c0_1 = arith.constant 0 : index
    %c0_2 = arith.constant 0 : index
    %1 = vector.load %arg2[%c0_1, %c0_2] : memref<192x1xf32, #tpu.memory_space<vmem>>, vector<192x1xf32>
    %cst = arith.constant 0.000000e+00 : f32
    %2 = vector.broadcast %cst : f32 to vector<30x1xf32>
    %3 = vector.extract_strided_slice %0 {offsets = [0, 0], sizes = [30, 64], strides = [1, 1]} : vector<32x64xf32> to vector<30x64xf32>
    %4 = vector.extract_strided_slice %1 {offsets = [0, 0], sizes = [64, 1], strides = [1, 1]} : vector<192x1xf32> to vector<64x1xf32>
    %cst_3 = arith.constant dense<0.000000e+00> : vector<30x1xf32>
    %5 = tpu.matmul %3, %4, %cst_3 {dimension_numbers = #tpu.dot_dimension_numbers<[1], [0], [0], [1], [0, 0, 1, 1], [], []>} : vector<30x64xf32>, vector<64x1xf32>, vector<30x1xf32> -> vector<30x1xf32>
    %6 = arith.addf %2, %5 : vector<30x1xf32>
    %7 = vector.extract_strided_slice %0 {offsets = [1, 0], sizes = [30, 64], strides = [1, 1]} : vector<32x64xf32> to vector<30x64xf32>
    %8 = vector.extract_strided_slice %1 {offsets = [64, 0], sizes = [64, 1], strides = [1, 1]} : vector<192x1xf32> to vector<64x1xf32>
    %cst_4 = arith.constant dense<0.000000e+00> : vector<30x1xf32>
    %9 = tpu.matmul %7, %8, %cst_4 {dimension_numbers = #tpu.dot_dimension_numbers<[1], [0], [0], [1], [0, 0, 1, 1], [], []>} : vector<30x64xf32>, vector<64x1xf32>, vector<30x1xf32> -> vector<30x1xf32>
    %10 = arith.addf %6, %9 : vector<30x1xf32>
    %11 = vector.extract_strided_slice %0 {offsets = [2, 0], sizes = [30, 64], strides = [1, 1]} : vector<32x64xf32> to vector<30x64xf32>
    %12 = vector.extract_strided_slice %1 {offsets = [128, 0], sizes = [64, 1], strides = [1, 1]} : vector<192x1xf32> to vector<64x1xf32>
    %cst_5 = arith.constant dense<0.000000e+00> : vector<30x1xf32>
    %13 = tpu.matmul %11, %12, %cst_5 {dimension_numbers = #tpu.dot_dimension_numbers<[1], [0], [0], [1], [0, 0, 1, 1], [], []>} : vector<30x64xf32>, vector<64x1xf32>, vector<30x1xf32> -> vector<30x1xf32>
    %14 = arith.addf %10, %13 : vector<30x1xf32>
    %c0_6 = arith.constant 0 : index
    %c0_7 = arith.constant 0 : index
    %15 = vector.load %arg3[%c0_6, %c0_7] : memref<1x1xf32, #tpu.memory_space<vmem>>, vector<1x1xf32>
    %16 = vector.broadcast %15 : vector<1x1xf32> to vector<30x1xf32>
    %17 = arith.addf %14, %16 : vector<30x1xf32>
    %18 = vector.extract_strided_slice %17 {offsets = [0, 0], sizes = [1, 1], strides = [1, 1]} : vector<30x1xf32> to vector<1x1xf32>
    %c0_8 = arith.constant 0 : index
    %c0_9 = arith.constant 0 : index
    %c0_10 = arith.constant 0 : index
    %19 = vector.load %arg4[%c0_8, %c0_9, %c0_10] : memref<4x1x1xf32, #tpu.memory_space<vmem>>, vector<1x1x1xf32>
    %20 = vector.shape_cast %19 : vector<1x1x1xf32> to vector<1x1xf32>
    %21 = vector.shape_cast %18 : vector<1x1xf32> to vector<1x1x1xf32>
    tpu.vector_store %arg4[%c0_8, %c0_9, %c0_10], %21 {strides = array<i32>} : memref<4x1x1xf32, #tpu.memory_space<vmem>>, vector<1x1x1xf32>,
    %22 = vector.extract_strided_slice %17 {offsets = [8, 0], sizes = [1, 1], strides = [1, 1]} : vector<30x1xf32> to vector<1x1xf32>
    %c1 = arith.constant 1 : index
    %c0_11 = arith.constant 0 : index
    %c0_12 = arith.constant 0 : index
    %23 = vector.load %arg4[%c1, %c0_11, %c0_12] : memref<4x1x1xf32, #tpu.memory_space<vmem>>, vector<1x1x1xf32>
    %24 = vector.shape_cast %23 : vector<1x1x1xf32> to vector<1x1xf32>
    %25 = vector.shape_cast %22 : vector<1x1xf32> to vector<1x1x1xf32>
    tpu.vector_store %arg4[%c1, %c0_11, %c0_12], %25 {strides = array<i32>} : memref<4x1x1xf32, #tpu.memory_space<vmem>>, vector<1x1x1xf32>,
    %26 = vector.extract_strided_slice %17 {offsets = [16, 0], sizes = [1, 1], strides = [1, 1]} : vector<30x1xf32> to vector<1x1xf32>
    %c2 = arith.constant 2 : index
    %c0_13 = arith.constant 0 : index
    %c0_14 = arith.constant 0 : index
    %27 = vector.load %arg4[%c2, %c0_13, %c0_14] : memref<4x1x1xf32, #tpu.memory_space<vmem>>, vector<1x1x1xf32>
    %28 = vector.shape_cast %27 : vector<1x1x1xf32> to vector<1x1xf32>
    %29 = vector.shape_cast %26 : vector<1x1xf32> to vector<1x1x1xf32>
    tpu.vector_store %arg4[%c2, %c0_13, %c0_14], %29 {strides = array<i32>} : memref<4x1x1xf32, #tpu.memory_space<vmem>>, vector<1x1x1xf32>,
    %30 = vector.extract_strided_slice %17 {offsets = [24, 0], sizes = [1, 1], strides = [1, 1]} : vector<30x1xf32> to vector<1x1xf32>
    %c3 = arith.constant 3 : index
    %c0_15 = arith.constant 0 : index
    %c0_16 = arith.constant 0 : index
    %31 = vector.load %arg4[%c3, %c0_15, %c0_16] : memref<4x1x1xf32, #tpu.memory_space<vmem>>, vector<1x1x1xf32>
    %32 = vector.shape_cast %31 : vector<1x1x1xf32> to vector<1x1xf32>
    %33 = vector.shape_cast %30 : vector<1x1xf32> to vector<1x1x1xf32>
    tpu.vector_store %arg4[%c3, %c0_15, %c0_16], %33 {strides = array<i32>} : memref<4x1x1xf32, #tpu.memory_space<vmem>>, vector<1x1x1xf32>,
    return
  }
  func.func @transform_0(%arg0: i32) -> (i32, i32) {
    %c0_i32 = arith.constant 0 : i32
    %c0_i32_0 = arith.constant 0 : i32
    return %arg0, %c0_i32 : i32, i32
  }
  func.func @transform_1(%arg0: i32) -> (i32, i32) {
    %c0_i32 = arith.constant 0 : i32
    %c0_i32_0 = arith.constant 0 : i32
    %c0_i32_1 = arith.constant 0 : i32
    return %c0_i32, %c0_i32_0 : i32, i32
  }
  func.func @transform_2(%arg0: i32) -> (i32, i32) {
    %c0_i32 = arith.constant 0 : i32
    %c0_i32_0 = arith.constant 0 : i32
    %c0_i32_1 = arith.constant 0 : i32
    return %c0_i32, %c0_i32_0 : i32, i32
  }
  func.func @transform_3(%arg0: i32) -> (i32, i32, i32) {
    %c0_i32 = arith.constant 0 : i32
    %c0_i32_0 = arith.constant 0 : i32
    %c0_i32_1 = arith.constant 0 : i32
    return %arg0, %c0_i32, %c0_i32_0 : i32, i32, i32
  }
}

module attributes {stable_mosaic.version = 11 : i64} {
  func.func @_conv_kx1_kernel(%arg0: i32, %arg1: memref<32x64xf32, #tpu.memory_space<vmem>>, %arg2: memref<320x64xf32, #tpu.memory_space<vmem>>, %arg3: memref<1x64xf32, #tpu.memory_space<vmem>>, %arg4: memref<4x1x64xf32, #tpu.memory_space<vmem>>) attributes {dimension_semantics = [#tpu.dimension_semantics<parallel>], iteration_bounds = array<i64: 2>, scalar_prefetch = 0 : i64, scratch_operands = 0 : i64, tpu.core_type = #tpu.core_type<tc>, window_params = [{transform_indices = @transform_0, window_bounds = array<i64: 32, 64>}, {pipeline_mode = #tpu.pipeline_mode<synchronous>, transform_indices = @transform_1, window_bounds = array<i64: 320, 64>}, {pipeline_mode = #tpu.pipeline_mode<synchronous>, transform_indices = @transform_2, window_bounds = array<i64: 1, 64>}, {transform_indices = @transform_3, window_bounds = array<i64: 4, 1, 64>}]} {
    %c0 = arith.constant 0 : index
    %c0_0 = arith.constant 0 : index
    %0 = vector.load %arg1[%c0, %c0_0] : memref<32x64xf32, #tpu.memory_space<vmem>>, vector<32x64xf32>
    %c0_1 = arith.constant 0 : index
    %c0_2 = arith.constant 0 : index
    %1 = vector.load %arg2[%c0_1, %c0_2] : memref<320x64xf32, #tpu.memory_space<vmem>>, vector<320x64xf32>
    %cst = arith.constant 0.000000e+00 : f32
    %2 = vector.broadcast %cst : f32 to vector<28x64xf32>
    %3 = vector.extract_strided_slice %0 {offsets = [0, 0], sizes = [28, 64], strides = [1, 1]} : vector<32x64xf32> to vector<28x64xf32>
    %4 = vector.extract_strided_slice %1 {offsets = [0, 0], sizes = [64, 64], strides = [1, 1]} : vector<320x64xf32> to vector<64x64xf32>
    %cst_3 = arith.constant dense<0.000000e+00> : vector<28x64xf32>
    %5 = tpu.matmul %3, %4, %cst_3 {dimension_numbers = #tpu.dot_dimension_numbers<[1], [0], [0], [1], [0, 0, 1, 1], [], []>} : vector<28x64xf32>, vector<64x64xf32>, vector<28x64xf32> -> vector<28x64xf32>
    %6 = arith.addf %2, %5 : vector<28x64xf32>
    %7 = vector.extract_strided_slice %0 {offsets = [1, 0], sizes = [28, 64], strides = [1, 1]} : vector<32x64xf32> to vector<28x64xf32>
    %8 = vector.extract_strided_slice %1 {offsets = [64, 0], sizes = [64, 64], strides = [1, 1]} : vector<320x64xf32> to vector<64x64xf32>
    %cst_4 = arith.constant dense<0.000000e+00> : vector<28x64xf32>
    %9 = tpu.matmul %7, %8, %cst_4 {dimension_numbers = #tpu.dot_dimension_numbers<[1], [0], [0], [1], [0, 0, 1, 1], [], []>} : vector<28x64xf32>, vector<64x64xf32>, vector<28x64xf32> -> vector<28x64xf32>
    %10 = arith.addf %6, %9 : vector<28x64xf32>
    %11 = vector.extract_strided_slice %0 {offsets = [2, 0], sizes = [28, 64], strides = [1, 1]} : vector<32x64xf32> to vector<28x64xf32>
    %12 = vector.extract_strided_slice %1 {offsets = [128, 0], sizes = [64, 64], strides = [1, 1]} : vector<320x64xf32> to vector<64x64xf32>
    %cst_5 = arith.constant dense<0.000000e+00> : vector<28x64xf32>
    %13 = tpu.matmul %11, %12, %cst_5 {dimension_numbers = #tpu.dot_dimension_numbers<[1], [0], [0], [1], [0, 0, 1, 1], [], []>} : vector<28x64xf32>, vector<64x64xf32>, vector<28x64xf32> -> vector<28x64xf32>
    %14 = arith.addf %10, %13 : vector<28x64xf32>
    %15 = vector.extract_strided_slice %0 {offsets = [3, 0], sizes = [28, 64], strides = [1, 1]} : vector<32x64xf32> to vector<28x64xf32>
    %16 = vector.extract_strided_slice %1 {offsets = [192, 0], sizes = [64, 64], strides = [1, 1]} : vector<320x64xf32> to vector<64x64xf32>
    %cst_6 = arith.constant dense<0.000000e+00> : vector<28x64xf32>
    %17 = tpu.matmul %15, %16, %cst_6 {dimension_numbers = #tpu.dot_dimension_numbers<[1], [0], [0], [1], [0, 0, 1, 1], [], []>} : vector<28x64xf32>, vector<64x64xf32>, vector<28x64xf32> -> vector<28x64xf32>
    %18 = arith.addf %14, %17 : vector<28x64xf32>
    %19 = vector.extract_strided_slice %0 {offsets = [4, 0], sizes = [28, 64], strides = [1, 1]} : vector<32x64xf32> to vector<28x64xf32>
    %20 = vector.extract_strided_slice %1 {offsets = [256, 0], sizes = [64, 64], strides = [1, 1]} : vector<320x64xf32> to vector<64x64xf32>
    %cst_7 = arith.constant dense<0.000000e+00> : vector<28x64xf32>
    %21 = tpu.matmul %19, %20, %cst_7 {dimension_numbers = #tpu.dot_dimension_numbers<[1], [0], [0], [1], [0, 0, 1, 1], [], []>} : vector<28x64xf32>, vector<64x64xf32>, vector<28x64xf32> -> vector<28x64xf32>
    %22 = arith.addf %18, %21 : vector<28x64xf32>
    %c0_8 = arith.constant 0 : index
    %c0_9 = arith.constant 0 : index
    %23 = vector.load %arg3[%c0_8, %c0_9] : memref<1x64xf32, #tpu.memory_space<vmem>>, vector<1x64xf32>
    %24 = vector.broadcast %23 : vector<1x64xf32> to vector<28x64xf32>
    %25 = arith.addf %22, %24 : vector<28x64xf32>
    %cst_10 = arith.constant 0.000000e+00 : f32
    %26 = vector.broadcast %cst_10 : f32 to vector<28x64xf32>
    %27 = arith.cmpf oge, %25, %26 : vector<28x64xf32>
    %cst_11 = arith.constant 1.000000e-01 : f32
    %28 = vector.broadcast %cst_11 : f32 to vector<28x64xf32>
    %29 = arith.mulf %28, %25 : vector<28x64xf32>
    %30 = arith.select %27, %25, %29 : vector<28x64xi1>, vector<28x64xf32>
    %31 = vector.extract_strided_slice %30 {offsets = [0, 0], sizes = [1, 64], strides = [1, 1]} : vector<28x64xf32> to vector<1x64xf32>
    %c0_12 = arith.constant 0 : index
    %c0_13 = arith.constant 0 : index
    %c0_14 = arith.constant 0 : index
    %32 = vector.load %arg4[%c0_12, %c0_13, %c0_14] : memref<4x1x64xf32, #tpu.memory_space<vmem>>, vector<1x1x64xf32>
    %33 = vector.shape_cast %32 : vector<1x1x64xf32> to vector<1x64xf32>
    %34 = vector.shape_cast %31 : vector<1x64xf32> to vector<1x1x64xf32>
    tpu.vector_store %arg4[%c0_12, %c0_13, %c0_14], %34 {strides = array<i32>} : memref<4x1x64xf32, #tpu.memory_space<vmem>>, vector<1x1x64xf32>,
    %35 = vector.extract_strided_slice %30 {offsets = [8, 0], sizes = [1, 64], strides = [1, 1]} : vector<28x64xf32> to vector<1x64xf32>
    %c1 = arith.constant 1 : index
    %c0_15 = arith.constant 0 : index
    %c0_16 = arith.constant 0 : index
    %36 = vector.load %arg4[%c1, %c0_15, %c0_16] : memref<4x1x64xf32, #tpu.memory_space<vmem>>, vector<1x1x64xf32>
    %37 = vector.shape_cast %36 : vector<1x1x64xf32> to vector<1x64xf32>
    %38 = vector.shape_cast %35 : vector<1x64xf32> to vector<1x1x64xf32>
    tpu.vector_store %arg4[%c1, %c0_15, %c0_16], %38 {strides = array<i32>} : memref<4x1x64xf32, #tpu.memory_space<vmem>>, vector<1x1x64xf32>,
    %39 = vector.extract_strided_slice %30 {offsets = [16, 0], sizes = [1, 64], strides = [1, 1]} : vector<28x64xf32> to vector<1x64xf32>
    %c2 = arith.constant 2 : index
    %c0_17 = arith.constant 0 : index
    %c0_18 = arith.constant 0 : index
    %40 = vector.load %arg4[%c2, %c0_17, %c0_18] : memref<4x1x64xf32, #tpu.memory_space<vmem>>, vector<1x1x64xf32>
    %41 = vector.shape_cast %40 : vector<1x1x64xf32> to vector<1x64xf32>
    %42 = vector.shape_cast %39 : vector<1x64xf32> to vector<1x1x64xf32>
    tpu.vector_store %arg4[%c2, %c0_17, %c0_18], %42 {strides = array<i32>} : memref<4x1x64xf32, #tpu.memory_space<vmem>>, vector<1x1x64xf32>,
    %43 = vector.extract_strided_slice %30 {offsets = [24, 0], sizes = [1, 64], strides = [1, 1]} : vector<28x64xf32> to vector<1x64xf32>
    %c3 = arith.constant 3 : index
    %c0_19 = arith.constant 0 : index
    %c0_20 = arith.constant 0 : index
    %44 = vector.load %arg4[%c3, %c0_19, %c0_20] : memref<4x1x64xf32, #tpu.memory_space<vmem>>, vector<1x1x64xf32>
    %45 = vector.shape_cast %44 : vector<1x1x64xf32> to vector<1x64xf32>
    %46 = vector.shape_cast %43 : vector<1x64xf32> to vector<1x1x64xf32>
    tpu.vector_store %arg4[%c3, %c0_19, %c0_20], %46 {strides = array<i32>} : memref<4x1x64xf32, #tpu.memory_space<vmem>>, vector<1x1x64xf32>,
    return
  }
  func.func @transform_0(%arg0: i32) -> (i32, i32) {
    %c0_i32 = arith.constant 0 : i32
    %c0_i32_0 = arith.constant 0 : i32
    return %arg0, %c0_i32 : i32, i32
  }
  func.func @transform_1(%arg0: i32) -> (i32, i32) {
    %c0_i32 = arith.constant 0 : i32
    %c0_i32_0 = arith.constant 0 : i32
    %c0_i32_1 = arith.constant 0 : i32
    return %c0_i32, %c0_i32_0 : i32, i32
  }
  func.func @transform_2(%arg0: i32) -> (i32, i32) {
    %c0_i32 = arith.constant 0 : i32
    %c0_i32_0 = arith.constant 0 : i32
    %c0_i32_1 = arith.constant 0 : i32
    return %c0_i32, %c0_i32_0 : i32, i32
  }
  func.func @transform_3(%arg0: i32) -> (i32, i32, i32) {
    %c0_i32 = arith.constant 0 : i32
    %c0_i32_0 = arith.constant 0 : i32
    %c0_i32_1 = arith.constant 0 : i32
    return %arg0, %c0_i32, %c0_i32_0 : i32, i32, i32
  }
}

</mosaic_0001>

<llo_original>
// kernel: _lambda_.7
$region0: #{_lambda_.7}
  #allocation0 [shape = 'u32[]', space=smem, size = 0x4, offset = 0x4, fixed_abs, tag = 'smem constant byte address 0x4 - core index']
  #allocation1 [shape = 'u32[144,128]{1,0:T(1,128)}', space=vmem, size = 0x12000, scoped, tag = 'internal scratch']
  %s0 = inlined_call_operand.vmem [shape: f32[64,96], index: 0, kind: input, shape index: {}]
  %s1 = inlined_call_operand.vmem [shape: f32[160,64], index: 1, kind: input, shape index: {}]
  %s2 = inlined_call_operand.vmem [shape: f32[1,64], index: 2, kind: input, shape index: {}]
  %s3 = inlined_call_operand.vmem [shape: f32[8,4,64], index: 3, kind: output, shape index: {}]
  %s4 = sld [smem:[#allocation0]]
  $region45: #{_lambda_.7} parent=0
    _
  %s6 = ssub.s32 1, %s4
  %s7 = scalar_select 0, %s6, %s4
  loop: start=0, step=1, limit=4
  $region2: #{_lambda_.7} parent=0 // loop_pre_header
    _
  $region3: #{_lambda_.7} parent=0 // loop_header
    %s9 = sphi 0, %s13
    %p10 = scmp.ge.s32.totalorder %s9, 4
    %s19 = sphi 0, %s21
    %s22 = sphi 0, %s19
    %s23 = sphi 0, %s22
    %s39 = sphi 0, %s23
    %s43 = sphi 0, %s43
    %s45 = sphi 0, %s43
    %s46 = sphi 0, %s45
    %s60 = sphi 0, %s46
    %s64 = sphi 0, %s64
    %s66 = sphi 0, %s64
    %s67 = sphi 0, %s66
    %s81 = sphi 0, %s67
    %s87 = sphi 0, %s89
    %s90 = sphi 0, %s87
    %s91 = sphi 0, %s90
    %s107 = sphi 0, %s91
  $region4: #{_lambda_.7} parent=0 // loop_header_branch
    %12 = sbr.rel (%p10) target = $region8
  $region5: #{_lambda_.7} parent=0 // loop_body
    %s14 = ssub.s32 %s9, 1
    %s15 = ssub.s32 %s9, 2
    %s16 = sadd.s32 %s9, 1
    %s17 = ssub.s32 %s9, %s16
    %p18 = scmp.eq.s32.totalorder %s17, 0
    %s20 = sadd.s32 %s19, 1
    %s21 = scalar_select %p18, %s19, %s20
    %p24 = pneg %p18
    %p25 = scmp.eq.s32.totalorder %s9, 1
    %p26 = por %p24, %p25
    %p27 = scmp.ne.s32.totalorder %s19, %s22
    %p28 = scmp.eq.s32.totalorder %s9, 0
    %p29 = por %p27, %p28
    %p30 = scmp.ne.s32.totalorder %s19, %s22
    %p31 = scmp.eq.s32.totalorder %s14, 1
    %p32 = por %p30, %p31
    %p33 = scmp.ne.s32.totalorder %s22, %s23
    %p34 = scmp.eq.s32.totalorder %s14, 0
    %p35 = por %p33, %p34
    %p36 = scmp.ne.s32.totalorder %s22, %s23
    %p37 = scmp.eq.s32.totalorder %s15, 1
    %p38 = por %p36, %p37
    %p40 = scmp.ne.s32.totalorder %s23, %s39
    %p41 = scmp.eq.s32.totalorder %s15, 0
    %p42 = por %p40, %p41
    %s44 = sadd.s32 %s43, 1
    %p47 = scmp.eq.s32.totalorder %s9, 1
    %p48 = scmp.ne.s32.totalorder %s43, %s45
    %p49 = scmp.eq.s32.totalorder %s9, 0
    %p50 = por %p48, %p49
    %p51 = scmp.ne.s32.totalorder %s43, %s45
    %p52 = scmp.eq.s32.totalorder %s14, 1
    %p53 = por %p51, %p52
    %p54 = scmp.ne.s32.totalorder %s45, %s46
    %p55 = scmp.eq.s32.totalorder %s14, 0
    %p56 = por %p54, %p55
    %p57 = scmp.ne.s32.totalorder %s45, %s46
    %p58 = scmp.eq.s32.totalorder %s15, 1
    %p59 = por %p57, %p58
    %p61 = scmp.ne.s32.totalorder %s46, %s60
    %p62 = scmp.eq.s32.totalorder %s15, 0
    %p63 = por %p61, %p62
    %s65 = sadd.s32 %s64, 1
    %p68 = scmp.eq.s32.totalorder %s9, 1
    %p69 = scmp.ne.s32.totalorder %s64, %s66
    %p70 = scmp.eq.s32.totalorder %s9, 0
    %p71 = por %p69, %p70
    %p72 = scmp.ne.s32.totalorder %s64, %s66
    %p73 = scmp.eq.s32.totalorder %s14, 1
    %p74 = por %p72, %p73
    %p75 = scmp.ne.s32.totalorder %s66, %s67
    %p76 = scmp.eq.s32.totalorder %s14, 0
    %p77 = por %p75, %p76
    %p78 = scmp.ne.s32.totalorder %s66, %s67
    %p79 = scmp.eq.s32.totalorder %s15, 1
    %p80 = por %p78, %p79
    %p82 = scmp.ne.s32.totalorder %s67, %s81
    %p83 = scmp.eq.s32.totalorder %s15, 0
    %p84 = por %p82, %p83
    %s85 = ssub.s32 %s9, %s16
    %p86 = scmp.eq.s32.totalorder %s85, 0
    %s88 = sadd.s32 %s87, 1
    %s89 = scalar_select %p86, %s87, %s88
    %p92 = pneg %p86
    %p93 = scmp.eq.s32.totalorder %s9, 1
    %p94 = por %p92, %p93
    %p95 = scmp.ne.s32.totalorder %s87, %s90
    %p96 = scmp.eq.s32.totalorder %s9, 0
    %p97 = por %p95, %p96
    %p98 = scmp.ne.s32.totalorder %s87, %s90
    %p99 = scmp.eq.s32.totalorder %s14, 1
    %p100 = por %p98, %p99
    %p101 = scmp.ne.s32.totalorder %s90, %s91
    %p102 = scmp.eq.s32.totalorder %s14, 0
    %p103 = por %p101, %p102
    %p104 = scmp.ne.s32.totalorder %s90, %s91
    %p105 = scmp.eq.s32.totalorder %s15, 1
    %p106 = por %p104, %p105
    %p108 = scmp.ne.s32.totalorder %s91, %s107
    %p109 = scmp.eq.s32.totalorder %s15, 0
    %p110 = por %p108, %p109
    %p111 = scmp.le.s32.totalorder 1, %s9
    %p112 = scmp.lt.s32.totalorder %s9, 3
    %p113 = pnand %p111, %p112
    %p114 = pneg %p113
    // Predicated region
    $region9: #{_lambda_.7} parent=5 // pred_check
      _
    $region10: #{_lambda_.7} parent=5 // pred_check_branch
      %116 = sbr.rel (%p113) target = $region12
    $region11: #{_lambda_.7} parent=5 // pred_region
      %s117 = ssub.s32 %s9, 1
      // Predicated region
      $region13: #{_lambda_.7} parent=11 // pred_check
        %p118 = pneg %p56
      $region14: #{_lambda_.7} parent=11 // pred_check_branch
        %120 = sbr.rel (%p118) target = $region16
      $region15: #{_lambda_.7} parent=11 // pred_region
        _
      $region16: #{_lambda_.7} parent=11 // pred_fallthru
        _
      // Predicated region
      $region17: #{_lambda_.7} parent=11 // pred_check
        %p121 = pneg %p77
      $region18: #{_lambda_.7} parent=11 // pred_check_branch
        %123 = sbr.rel (%p121) target = $region20
      $region19: #{_lambda_.7} parent=11 // pred_region
        _
      $region20: #{_lambda_.7} parent=11 // pred_fallthru
        _
    $region12: #{_lambda_.7} parent=5 // pred_fallthru
      _
    %p124 = scmp.lt.s32.totalorder %s9, 2
    // Predicated region
    $region21: #{_lambda_.7} parent=5 // pred_check
      %p125 = pneg %p124
    $region22: #{_lambda_.7} parent=5 // pred_check_branch
      %127 = sbr.rel (%p125) target = $region24
    $region23: #{_lambda_.7} parent=5 // pred_region
      // Predicated region
      $region25: #{_lambda_.7} parent=23 // pred_check
        %p128 = pneg %p29
      $region26: #{_lambda_.7} parent=23 // pred_check_branch
        %130 = sbr.rel (%p128) target = $region28
      $region27: #{_lambda_.7} parent=23 // pred_region
        %s131 = smul.u32 4, %s9
        %p132 = scmp.lt.s32.totalorder %s131, 7
        %s133 = scalar_select %p132, %s131, 7
        %s134 = smul.addr %s133, 8
        %s135 = scalar_lea.vmem %s0, %s134
        %s136 = smul.u32 4, %s9
      $region28: #{_lambda_.7} parent=23 // pred_fallthru
        _
    $region24: #{_lambda_.7} parent=5 // pred_fallthru
      _
    %p137 = scmp.le.s32.totalorder 1, %s9
    %p138 = scmp.lt.s32.totalorder %s9, 3
    %p139 = pnand %p137, %p138
    %p140 = pneg %p139
    // Predicated region
    $region29: #{_lambda_.7} parent=5 // pred_check
      _
    $region30: #{_lambda_.7} parent=5 // pred_check_branch
      %142 = sbr.rel (%p139) target = $region32
    $region31: #{_lambda_.7} parent=5 // pred_region
      %s143 = ssub.s32 %s9, 1
      %s144 = smul.u32 4, %s14
      %p145 = scmp.lt.s32.totalorder %s144, 7
      %s146 = scalar_select %p145, %s144, 7
      %s147 = smul.addr %s146, 8
      %s148 = scalar_lea.vmem %s0, %s147
      %p149 = pneg %p35
      %p150 = pneg %p32
      %p151 = pneg %p56
      %p152 = pneg %p53
      %p153 = pneg %p77
      %p154 = pneg %p74
      %p155 = pneg %p103
      %p156 = pneg %p100
      %s157 = smul.u32 4, %s14
      %p158 = scmp.lt.s32.totalorder %s157, 7
      %s159 = scalar_select %p158, %s157, 7
      %s160 = smul.addr %s159, 4
      %s161 = scalar_lea.vmem %s3, %s160
      %s162 = smul.u32 4, %s14
      %p163 = scmp.lt.s32.totalorder %s162, 7
      %s164 = scalar_select %p163, %s162, 7
      %s165 = smul.addr %s164, 8
      %s166 = scalar_lea.vmem %s0, %s165
      %s167 = smul.u32 4, %s14
      %s168 = smul.u32 4, %s14
      %p169 = scmp.lt.s32.totalorder %s168, 7
      %s170 = scalar_select %p169, %s168, 7
      %s171 = smul.addr %s170, 4
      %s172 = scalar_lea.vmem %s3, %s171
      %s173 = smul.u32 4, %s14
      %v174 = vld [vmem:[%s166] sm:$0xff]
      %v175 = vld [vmem:[%s166 + $0x8] sm:$0xff]
      %v176 = vld [vmem:[%s166 + $0x10] sm:$0xff]
      %v177 = vld [vmem:[%s166 + $0x18] sm:$0xff]
      %v178 = vld [vmem:[%s1] sm:$0xff]
      %v179 = vld [vmem:[%s1 + $0x8] sm:$0xff]
      %v180 = vld [vmem:[%s1 + $0x10] sm:$0xff]
      %v181 = vld [vmem:[%s1 + $0x18] sm:$0xff]
      %v182 = vld [vmem:[%s1 + $0x20] sm:$0xff]
      %v183 = vld [vmem:[%s1 + $0x28] sm:$0xff]
      %v184 = vld [vmem:[%s1 + $0x30] sm:$0xff]
      %v185 = vld [vmem:[%s1 + $0x38] sm:$0xff]
      %v186 = vld [vmem:[%s1 + $0x40] sm:$0xff]
      %v187 = vld [vmem:[%s1 + $0x48] sm:$0xff]
      %v188 = vld [vmem:[%s1 + $0x50] sm:$0xff]
      %v189 = vld [vmem:[%s1 + $0x58] sm:$0xff]
      %v190 = vld [vmem:[%s1 + $0x60] sm:$0xff]
      %v191 = vld [vmem:[%s1 + $0x68] sm:$0xff]
      %v192 = vld [vmem:[%s1 + $0x70] sm:$0xff]
      %v193 = vld [vmem:[%s1 + $0x78] sm:$0xff]
      %v194 = vld [vmem:[%s1 + $0x80] sm:$0xff]
      %v195 = vld [vmem:[%s1 + $0x88] sm:$0xff]
      %v196 = vld [vmem:[%s1 + $0x90] sm:$0xff]
      %v197 = vld [vmem:[%s1 + $0x98] sm:$0xff]
      %vm202 = vcmask 1046528
      %v203 = vrot.slane %v174, 1
      %v204 = vrot.slane %v175, 1
      %v205 = vsel %vm202, %v203, %v204
      %v206 = vrot.slane %v176, 1
      %v207 = vsel %vm202, %v204, %v206
      %v208 = vrot.slane %v177, 1
      %v209 = vsel %vm202, %v206, %v208
      %vm210 = vcmask 523264
      %v211 = vsel %vm210, %v205, 0
      %v213 = vsel %vm210, %v207, 0
      %v215 = vsel %vm210, %v209, 0
      %v217 = vsel %vm210, %v208, 0
      %219 = vmatprep.subr.mxu0 0.0
      %220 = vmatpush1.msra.mxu0 %v190
      %221 = vmatprep.subr.mxu0 0.0
      %222 = vmatpush1.msra.mxu0 %v191
      %223 = vmatprep.subr.mxu0 0.0
      %224 = vmatpush1.msra.mxu0 %v192
      %225 = vmatprep.subr.mxu0 0.0
      %226 = vmatpush1.msra.mxu0 %v193
      %227 = vmatprep.subr.mxu0 0.0
      %228 = vmatpush1.msra.mxu0 %v194
      %229 = vmatprep.subr.mxu0 0.0
      %230 = vmatpush1.msra.mxu0 %v195
      %231 = vmatprep.subr.mxu0 0.0
      %232 = vmatpush1.msra.mxu0 %v196
      %233 = vmatprep.subr.mxu0 0.0
      %234 = vmatpush1.msra.mxu0 %v197
      %235 = vmatprep.subr.mxu0 0.0
      %236 = vmatpush1.msra.mxu0 0.0
      %237 = vmatprep.subr.mxu0 0.0
      %238 = vmatpush1.msra.mxu0 0.0
      %239 = vmatprep.subr.mxu0 0.0
      %240 = vmatpush1.msra.mxu0 0.0
      %241 = vmatprep.subr.mxu0 0.0
      %242 = vmatpush1.msra.mxu0 0.0
      %243 = vmatprep.subr.mxu0 0.0
      %244 = vmatpush1.msra.mxu0 0.0
      %245 = vmatprep.subr.mxu0 0.0
      %246 = vmatpush1.msra.mxu0 0.0
      %247 = vmatprep.subr.mxu0 0.0
      %248 = vmatpush1.msra.mxu0 0.0
      %249 = vmatprep.subr.mxu0 0.0
      %250 = vmatpush1.msra.mxu0 0.0
      %251 = vmatprep.subr.mxu0 0.0
      %252 = vmatpush1.msra.mxu0 0.0
      %253 = vmatprep.subr.mxu0 0.0
      %254 = vmatpush1.msra.mxu0 0.0
      %255 = vmatprep.subr.mxu0 0.0
      %256 = vmatpush1.msra.mxu0 0.0
      %257 = vmatprep.subr.mxu0 0.0
      %258 = vmatpush1.msra.mxu0 0.0
      %259 = vmatprep.subr.mxu0 0.0
      %260 = vmatpush1.msra.mxu0 0.0
      %261 = vmatprep.subr.mxu0 0.0
      %262 = vmatpush1.msra.mxu0 0.0
      %263 = vmatprep.subr.mxu0 0.0
      %264 = vmatpush1.msra.mxu0 0.0
      %265 = vmatprep.subr.mxu0 0.0
      %266 = vmatpush1.msra.mxu0 0.0
      %267 = vmatprep.subr.mxu0 0.0
      %268 = vmatpush1.msra.mxu0 0.0
      %269 = vmatprep.subr.mxu0 0.0
      %270 = vmatpush1.msra.mxu0 0.0
      %271 = vmatprep.subr.mxu0 0.0
      %272 = vmatpush1.msra.mxu0 0.0
      %273 = vmatprep.subr.mxu0 0.0
      %274 = vmatpush1.msra.mxu0 0.0
      %275 = vmatprep.subr.mxu0 0.0
      %276 = vmatpush1.msra.mxu0 0.0
      %277 = vmatprep.subr.mxu0 0.0
      %278 = vmatpush1.msra.mxu0 0.0
      %279 = vmatprep.subr.mxu0 0.0
      %280 = vmatpush1.msra.mxu0 0.0
      %281 = vmatprep.subr.mxu0 0.0
      %282 = vmatpush1.msra.mxu0 0.0
      %283 = vmatprep.mubr.f32.mxu0 0.0
      %284 = vmatmul.mubr.f32.gmra.mrb[0].mxu0 %v211
      %v285 = vpop.f32.mrb[0].mxu0
      %v286 = vadd.f32 0.0, %v285
      %v287 = vpop.f32.mrb[0].mxu0
      %288 = vmatprep.mubr.f32.mxu0 0.0
      %289 = vmatmul.mubr.f32.gmra.mrb[0].mxu0 %v213
      %v290 = vpop.f32.mrb[0].mxu0
      %v291 = vadd.f32 0.0, %v290
      %v292 = vpop.f32.mrb[0].mxu0
      %293 = vmatprep.mubr.f32.mxu0 0.0
      %294 = vmatmul.mubr.f32.gmra.mrb[0].mxu0 %v215
      %v295 = vpop.f32.mrb[0].mxu0
      %v296 = vadd.f32 0.0, %v295
      %v297 = vpop.f32.mrb[0].mxu0
      %298 = vmatprep.mubr.f32.mxu0 0.0
      %299 = vmatmul.mubr.f32.gmra.mrb[0].mxu0 %v217
      %v300 = vpop.f32.mrb[0].mxu0
      %v301 = vadd.f32 0.0, %v300
      %v302 = vpop.f32.mrb[0].mxu0
      %303 = vdwg.mxu0
      %vm304 = vcmask 785408
      %v305 = vsel %vm304, %v174, 0
      %v307 = vsel %vm304, %v175, 0
      %v309 = vsel %vm304, %v176, 0
      %v311 = vsel %vm304, %v177, 0
      %313 = vmatprep.subr.mxu0 0.0
      %314 = vmatpush1.msra.mxu0 %v178
      %315 = vmatprep.subr.mxu0 0.0
      %316 = vmatpush1.msra.mxu0 %v179
      %317 = vmatprep.subr.mxu0 0.0
      %318 = vmatpush1.msra.mxu0 %v180
      %319 = vmatprep.subr.mxu0 0.0
      %320 = vmatpush1.msra.mxu0 %v181
      %321 = vmatprep.subr.mxu0 0.0
      %322 = vmatpush1.msra.mxu0 %v182
      %323 = vmatprep.subr.mxu0 0.0
      %324 = vmatpush1.msra.mxu0 %v183
      %325 = vmatprep.subr.mxu0 0.0
      %326 = vmatpush1.msra.mxu0 %v184
      %327 = vmatprep.subr.mxu0 0.0
      %328 = vmatpush1.msra.mxu0 %v185
      %329 = vmatprep.subr.mxu0 0.0
      %330 = vmatpush1.msra.mxu0 %v186
      %331 = vmatprep.subr.mxu0 0.0
      %332 = vmatpush1.msra.mxu0 %v187
      %333 = vmatprep.subr.mxu0 0.0
      %334 = vmatpush1.msra.mxu0 %v188
      %335 = vmatprep.subr.mxu0 0.0
      %336 = vmatpush1.msra.mxu0 %v189
      %337 = vmatprep.subr.mxu0 0.0
      %338 = vmatpush1.msra.mxu0 0.0
      %339 = vmatprep.subr.mxu0 0.0
      %340 = vmatpush1.msra.mxu0 0.0
      %341 = vmatprep.subr.mxu0 0.0
      %342 = vmatpush1.msra.mxu0 0.0
      %343 = vmatprep.subr.mxu0 0.0
      %344 = vmatpush1.msra.mxu0 0.0
      %345 = vmatprep.subr.mxu0 0.0
      %346 = vmatpush1.msra.mxu0 0.0
      %347 = vmatprep.subr.mxu0 0.0
      %348 = vmatpush1.msra.mxu0 0.0
      %349 = vmatprep.subr.mxu0 0.0
      %350 = vmatpush1.msra.mxu0 0.0
      %351 = vmatprep.subr.mxu0 0.0
      %352 = vmatpush1.msra.mxu0 0.0
      %353 = vmatprep.subr.mxu0 0.0
      %354 = vmatpush1.msra.mxu0 0.0
      %355 = vmatprep.subr.mxu0 0.0
      %356 = vmatpush1.msra.mxu0 0.0
      %357 = vmatprep.subr.mxu0 0.0
      %358 = vmatpush1.msra.mxu0 0.0
      %359 = vmatprep.subr.mxu0 0.0
      %360 = vmatpush1.msra.mxu0 0.0
      %361 = vmatprep.subr.mxu0 0.0
      %362 = vmatpush1.msra.mxu0 0.0
      %363 = vmatprep.subr.mxu0 0.0
      %364 = vmatpush1.msra.mxu0 0.0
      %365 = vmatprep.subr.mxu0 0.0
      %366 = vmatpush1.msra.mxu0 0.0
      %367 = vmatprep.subr.mxu0 0.0
      %368 = vmatpush1.msra.mxu0 0.0
      %369 = vmatprep.subr.mxu0 0.0
      %370 = vmatpush1.msra.mxu0 0.0
      %371 = vmatprep.subr.mxu0 0.0
      %372 = vmatpush1.msra.mxu0 0.0
      %373 = vmatprep.subr.mxu0 0.0
      %374 = vmatpush1.msra.mxu0 0.0
      %375 = vmatprep.subr.mxu0 0.0
      %376 = vmatpush1.msra.mxu0 0.0
      %377 = vmatprep.mubr.f32.mxu0 0.0
      %378 = vmatmul.mubr.f32.gmra.mrb[0].mxu0 %v305
      %v379 = vpop.f32.mrb[0].mxu0
      %v380 = vadd.f32 %v286, %v379
      %v381 = vpop.f32.mrb[0].mxu0
      %382 = vmatprep.mubr.f32.mxu0 0.0
      %383 = vmatmul.mubr.f32.gmra.mrb[0].mxu0 %v307
      %v384 = vpop.f32.mrb[0].mxu0
      %v385 = vadd.f32 %v291, %v384
      %v386 = vpop.f32.mrb[0].mxu0
      %387 = vmatprep.mubr.f32.mxu0 0.0
      %388 = vmatmul.mubr.f32.gmra.mrb[0].mxu0 %v309
      %v389 = vpop.f32.mrb[0].mxu0
      %v390 = vadd.f32 %v296, %v389
      %v391 = vpop.f32.mrb[0].mxu0
      %392 = vmatprep.mubr.f32.mxu0 0.0
      %393 = vmatmul.mubr.f32.gmra.mrb[0].mxu0 %v311
      %v394 = vpop.f32.mrb[0].mxu0
      %v395 = vadd.f32 %v301, %v394
      %v396 = vpop.f32.mrb[0].mxu0
      %397 = vdwg.mxu0
      %v398 = vld [vmem:[%s2] sm:$0x1]
      %v400 = vlaneseq
      %v401 = vshrl.u32 %v400, 7
      %v402 = vsub.s32 0, %v401
      %v403 = vrot.slane %v398, %v402
      %v405 = vadd.f32 %v380, %v403
      %v406 = vadd.f32 %v385, %v403
      %v407 = vadd.f32 %v390, %v403
      %v408 = vadd.f32 %v395, %v403
      %vm409 = vcmp.ge.f32.partialorder %v405, 0.0
      %vm410 = vcmp.ge.f32.partialorder %v406, 0.0
      %vm411 = vcmp.ge.f32.partialorder %v407, 0.0
      %vm412 = vcmp.ge.f32.partialorder %v408, 0.0
      %v413 = vmul.f32 %v405, 0.1
      %v414 = vmul.f32 %v406, 0.1
      %v415 = vmul.f32 %v407, 0.1
      %v416 = vmul.f32 %v408, 0.1
      %v417 = vsel %vm409, %v405, %v413
      %v418 = vsel %vm410, %v406, %v414
      %v419 = vsel %vm411, %v407, %v415
      %v420 = vsel %vm412, %v408, %v416
      %vm421 = vcmask 519168
      %422 = vst.msk [vmem:[%s172] sm:$0xf] %vm421, %v417
      %s423 = scalar_lea.vmem %s172, 4
      %424 = vst.msk [vmem:[%s423] sm:$0xf] %vm421, %v418
      %s425 = scalar_lea.vmem %s172, 8
      %426 = vst.msk [vmem:[%s425] sm:$0xf] %vm421, %v419
      %s427 = scalar_lea.vmem %s172, 12
      %428 = vst.msk [vmem:[%s427] sm:$0xf] %vm421, %v420
      %s429 = smul.u32 4, %s14
      %p430 = scmp.lt.s32.totalorder %s429, 7
      %s431 = scalar_select %p430, %s429, 7
      %s432 = smul.addr %s431, 4
      %s433 = scalar_lea.vmem %s3, %s432
      // Predicated region
      $region33: #{_lambda_.7} parent=31 // pred_check
        %p434 = pneg %p100
      $region34: #{_lambda_.7} parent=31 // pred_check_branch
        %436 = sbr.rel (%p434) target = $region36
      $region35: #{_lambda_.7} parent=31 // pred_region
        %s437 = smul.u32 4, %s14
      $region36: #{_lambda_.7} parent=31 // pred_fallthru
        _
    $region32: #{_lambda_.7} parent=5 // pred_fallthru
      _
    %p438 = scmp.le.s32.totalorder 2, %s9
    // Predicated region
    $region37: #{_lambda_.7} parent=5 // pred_check
      %p439 = pneg %p438
    $region38: #{_lambda_.7} parent=5 // pred_check_branch
      %441 = sbr.rel (%p439) target = $region40
    $region39: #{_lambda_.7} parent=5 // pred_region
      %s442 = ssub.s32 %s9, 2
      // Predicated region
      $region41: #{_lambda_.7} parent=39 // pred_check
        %p443 = pneg %p106
      $region42: #{_lambda_.7} parent=39 // pred_check_branch
        %445 = sbr.rel (%p443) target = $region44
      $region43: #{_lambda_.7} parent=39 // pred_region
        %s446 = smul.u32 4, %s15
        %p447 = scmp.lt.s32.totalorder %s446, 7
        %s448 = scalar_select %p447, %s446, 7
        %s449 = smul.addr %s448, 4
        %s450 = scalar_lea.vmem %s3, %s449
      $region44: #{_lambda_.7} parent=39 // pred_fallthru
        _
    $region40: #{_lambda_.7} parent=5 // pred_fallthru
      _
  $region6: #{_lambda_.7} parent=0 // loop_footer
    %s13 = sadd.s32 1, %s9
  $region7: #{_lambda_.7} parent=0 // loop_footer_branch
    %8 = sbr.rel target = $region3
  $region8: #{_lambda_.7} parent=0 // loop_exit
    _

// kernel: _lambda_.9
$region0: #{_lambda_.9}
  #allocation0 [shape = 'u32[]', space=smem, size = 0x4, offset = 0x4, fixed_abs, tag = 'smem constant byte address 0x4 - core index']
  #allocation1 [shape = 'u32[144,128]{1,0:T(1,128)}', space=vmem, size = 0x12000, scoped, tag = 'internal scratch']
  %s0 = inlined_call_operand.vmem [shape: f32[64,192], index: 0, kind: input, shape index: {}]
  %s1 = inlined_call_operand.vmem [shape: f32[320,64], index: 1, kind: input, shape index: {}]
  %s2 = inlined_call_operand.vmem [shape: f32[1,64], index: 2, kind: input, shape index: {}]
  %s3 = inlined_call_operand.vmem [shape: f32[8,1,64], index: 3, kind: output, shape index: {}]
  %s4 = sld [smem:[#allocation0]]
  $region45: #{_lambda_.9} parent=0
    _
  %s6 = ssub.s32 1, %s4
  %s7 = scalar_select 0, %s6, %s4
  loop: start=0, step=1, limit=4
  $region2: #{_lambda_.9} parent=0 // loop_pre_header
    _
  $region3: #{_lambda_.9} parent=0 // loop_header
    %s9 = sphi 0, %s13
    %p10 = scmp.ge.s32.totalorder %s9, 4
    %s19 = sphi 0, %s21
    %s22 = sphi 0, %s19
    %s23 = sphi 0, %s22
    %s39 = sphi 0, %s23
    %s43 = sphi 0, %s43
    %s45 = sphi 0, %s43
    %s46 = sphi 0, %s45
    %s60 = sphi 0, %s46
    %s64 = sphi 0, %s64
    %s66 = sphi 0, %s64
    %s67 = sphi 0, %s66
    %s81 = sphi 0, %s67
    %s87 = sphi 0, %s89
    %s90 = sphi 0, %s87
    %s91 = sphi 0, %s90
    %s107 = sphi 0, %s91
  $region4: #{_lambda_.9} parent=0 // loop_header_branch
    %12 = sbr.rel (%p10) target = $region8
  $region5: #{_lambda_.9} parent=0 // loop_body
    %s14 = ssub.s32 %s9, 1
    %s15 = ssub.s32 %s9, 2
    %s16 = sadd.s32 %s9, 1
    %s17 = ssub.s32 %s9, %s16
    %p18 = scmp.eq.s32.totalorder %s17, 0
    %s20 = sadd.s32 %s19, 1
    %s21 = scalar_select %p18, %s19, %s20
    %p24 = pneg %p18
    %p25 = scmp.eq.s32.totalorder %s9, 1
    %p26 = por %p24, %p25
    %p27 = scmp.ne.s32.totalorder %s19, %s22
    %p28 = scmp.eq.s32.totalorder %s9, 0
    %p29 = por %p27, %p28
    %p30 = scmp.ne.s32.totalorder %s19, %s22
    %p31 = scmp.eq.s32.totalorder %s14, 1
    %p32 = por %p30, %p31
    %p33 = scmp.ne.s32.totalorder %s22, %s23
    %p34 = scmp.eq.s32.totalorder %s14, 0
    %p35 = por %p33, %p34
    %p36 = scmp.ne.s32.totalorder %s22, %s23
    %p37 = scmp.eq.s32.totalorder %s15, 1
    %p38 = por %p36, %p37
    %p40 = scmp.ne.s32.totalorder %s23, %s39
    %p41 = scmp.eq.s32.totalorder %s15, 0
    %p42 = por %p40, %p41
    %s44 = sadd.s32 %s43, 1
    %p47 = scmp.eq.s32.totalorder %s9, 1
    %p48 = scmp.ne.s32.totalorder %s43, %s45
    %p49 = scmp.eq.s32.totalorder %s9, 0
    %p50 = por %p48, %p49
    %p51 = scmp.ne.s32.totalorder %s43, %s45
    %p52 = scmp.eq.s32.totalorder %s14, 1
    %p53 = por %p51, %p52
    %p54 = scmp.ne.s32.totalorder %s45, %s46
    %p55 = scmp.eq.s32.totalorder %s14, 0
    %p56 = por %p54, %p55
    %p57 = scmp.ne.s32.totalorder %s45, %s46
    %p58 = scmp.eq.s32.totalorder %s15, 1
    %p59 = por %p57, %p58
    %p61 = scmp.ne.s32.totalorder %s46, %s60
    %p62 = scmp.eq.s32.totalorder %s15, 0
    %p63 = por %p61, %p62
    %s65 = sadd.s32 %s64, 1
    %p68 = scmp.eq.s32.totalorder %s9, 1
    %p69 = scmp.ne.s32.totalorder %s64, %s66
    %p70 = scmp.eq.s32.totalorder %s9, 0
    %p71 = por %p69, %p70
    %p72 = scmp.ne.s32.totalorder %s64, %s66
    %p73 = scmp.eq.s32.totalorder %s14, 1
    %p74 = por %p72, %p73
    %p75 = scmp.ne.s32.totalorder %s66, %s67
    %p76 = scmp.eq.s32.totalorder %s14, 0
    %p77 = por %p75, %p76
    %p78 = scmp.ne.s32.totalorder %s66, %s67
    %p79 = scmp.eq.s32.totalorder %s15, 1
    %p80 = por %p78, %p79
    %p82 = scmp.ne.s32.totalorder %s67, %s81
    %p83 = scmp.eq.s32.totalorder %s15, 0
    %p84 = por %p82, %p83
    %s85 = ssub.s32 %s9, %s16
    %p86 = scmp.eq.s32.totalorder %s85, 0
    %s88 = sadd.s32 %s87, 1
    %s89 = scalar_select %p86, %s87, %s88
    %p92 = pneg %p86
    %p93 = scmp.eq.s32.totalorder %s9, 1
    %p94 = por %p92, %p93
    %p95 = scmp.ne.s32.totalorder %s87, %s90
    %p96 = scmp.eq.s32.totalorder %s9, 0
    %p97 = por %p95, %p96
    %p98 = scmp.ne.s32.totalorder %s87, %s90
    %p99 = scmp.eq.s32.totalorder %s14, 1
    %p100 = por %p98, %p99
    %p101 = scmp.ne.s32.totalorder %s90, %s91
    %p102 = scmp.eq.s32.totalorder %s14, 0
    %p103 = por %p101, %p102
    %p104 = scmp.ne.s32.totalorder %s90, %s91
    %p105 = scmp.eq.s32.totalorder %s15, 1
    %p106 = por %p104, %p105
    %p108 = scmp.ne.s32.totalorder %s91, %s107
    %p109 = scmp.eq.s32.totalorder %s15, 0
    %p110 = por %p108, %p109
    %p111 = scmp.le.s32.totalorder 1, %s9
    %p112 = scmp.lt.s32.totalorder %s9, 3
    %p113 = pnand %p111, %p112
    %p114 = pneg %p113
    // Predicated region
    $region9: #{_lambda_.9} parent=5 // pred_check
      _
    $region10: #{_lambda_.9} parent=5 // pred_check_branch
      %116 = sbr.rel (%p113) target = $region12
    $region11: #{_lambda_.9} parent=5 // pred_region
      %s117 = ssub.s32 %s9, 1
      // Predicated region
      $region13: #{_lambda_.9} parent=11 // pred_check
        %p118 = pneg %p56
      $region14: #{_lambda_.9} parent=11 // pred_check_branch
        %120 = sbr.rel (%p118) target = $region16
      $region15: #{_lambda_.9} parent=11 // pred_region
        _
      $region16: #{_lambda_.9} parent=11 // pred_fallthru
        _
      // Predicated region
      $region17: #{_lambda_.9} parent=11 // pred_check
        %p121 = pneg %p77
      $region18: #{_lambda_.9} parent=11 // pred_check_branch
        %123 = sbr.rel (%p121) target = $region20
      $region19: #{_lambda_.9} parent=11 // pred_region
        _
      $region20: #{_lambda_.9} parent=11 // pred_fallthru
        _
    $region12: #{_lambda_.9} parent=5 // pred_fallthru
      _
    %p124 = scmp.lt.s32.totalorder %s9, 2
    // Predicated region
    $region21: #{_lambda_.9} parent=5 // pred_check
      %p125 = pneg %p124
    $region22: #{_lambda_.9} parent=5 // pred_check_branch
      %127 = sbr.rel (%p125) target = $region24
    $region23: #{_lambda_.9} parent=5 // pred_region
      // Predicated region
      $region25: #{_lambda_.9} parent=23 // pred_check
        %p128 = pneg %p29
      $region26: #{_lambda_.9} parent=23 // pred_check_branch
        %130 = sbr.rel (%p128) target = $region28
      $region27: #{_lambda_.9} parent=23 // pred_region
        %s131 = smul.u32 4, %s9
        %p132 = scmp.lt.s32.totalorder %s131, 7
        %s133 = scalar_select %p132, %s131, 7
        %s134 = smul.addr %s133, 2
        %s135 = smul.addr %s134, 8
        %s136 = scalar_lea.vmem %s0, %s135
        %s137 = smul.u32 4, %s9
      $region28: #{_lambda_.9} parent=23 // pred_fallthru
        _
    $region24: #{_lambda_.9} parent=5 // pred_fallthru
      _
    %p138 = scmp.le.s32.totalorder 1, %s9
    %p139 = scmp.lt.s32.totalorder %s9, 3
    %p140 = pnand %p138, %p139
    %p141 = pneg %p140
    // Predicated region
    $region29: #{_lambda_.9} parent=5 // pred_check
      _
    $region30: #{_lambda_.9} parent=5 // pred_check_branch
      %143 = sbr.rel (%p140) target = $region32
    $region31: #{_lambda_.9} parent=5 // pred_region
      %s144 = ssub.s32 %s9, 1
      %s145 = smul.u32 4, %s14
      %p146 = scmp.lt.s32.totalorder %s145, 7
      %s147 = scalar_select %p146, %s145, 7
      %s148 = smul.addr %s147, 2
      %s149 = smul.addr %s148, 8
      %s150 = scalar_lea.vmem %s0, %s149
      %p151 = pneg %p35
      %p152 = pneg %p32
      %p153 = pneg %p56
      %p154 = pneg %p53
      %p155 = pneg %p77
      %p156 = pneg %p74
      %p157 = pneg %p103
      %p158 = pneg %p100
      %s159 = smul.u32 4, %s14
      %p160 = scmp.lt.s32.totalorder %s159, 7
      %s161 = scalar_select %p160, %s159, 7
      %s162 = scalar_lea.vmem %s3, %s161
      %s163 = smul.u32 4, %s14
      %p164 = scmp.lt.s32.totalorder %s163, 7
      %s165 = scalar_select %p164, %s163, 7
      %s166 = smul.addr %s165, 2
      %s167 = smul.addr %s166, 8
      %s168 = scalar_lea.vmem %s0, %s167
      %s169 = smul.u32 4, %s14
      %s170 = smul.u32 4, %s14
      %p171 = scmp.lt.s32.totalorder %s170, 7
      %s172 = scalar_select %p171, %s170, 7
      %s173 = scalar_lea.vmem %s3, %s172
      %s174 = smul.u32 4, %s14
      %v175 = vld [vmem:[%s168] sm:$0xff]
      %v176 = vld [vmem:[%s168 + $0x8] sm:$0xff]
      %v177 = vld [vmem:[%s168 + $0x10] sm:$0xff]
      %v178 = vld [vmem:[%s168 + $0x18] sm:$0xff]
      %v179 = vld [vmem:[%s168 + $0x20] sm:$0xff]
      %v180 = vld [vmem:[%s168 + $0x28] sm:$0xff]
      %v181 = vld [vmem:[%s168 + $0x30] sm:$0xff]
      %v182 = vld [vmem:[%s168 + $0x38] sm:$0xff]
      %v183 = vld [vmem:[%s1] sm:$0xff]
      %v184 = vld [vmem:[%s1 + $0x8] sm:$0xff]
      %v185 = vld [vmem:[%s1 + $0x10] sm:$0xff]
      %v186 = vld [vmem:[%s1 + $0x18] sm:$0xff]
      %v187 = vld [vmem:[%s1 + $0x20] sm:$0xff]
      %v188 = vld [vmem:[%s1 + $0x28] sm:$0xff]
      %v189 = vld [vmem:[%s1 + $0x30] sm:$0xff]
      %v190 = vld [vmem:[%s1 + $0x38] sm:$0xff]
      %v191 = vld [vmem:[%s1 + $0x40] sm:$0xff]
      %v192 = vld [vmem:[%s1 + $0x48] sm:$0xff]
      %v193 = vld [vmem:[%s1 + $0x50] sm:$0xff]
      %v194 = vld [vmem:[%s1 + $0x58] sm:$0xff]
      %v195 = vld [vmem:[%s1 + $0x60] sm:$0xff]
      %v196 = vld [vmem:[%s1 + $0x68] sm:$0xff]
      %v197 = vld [vmem:[%s1 + $0x70] sm:$0xff]
      %v198 = vld [vmem:[%s1 + $0x78] sm:$0xff]
      %v199 = vld [vmem:[%s1 + $0x80] sm:$0xff]
      %v200 = vld [vmem:[%s1 + $0x88] sm:$0xff]
      %v201 = vld [vmem:[%s1 + $0x90] sm:$0xff]
      %v202 = vld [vmem:[%s1 + $0x98] sm:$0xff]
      %v203 = vld [vmem:[%s1 + $0xa0] sm:$0xff]
      %v204 = vld [vmem:[%s1 + $0xa8] sm:$0xff]
      %v205 = vld [vmem:[%s1 + $0xb0] sm:$0xff]
      %v206 = vld [vmem:[%s1 + $0xb8] sm:$0xff]
      %v207 = vld [vmem:[%s1 + $0xc0] sm:$0xff]
      %v208 = vld [vmem:[%s1 + $0xc8] sm:$0xff]
      %v209 = vld [vmem:[%s1 + $0xd0] sm:$0xff]
      %v210 = vld [vmem:[%s1 + $0xd8] sm:$0xff]
      %v211 = vld [vmem:[%s1 + $0xe0] sm:$0xff]
      %v212 = vld [vmem:[%s1 + $0xe8] sm:$0xff]
      %v213 = vld [vmem:[%s1 + $0xf0] sm:$0xff]
      %v214 = vld [vmem:[%s1 + $0xf8] sm:$0xff]
      %v215 = vld [vmem:[%s1 + $0x100] sm:$0xff]
      %v216 = vld [vmem:[%s1 + $0x108] sm:$0xff]
      %v217 = vld [vmem:[%s1 + $0x110] sm:$0xff]
      %v218 = vld [vmem:[%s1 + $0x118] sm:$0xff]
      %v219 = vld [vmem:[%s1 + $0x120] sm:$0xff]
      %v220 = vld [vmem:[%s1 + $0x128] sm:$0xff]
      %v221 = vld [vmem:[%s1 + $0x130] sm:$0xff]
      %v222 = vld [vmem:[%s1 + $0x138] sm:$0xff]
      %vm227 = vcmask 1046528
      %v228 = vrot.slane %v175, 1
      %v229 = vrot.slane %v177, 1
      %v230 = vsel %vm227, %v228, %v229
      %v231 = vrot.slane %v179, 1
      %v232 = vsel %vm227, %v229, %v231
      %v233 = vrot.slane %v181, 1
      %v234 = vsel %vm227, %v231, %v233
      %239 = vmatprep.subr.mxu0 0.0
      %240 = vmatpush1.msra.mxu0 %v207
      %241 = vmatprep.subr.mxu0 0.0
      %242 = vmatpush1.msra.mxu0 %v208
      %243 = vmatprep.subr.mxu0 0.0
      %244 = vmatpush1.msra.mxu0 %v209
      %245 = vmatprep.subr.mxu0 0.0
      %246 = vmatpush1.msra.mxu0 %v210
      %247 = vmatprep.subr.mxu0 0.0
      %248 = vmatpush1.msra.mxu0 %v211
      %249 = vmatprep.subr.mxu0 0.0
      %250 = vmatpush1.msra.mxu0 %v212
      %251 = vmatprep.subr.mxu0 0.0
      %252 = vmatpush1.msra.mxu0 %v213
      %253 = vmatprep.subr.mxu0 0.0
      %254 = vmatpush1.msra.mxu0 %v214
      %255 = vmatprep.subr.mxu0 0.0
      %256 = vmatpush1.msra.mxu0 %v215
      %257 = vmatprep.subr.mxu0 0.0
      %258 = vmatpush1.msra.mxu0 %v216
      %259 = vmatprep.subr.mxu0 0.0
      %260 = vmatpush1.msra.mxu0 %v217
      %261 = vmatprep.subr.mxu0 0.0
      %262 = vmatpush1.msra.mxu0 %v218
      %263 = vmatprep.subr.mxu0 0.0
      %264 = vmatpush1.msra.mxu0 %v219
      %265 = vmatprep.subr.mxu0 0.0
      %266 = vmatpush1.msra.mxu0 %v220
      %267 = vmatprep.subr.mxu0 0.0
      %268 = vmatpush1.msra.mxu0 %v221
      %269 = vmatprep.subr.mxu0 0.0
      %270 = vmatpush1.msra.mxu0 %v222
      %271 = vmatprep.subr.mxu0 0.0
      %272 = vmatpush1.msra.mxu0 0.0
      %273 = vmatprep.subr.mxu0 0.0
      %274 = vmatpush1.msra.mxu0 0.0
      %275 = vmatprep.subr.mxu0 0.0
      %276 = vmatpush1.msra.mxu0 0.0
      %277 = vmatprep.subr.mxu0 0.0
      %278 = vmatpush1.msra.mxu0 0.0
      %279 = vmatprep.subr.mxu0 0.0
      %280 = vmatpush1.msra.mxu0 0.0
      %281 = vmatprep.subr.mxu0 0.0
      %282 = vmatpush1.msra.mxu0 0.0
      %283 = vmatprep.subr.mxu0 0.0
      %284 = vmatpush1.msra.mxu0 0.0
      %285 = vmatprep.subr.mxu0 0.0
      %286 = vmatpush1.msra.mxu0 0.0
      %287 = vmatprep.subr.mxu0 0.0
      %288 = vmatpush1.msra.mxu0 0.0
      %289 = vmatprep.subr.mxu0 0.0
      %290 = vmatpush1.msra.mxu0 0.0
      %291 = vmatprep.subr.mxu0 0.0
      %292 = vmatpush1.msra.mxu0 0.0
      %293 = vmatprep.subr.mxu0 0.0
      %294 = vmatpush1.msra.mxu0 0.0
      %295 = vmatprep.subr.mxu0 0.0
      %296 = vmatpush1.msra.mxu0 0.0
      %297 = vmatprep.subr.mxu0 0.0
      %298 = vmatpush1.msra.mxu0 0.0
      %299 = vmatprep.subr.mxu0 0.0
      %300 = vmatpush1.msra.mxu0 0.0
      %301 = vmatprep.subr.mxu0 0.0
      %302 = vmatpush1.msra.mxu0 0.0
      %303 = vmatprep.mubr.f32.mxu0 0.0
      %304 = vmatmul.mubr.f32.gmra.mrb[0].mxu0 %v230
      %v305 = vpop.f32.mrb[0].mxu0
      %v306 = vadd.f32 0.0, %v305
      %v307 = vpop.f32.mrb[0].mxu0
      %308 = vmatprep.mubr.f32.mxu0 0.0
      %309 = vmatmul.mubr.f32.gmra.mrb[0].mxu0 %v232
      %v310 = vpop.f32.mrb[0].mxu0
      %v311 = vadd.f32 0.0, %v310
      %v312 = vpop.f32.mrb[0].mxu0
      %313 = vmatprep.mubr.f32.mxu0 0.0
      %314 = vmatmul.mubr.f32.gmra.mrb[0].mxu0 %v234
      %v315 = vpop.f32.mrb[0].mxu0
      %v316 = vadd.f32 0.0, %v315
      %v317 = vpop.f32.mrb[0].mxu0
      %318 = vmatprep.mubr.f32.mxu0 0.0
      %319 = vmatmul.mubr.f32.gmra.mrb[0].mxu0 %v233
      %v320 = vpop.f32.mrb[0].mxu0
      %v321 = vadd.f32 0.0, %v320
      %v322 = vpop.f32.mrb[0].mxu0
      %323 = vdwg.mxu0
      %vm324 = vcmask 523264
      %v326 = vsel %vm324, %v176, 0
      %v329 = vsel %vm324, %v178, 0
      %v332 = vsel %vm324, %v180, 0
      %v335 = vsel %vm324, %v182, 0
      %337 = vmatprep.subr.mxu0 0.0
      %338 = vmatpush1.msra.mxu0 %v183
      %339 = vmatprep.subr.mxu0 0.0
      %340 = vmatpush1.msra.mxu0 %v184
      %341 = vmatprep.subr.mxu0 0.0
      %342 = vmatpush1.msra.mxu0 %v185
      %343 = vmatprep.subr.mxu0 0.0
      %344 = vmatpush1.msra.mxu0 %v186
      %345 = vmatprep.subr.mxu0 0.0
      %346 = vmatpush1.msra.mxu0 %v187
      %347 = vmatprep.subr.mxu0 0.0
      %348 = vmatpush1.msra.mxu0 %v188
      %349 = vmatprep.subr.mxu0 0.0
      %350 = vmatpush1.msra.mxu0 %v189
      %351 = vmatprep.subr.mxu0 0.0
      %352 = vmatpush1.msra.mxu0 %v190
      %353 = vmatprep.subr.mxu0 0.0
      %354 = vmatpush1.msra.mxu0 %v191
      %355 = vmatprep.subr.mxu0 0.0
      %356 = vmatpush1.msra.mxu0 %v192
      %357 = vmatprep.subr.mxu0 0.0
      %358 = vmatpush1.msra.mxu0 %v193
      %359 = vmatprep.subr.mxu0 0.0
      %360 = vmatpush1.msra.mxu0 %v194
      %361 = vmatprep.subr.mxu0 0.0
      %362 = vmatpush1.msra.mxu0 %v195
      %363 = vmatprep.subr.mxu0 0.0
      %364 = vmatpush1.msra.mxu0 %v196
      %365 = vmatprep.subr.mxu0 0.0
      %366 = vmatpush1.msra.mxu0 %v197
      %367 = vmatprep.subr.mxu0 0.0
      %368 = vmatpush1.msra.mxu0 %v198
      %369 = vmatprep.subr.mxu0 0.0
      %370 = vmatpush1.msra.mxu0 %v199
      %371 = vmatprep.subr.mxu0 0.0
      %372 = vmatpush1.msra.mxu0 %v200
      %373 = vmatprep.subr.mxu0 0.0
      %374 = vmatpush1.msra.mxu0 %v201
      %375 = vmatprep.subr.mxu0 0.0
      %376 = vmatpush1.msra.mxu0 %v202
      %377 = vmatprep.subr.mxu0 0.0
      %378 = vmatpush1.msra.mxu0 %v203
      %379 = vmatprep.subr.mxu0 0.0
      %380 = vmatpush1.msra.mxu0 %v204
      %381 = vmatprep.subr.mxu0 0.0
      %382 = vmatpush1.msra.mxu0 %v205
      %383 = vmatprep.subr.mxu0 0.0
      %384 = vmatpush1.msra.mxu0 %v206
      %385 = vmatprep.subr.mxu0 0.0
      %386 = vmatpush1.msra.mxu0 0.0
      %387 = vmatprep.subr.mxu0 0.0
      %388 = vmatpush1.msra.mxu0 0.0
      %389 = vmatprep.subr.mxu0 0.0
      %390 = vmatpush1.msra.mxu0 0.0
      %391 = vmatprep.subr.mxu0 0.0
      %392 = vmatpush1.msra.mxu0 0.0
      %393 = vmatprep.subr.mxu0 0.0
      %394 = vmatpush1.msra.mxu0 0.0
      %395 = vmatprep.subr.mxu0 0.0
      %396 = vmatpush1.msra.mxu0 0.0
      %397 = vmatprep.subr.mxu0 0.0
      %398 = vmatpush1.msra.mxu0 0.0
      %399 = vmatprep.subr.mxu0 0.0
      %400 = vmatpush1.msra.mxu0 0.0
      %401 = vmatprep.mubr.f32.mxu0 %v326
      %402 = vmatmul.mubr.f32.gmra.mrb[0].mxu0 %v175
      %v403 = vpop.f32.mrb[0].mxu0
      %v404 = vadd.f32 %v306, %v403
      %v405 = vpop.f32.mrb[0].mxu0
      %406 = vmatprep.mubr.f32.mxu0 %v329
      %407 = vmatmul.mubr.f32.gmra.mrb[0].mxu0 %v177
      %v408 = vpop.f32.mrb[0].mxu0
      %v409 = vadd.f32 %v311, %v408
      %v410 = vpop.f32.mrb[0].mxu0
      %411 = vmatprep.mubr.f32.mxu0 %v332
      %412 = vmatmul.mubr.f32.gmra.mrb[0].mxu0 %v179
      %v413 = vpop.f32.mrb[0].mxu0
      %v414 = vadd.f32 %v316, %v413
      %v415 = vpop.f32.mrb[0].mxu0
      %416 = vmatprep.mubr.f32.mxu0 %v335
      %417 = vmatmul.mubr.f32.gmra.mrb[0].mxu0 %v181
      %v418 = vpop.f32.mrb[0].mxu0
      %v419 = vadd.f32 %v321, %v418
      %v420 = vpop.f32.mrb[0].mxu0
      %421 = vdwg.mxu0
      %v422 = vld [vmem:[%s2] sm:$0x1]
      %v424 = vlaneseq
      %v425 = vshrl.u32 %v424, 7
      %v426 = vsub.s32 0, %v425
      %v427 = vrot.slane %v422, %v426
      %v429 = vadd.f32 %v404, %v427
      %v430 = vadd.f32 %v409, %v427
      %v431 = vadd.f32 %v414, %v427
      %v432 = vadd.f32 %v419, %v427
      %vm433 = vcmp.ge.f32.partialorder %v429, 0.0
      %vm434 = vcmp.ge.f32.partialorder %v430, 0.0
      %vm435 = vcmp.ge.f32.partialorder %v431, 0.0
      %vm436 = vcmp.ge.f32.partialorder %v432, 0.0
      %v437 = vmul.f32 %v429, 0.1
      %v438 = vmul.f32 %v430, 0.1
      %v439 = vmul.f32 %v431, 0.1
      %v440 = vmul.f32 %v432, 0.1
      %v441 = vsel %vm433, %v429, %v437
      %v442 = vsel %vm434, %v430, %v438
      %v443 = vsel %vm435, %v431, %v439
      %v444 = vsel %vm436, %v432, %v440
      %vm445 = vcmask 516096
      %446 = vst.msk [vmem:[%s173] sm:$0x1] %vm445, %v441
      %s447 = scalar_lea.vmem %s173, 1
      %448 = vst.msk [vmem:[%s447] sm:$0x1] %vm445, %v442
      %s449 = scalar_lea.vmem %s173, 2
      %450 = vst.msk [vmem:[%s449] sm:$0x1] %vm445, %v443
      %s451 = scalar_lea.vmem %s173, 3
      %452 = vst.msk [vmem:[%s451] sm:$0x1] %vm445, %v444
      %s453 = smul.u32 4, %s14
      %p454 = scmp.lt.s32.totalorder %s453, 7
      %s455 = scalar_select %p454, %s453, 7
      %s456 = scalar_lea.vmem %s3, %s455
      // Predicated region
      $region33: #{_lambda_.9} parent=31 // pred_check
        %p457 = pneg %p100
      $region34: #{_lambda_.9} parent=31 // pred_check_branch
        %459 = sbr.rel (%p457) target = $region36
      $region35: #{_lambda_.9} parent=31 // pred_region
        %s460 = smul.u32 4, %s14
      $region36: #{_lambda_.9} parent=31 // pred_fallthru
        _
    $region32: #{_lambda_.9} parent=5 // pred_fallthru
      _
    %p461 = scmp.le.s32.totalorder 2, %s9
    // Predicated region
    $region37: #{_lambda_.9} parent=5 // pred_check
      %p462 = pneg %p461
    $region38: #{_lambda_.9} parent=5 // pred_check_branch
      %464 = sbr.rel (%p462) target = $region40
    $region39: #{_lambda_.9} parent=5 // pred_region
      %s465 = ssub.s32 %s9, 2
      // Predicated region
      $region41: #{_lambda_.9} parent=39 // pred_check
        %p466 = pneg %p106
      $region42: #{_lambda_.9} parent=39 // pred_check_branch
        %468 = sbr.rel (%p466) target = $region44
      $region43: #{_lambda_.9} parent=39 // pred_region
        %s469 = smul.u32 4, %s15
        %p470 = scmp.lt.s32.totalorder %s469, 7
        %s471 = scalar_select %p470, %s469, 7
        %s472 = scalar_lea.vmem %s3, %s471
      $region44: #{_lambda_.9} parent=39 // pred_fallthru
        _
    $region40: #{_lambda_.9} parent=5 // pred_fallthru
      _
  $region6: #{_lambda_.9} parent=0 // loop_footer
    %s13 = sadd.s32 1, %s9
  $region7: #{_lambda_.9} parent=0 // loop_footer_branch
    %8 = sbr.rel target = $region3
  $region8: #{_lambda_.9} parent=0 // loop_exit
    _

// kernel: _lambda_.6
$region0: #{_lambda_.6}
  #allocation0 [shape = 'u32[]', space=smem, size = 0x4, offset = 0x4, fixed_abs, tag = 'smem constant byte address 0x4 - core index']
  #allocation1 [shape = 'u32[144,128]{1,0:T(1,128)}', space=vmem, size = 0x12000, scoped, tag = 'internal scratch']
  %s0 = inlined_call_operand.vmem [shape: f32[128,3], index: 0, kind: input, shape index: {}]
  %s1 = inlined_call_operand.vmem [shape: f32[5,32], index: 1, kind: input, shape index: {}]
  %s2 = inlined_call_operand.vmem [shape: f32[1,32], index: 2, kind: input, shape index: {}]
  %s3 = inlined_call_operand.vmem [shape: f32[8,11,32], index: 3, kind: output, shape index: {}]
  %s4 = sld [smem:[#allocation0]]
  $region45: #{_lambda_.6} parent=0
    _
  %s6 = ssub.s32 1, %s4
  %s7 = scalar_select 0, %s6, %s4
  loop: start=0, step=1, limit=4
  $region2: #{_lambda_.6} parent=0 // loop_pre_header
    _
  $region3: #{_lambda_.6} parent=0 // loop_header
    %s9 = sphi 0, %s13
    %p10 = scmp.ge.s32.totalorder %s9, 4
    %s19 = sphi 0, %s21
    %s22 = sphi 0, %s19
    %s23 = sphi 0, %s22
    %s39 = sphi 0, %s23
    %s43 = sphi 0, %s43
    %s45 = sphi 0, %s43
    %s46 = sphi 0, %s45
    %s60 = sphi 0, %s46
    %s64 = sphi 0, %s64
    %s66 = sphi 0, %s64
    %s67 = sphi 0, %s66
    %s81 = sphi 0, %s67
    %s87 = sphi 0, %s89
    %s90 = sphi 0, %s87
    %s91 = sphi 0, %s90
    %s107 = sphi 0, %s91
  $region4: #{_lambda_.6} parent=0 // loop_header_branch
    %12 = sbr.rel (%p10) target = $region8
  $region5: #{_lambda_.6} parent=0 // loop_body
    %s14 = ssub.s32 %s9, 1
    %s15 = ssub.s32 %s9, 2
    %s16 = sadd.s32 %s9, 1
    %s17 = ssub.s32 %s9, %s16
    %p18 = scmp.eq.s32.totalorder %s17, 0
    %s20 = sadd.s32 %s19, 1
    %s21 = scalar_select %p18, %s19, %s20
    %p24 = pneg %p18
    %p25 = scmp.eq.s32.totalorder %s9, 1
    %p26 = por %p24, %p25
    %p27 = scmp.ne.s32.totalorder %s19, %s22
    %p28 = scmp.eq.s32.totalorder %s9, 0
    %p29 = por %p27, %p28
    %p30 = scmp.ne.s32.totalorder %s19, %s22
    %p31 = scmp.eq.s32.totalorder %s14, 1
    %p32 = por %p30, %p31
    %p33 = scmp.ne.s32.totalorder %s22, %s23
    %p34 = scmp.eq.s32.totalorder %s14, 0
    %p35 = por %p33, %p34
    %p36 = scmp.ne.s32.totalorder %s22, %s23
    %p37 = scmp.eq.s32.totalorder %s15, 1
    %p38 = por %p36, %p37
    %p40 = scmp.ne.s32.totalorder %s23, %s39
    %p41 = scmp.eq.s32.totalorder %s15, 0
    %p42 = por %p40, %p41
    %s44 = sadd.s32 %s43, 1
    %p47 = scmp.eq.s32.totalorder %s9, 1
    %p48 = scmp.ne.s32.totalorder %s43, %s45
    %p49 = scmp.eq.s32.totalorder %s9, 0
    %p50 = por %p48, %p49
    %p51 = scmp.ne.s32.totalorder %s43, %s45
    %p52 = scmp.eq.s32.totalorder %s14, 1
    %p53 = por %p51, %p52
    %p54 = scmp.ne.s32.totalorder %s45, %s46
    %p55 = scmp.eq.s32.totalorder %s14, 0
    %p56 = por %p54, %p55
    %p57 = scmp.ne.s32.totalorder %s45, %s46
    %p58 = scmp.eq.s32.totalorder %s15, 1
    %p59 = por %p57, %p58
    %p61 = scmp.ne.s32.totalorder %s46, %s60
    %p62 = scmp.eq.s32.totalorder %s15, 0
    %p63 = por %p61, %p62
    %s65 = sadd.s32 %s64, 1
    %p68 = scmp.eq.s32.totalorder %s9, 1
    %p69 = scmp.ne.s32.totalorder %s64, %s66
    %p70 = scmp.eq.s32.totalorder %s9, 0
    %p71 = por %p69, %p70
    %p72 = scmp.ne.s32.totalorder %s64, %s66
    %p73 = scmp.eq.s32.totalorder %s14, 1
    %p74 = por %p72, %p73
    %p75 = scmp.ne.s32.totalorder %s66, %s67
    %p76 = scmp.eq.s32.totalorder %s14, 0
    %p77 = por %p75, %p76
    %p78 = scmp.ne.s32.totalorder %s66, %s67
    %p79 = scmp.eq.s32.totalorder %s15, 1
    %p80 = por %p78, %p79
    %p82 = scmp.ne.s32.totalorder %s67, %s81
    %p83 = scmp.eq.s32.totalorder %s15, 0
    %p84 = por %p82, %p83
    %s85 = ssub.s32 %s9, %s16
    %p86 = scmp.eq.s32.totalorder %s85, 0
    %s88 = sadd.s32 %s87, 1
    %s89 = scalar_select %p86, %s87, %s88
    %p92 = pneg %p86
    %p93 = scmp.eq.s32.totalorder %s9, 1
    %p94 = por %p92, %p93
    %p95 = scmp.ne.s32.totalorder %s87, %s90
    %p96 = scmp.eq.s32.totalorder %s9, 0
    %p97 = por %p95, %p96
    %p98 = scmp.ne.s32.totalorder %s87, %s90
    %p99 = scmp.eq.s32.totalorder %s14, 1
    %p100 = por %p98, %p99
    %p101 = scmp.ne.s32.totalorder %s90, %s91
    %p102 = scmp.eq.s32.totalorder %s14, 0
    %p103 = por %p101, %p102
    %p104 = scmp.ne.s32.totalorder %s90, %s91
    %p105 = scmp.eq.s32.totalorder %s15, 1
    %p106 = por %p104, %p105
    %p108 = scmp.ne.s32.totalorder %s91, %s107
    %p109 = scmp.eq.s32.totalorder %s15, 0
    %p110 = por %p108, %p109
    %p111 = scmp.le.s32.totalorder 1, %s9
    %p112 = scmp.lt.s32.totalorder %s9, 3
    %p113 = pnand %p111, %p112
    %p114 = pneg %p113
    // Predicated region
    $region9: #{_lambda_.6} parent=5 // pred_check
      _
    $region10: #{_lambda_.6} parent=5 // pred_check_branch
      %116 = sbr.rel (%p113) target = $region12
    $region11: #{_lambda_.6} parent=5 // pred_region
      %s117 = ssub.s32 %s9, 1
      // Predicated region
      $region13: #{_lambda_.6} parent=11 // pred_check
        %p118 = pneg %p56
      $region14: #{_lambda_.6} parent=11 // pred_check_branch
        %120 = sbr.rel (%p118) target = $region16
      $region15: #{_lambda_.6} parent=11 // pred_region
        _
      $region16: #{_lambda_.6} parent=11 // pred_fallthru
        _
      // Predicated region
      $region17: #{_lambda_.6} parent=11 // pred_check
        %p121 = pneg %p77
      $region18: #{_lambda_.6} parent=11 // pred_check_branch
        %123 = sbr.rel (%p121) target = $region20
      $region19: #{_lambda_.6} parent=11 // pred_region
        _
      $region20: #{_lambda_.6} parent=11 // pred_fallthru
        _
    $region12: #{_lambda_.6} parent=5 // pred_fallthru
      _
    %p124 = scmp.lt.s32.totalorder %s9, 2
    // Predicated region
    $region21: #{_lambda_.6} parent=5 // pred_check
      %p125 = pneg %p124
    $region22: #{_lambda_.6} parent=5 // pred_check_branch
      %127 = sbr.rel (%p125) target = $region24
    $region23: #{_lambda_.6} parent=5 // pred_region
      // Predicated region
      $region25: #{_lambda_.6} parent=23 // pred_check
        %p128 = pneg %p29
      $region26: #{_lambda_.6} parent=23 // pred_check_branch
        %130 = sbr.rel (%p128) target = $region28
      $region27: #{_lambda_.6} parent=23 // pred_region
        %s131 = smul.u32 8, %s9
        %p132 = scmp.lt.s32.totalorder %s131, 15
        %s133 = scalar_select %p132, %s131, 15
        %s134 = smul.addr %s133, 8
        %s135 = scalar_lea.vmem %s0, %s134
        %s136 = smul.u32 8, %s9
      $region28: #{_lambda_.6} parent=23 // pred_fallthru
        _
    $region24: #{_lambda_.6} parent=5 // pred_fallthru
      _
    %p137 = scmp.le.s32.totalorder 1, %s9
    %p138 = scmp.lt.s32.totalorder %s9, 3
    %p139 = pnand %p137, %p138
    %p140 = pneg %p139
    // Predicated region
    $region29: #{_lambda_.6} parent=5 // pred_check
      _
    $region30: #{_lambda_.6} parent=5 // pred_check_branch
      %142 = sbr.rel (%p139) target = $region32
    $region31: #{_lambda_.6} parent=5 // pred_region
      %s143 = ssub.s32 %s9, 1
      %s144 = smul.u32 8, %s14
      %p145 = scmp.lt.s32.totalorder %s144, 15
      %s146 = scalar_select %p145, %s144, 15
      %s147 = smul.addr %s146, 8
      %s148 = scalar_lea.vmem %s0, %s147
      %p149 = pneg %p35
      %p150 = pneg %p32
      %p151 = pneg %p56
      %p152 = pneg %p53
      %p153 = pneg %p77
      %p154 = pneg %p74
      %p155 = pneg %p103
      %p156 = pneg %p100
      %s157 = smul.u32 4, %s14
      %p158 = scmp.lt.s32.totalorder %s157, 7
      %s159 = scalar_select %p158, %s157, 7
      %s160 = smul.addr %s159, 2
      %s161 = smul.addr %s160, 8
      %s162 = scalar_lea.vmem %s3, %s161
      %s163 = smul.u32 8, %s14
      %p164 = scmp.lt.s32.totalorder %s163, 15
      %s165 = scalar_select %p164, %s163, 15
      %s166 = smul.addr %s165, 8
      %s167 = scalar_lea.vmem %s0, %s166
      %s168 = smul.u32 8, %s14
      %s169 = smul.u32 4, %s14
      %p170 = scmp.lt.s32.totalorder %s169, 7
      %s171 = scalar_select %p170, %s169, 7
      %s172 = smul.addr %s171, 2
      %s173 = smul.addr %s172, 8
      %s174 = scalar_lea.vmem %s3, %s173
      %s175 = smul.u32 4, %s14
      %v176 = vld [vmem:[%s167] sm:$0xff]
      %v177 = vld [vmem:[%s167 + $0x8] sm:$0xff]
      %v178 = vld [vmem:[%s167 + $0x10] sm:$0xff]
      %v179 = vld [vmem:[%s167 + $0x18] sm:$0xff]
      %v180 = vld [vmem:[%s167 + $0x20] sm:$0xff]
      %v181 = vld [vmem:[%s167 + $0x28] sm:$0xff]
      %v182 = vld [vmem:[%s167 + $0x30] sm:$0xff]
      %v183 = vld [vmem:[%s167 + $0x38] sm:$0xff]
      %v184 = vld [vmem:[%s1] sm:$0x1f]
      %186 = vset.pattern.permute.xlu0 0
      %187 = vperm.xlu0 %186, %v176
      %v188 = vpop.permute.xlu0 %187
      %191 = vset.pattern.permute.xlu0 0
      %192 = vperm.xlu0 %191, %v177
      %v193 = vpop.permute.xlu0 %192
      %196 = vset.pattern.permute.xlu0 0
      %197 = vperm.xlu0 %196, %v178
      %v198 = vpop.permute.xlu0 %197
      %201 = vset.pattern.permute.xlu0 0
      %202 = vperm.xlu0 %201, %v179
      %v203 = vpop.permute.xlu0 %202
      %206 = vset.pattern.permute.xlu0 0
      %207 = vperm.xlu0 %206, %v180
      %v208 = vpop.permute.xlu0 %207
      %211 = vset.pattern.permute.xlu0 0
      %212 = vperm.xlu0 %211, %v181
      %v213 = vpop.permute.xlu0 %212
      %216 = vset.pattern.permute.xlu0 0
      %217 = vperm.xlu0 %216, %v182
      %v218 = vpop.permute.xlu0 %217
      %221 = vset.pattern.permute.xlu0 0
      %222 = vperm.xlu0 %221, %v183
      %v223 = vpop.permute.xlu0 %222
      %v225 = vlaneseq
      %v226 = vshrl.u32 %v225, 7
      %v227 = vsub.s32 0, %v226
      %v228 = vrot.slane %v184, %v227
      %v229 = vmul.f32 %v188, %v228
      %v230 = vmul.f32 %v193, %v228
      %v231 = vmul.f32 %v198, %v228
      %v232 = vmul.f32 %v203, %v228
      %v233 = vmul.f32 %v208, %v228
      %v234 = vmul.f32 %v213, %v228
      %v235 = vmul.f32 %v218, %v228
      %v236 = vmul.f32 %v223, %v228
      %v237 = vadd.f32 %v229, 0.0
      %v238 = vadd.f32 %v230, 0.0
      %v239 = vadd.f32 %v231, 0.0
      %v240 = vadd.f32 %v232, 0.0
      %v241 = vadd.f32 %v233, 0.0
      %v242 = vadd.f32 %v234, 0.0
      %v243 = vadd.f32 %v235, 0.0
      %v244 = vadd.f32 %v236, 0.0
      %245 = vset.pattern.permute.xlu0 1
      %246 = vperm.xlu0 %245, %v176
      %v247 = vpop.permute.xlu0 %246
      %249 = vset.pattern.permute.xlu0 1
      %250 = vperm.xlu0 %249, %v177
      %v251 = vpop.permute.xlu0 %250
      %253 = vset.pattern.permute.xlu0 1
      %254 = vperm.xlu0 %253, %v178
      %v255 = vpop.permute.xlu0 %254
      %257 = vset.pattern.permute.xlu0 1
      %258 = vperm.xlu0 %257, %v179
      %v259 = vpop.permute.xlu0 %258
      %261 = vset.pattern.permute.xlu0 1
      %262 = vperm.xlu0 %261, %v180
      %v263 = vpop.permute.xlu0 %262
      %265 = vset.pattern.permute.xlu0 1
      %266 = vperm.xlu0 %265, %v181
      %v267 = vpop.permute.xlu0 %266
      %269 = vset.pattern.permute.xlu0 1
      %270 = vperm.xlu0 %269, %v182
      %v271 = vpop.permute.xlu0 %270
      %273 = vset.pattern.permute.xlu0 1
      %274 = vperm.xlu0 %273, %v183
      %v275 = vpop.permute.xlu0 %274
      %v277 = vlaneseq
      %v278 = vshrl.u32 %v277, 7
      %v279 = vsub.s32 1, %v278
      %v280 = vrot.slane %v184, %v279
      %v281 = vmul.f32 %v247, %v280
      %v282 = vmul.f32 %v251, %v280
      %v283 = vmul.f32 %v255, %v280
      %v284 = vmul.f32 %v259, %v280
      %v285 = vmul.f32 %v263, %v280
      %v286 = vmul.f32 %v267, %v280
      %v287 = vmul.f32 %v271, %v280
      %v288 = vmul.f32 %v275, %v280
      %v289 = vadd.f32 %v237, %v281
      %v290 = vadd.f32 %v238, %v282
      %v291 = vadd.f32 %v239, %v283
      %v292 = vadd.f32 %v240, %v284
      %v293 = vadd.f32 %v241, %v285
      %v294 = vadd.f32 %v242, %v286
      %v295 = vadd.f32 %v243, %v287
      %v296 = vadd.f32 %v244, %v288
      %297 = vset.pattern.permute.xlu0 2
      %298 = vperm.xlu0 %297, %v176
      %v299 = vpop.permute.xlu0 %298
      %301 = vset.pattern.permute.xlu0 2
      %302 = vperm.xlu0 %301, %v177
      %v303 = vpop.permute.xlu0 %302
      %305 = vset.pattern.permute.xlu0 2
      %306 = vperm.xlu0 %305, %v178
      %v307 = vpop.permute.xlu0 %306
      %309 = vset.pattern.permute.xlu0 2
      %310 = vperm.xlu0 %309, %v179
      %v311 = vpop.permute.xlu0 %310
      %313 = vset.pattern.permute.xlu0 2
      %314 = vperm.xlu0 %313, %v180
      %v315 = vpop.permute.xlu0 %314
      %317 = vset.pattern.permute.xlu0 2
      %318 = vperm.xlu0 %317, %v181
      %v319 = vpop.permute.xlu0 %318
      %321 = vset.pattern.permute.xlu0 2
      %322 = vperm.xlu0 %321, %v182
      %v323 = vpop.permute.xlu0 %322
      %325 = vset.pattern.permute.xlu0 2
      %326 = vperm.xlu0 %325, %v183
      %v327 = vpop.permute.xlu0 %326
      %v329 = vlaneseq
      %v330 = vshrl.u32 %v329, 7
      %v331 = vsub.s32 2, %v330
      %v332 = vrot.slane %v184, %v331
      %v333 = vmul.f32 %v299, %v332
      %v334 = vmul.f32 %v303, %v332
      %v335 = vmul.f32 %v307, %v332
      %v336 = vmul.f32 %v311, %v332
      %v337 = vmul.f32 %v315, %v332
      %v338 = vmul.f32 %v319, %v332
      %v339 = vmul.f32 %v323, %v332
      %v340 = vmul.f32 %v327, %v332
      %v341 = vadd.f32 %v289, %v333
      %v342 = vadd.f32 %v290, %v334
      %v343 = vadd.f32 %v291, %v335
      %v344 = vadd.f32 %v292, %v336
      %v345 = vadd.f32 %v293, %v337
      %v346 = vadd.f32 %v294, %v338
      %v347 = vadd.f32 %v295, %v339
      %v348 = vadd.f32 %v296, %v340
      %v349 = vlaneseq
      %v350 = vshrl.u32 %v349, 7
      %v351 = vsub.s32 3, %v350
      %v352 = vrot.slane %v184, %v351
      %v353 = vmul.f32 %v188, %v352
      %v354 = vmul.f32 %v193, %v352
      %v355 = vmul.f32 %v198, %v352
      %v356 = vmul.f32 %v203, %v352
      %v357 = vmul.f32 %v208, %v352
      %v358 = vmul.f32 %v213, %v352
      %v359 = vmul.f32 %v218, %v352
      %v360 = vmul.f32 %v223, %v352
      %vm369 = vcmask 1046528
      %v370 = vrot.slane %v353, 1
      %v371 = vrot.slane %v354, 1
      %v372 = vsel %vm369, %v370, %v371
      %v373 = vrot.slane %v355, 1
      %v374 = vsel %vm369, %v371, %v373
      %v375 = vrot.slane %v356, 1
      %v376 = vsel %vm369, %v373, %v375
      %v377 = vrot.slane %v357, 1
      %v378 = vsel %vm369, %v375, %v377
      %v379 = vrot.slane %v358, 1
      %v380 = vsel %vm369, %v377, %v379
      %v381 = vrot.slane %v359, 1
      %v382 = vsel %vm369, %v379, %v381
      %v383 = vrot.slane %v360, 1
      %v384 = vsel %vm369, %v381, %v383
      %v393 = vadd.f32 %v341, %v372
      %v394 = vadd.f32 %v342, %v374
      %v395 = vadd.f32 %v343, %v376
      %v396 = vadd.f32 %v344, %v378
      %v397 = vadd.f32 %v345, %v380
      %v398 = vadd.f32 %v346, %v382
      %v399 = vadd.f32 %v347, %v384
      %v400 = vadd.f32 %v348, %v383
      %v401 = vlaneseq
      %v402 = vshrl.u32 %v401, 7
      %v403 = vsub.s32 4, %v402
      %v404 = vrot.slane %v184, %v403
      %v405 = vmul.f32 %v247, %v404
      %v406 = vmul.f32 %v251, %v404
      %v407 = vmul.f32 %v255, %v404
      %v408 = vmul.f32 %v259, %v404
      %v409 = vmul.f32 %v263, %v404
      %v410 = vmul.f32 %v267, %v404
      %v411 = vmul.f32 %v271, %v404
      %v412 = vmul.f32 %v275, %v404
      %v421 = vrot.slane %v405, 1
      %v422 = vrot.slane %v406, 1
      %v423 = vsel %vm369, %v421, %v422
      %v424 = vrot.slane %v407, 1
      %v425 = vsel %vm369, %v422, %v424
      %v426 = vrot.slane %v408, 1
      %v427 = vsel %vm369, %v424, %v426
      %v428 = vrot.slane %v409, 1
      %v429 = vsel %vm369, %v426, %v428
      %v430 = vrot.slane %v410, 1
      %v431 = vsel %vm369, %v428, %v430
      %v432 = vrot.slane %v411, 1
      %v433 = vsel %vm369, %v430, %v432
      %v434 = vrot.slane %v412, 1
      %v435 = vsel %vm369, %v432, %v434
      %v444 = vadd.f32 %v393, %v423
      %v445 = vadd.f32 %v394, %v425
      %v446 = vadd.f32 %v395, %v427
      %v447 = vadd.f32 %v396, %v429
      %v448 = vadd.f32 %v397, %v431
      %v449 = vadd.f32 %v398, %v433
      %v450 = vadd.f32 %v399, %v435
      %v451 = vadd.f32 %v400, %v434
      %v452 = vld [vmem:[%s2] sm:$0x1]
      %v454 = vlaneseq
      %v455 = vshrl.u32 %v454, 7
      %v456 = vsub.s32 0, %v455
      %v457 = vrot.slane %v452, %v456
      %v459 = vadd.f32 %v444, %v457
      %v460 = vadd.f32 %v445, %v457
      %v461 = vadd.f32 %v446, %v457
      %v462 = vadd.f32 %v447, %v457
      %v463 = vadd.f32 %v448, %v457
      %v464 = vadd.f32 %v449, %v457
      %v465 = vadd.f32 %v450, %v457
      %v466 = vadd.f32 %v451, %v457
      %vm467 = vcmp.ge.f32.partialorder %v459, 0.0
      %vm468 = vcmp.ge.f32.partialorder %v460, 0.0
      %vm469 = vcmp.ge.f32.partialorder %v461, 0.0
      %vm470 = vcmp.ge.f32.partialorder %v462, 0.0
      %vm471 = vcmp.ge.f32.partialorder %v463, 0.0
      %vm472 = vcmp.ge.f32.partialorder %v464, 0.0
      %vm473 = vcmp.ge.f32.partialorder %v465, 0.0
      %vm474 = vcmp.ge.f32.partialorder %v466, 0.0
      %v475 = vmul.f32 %v459, 0.1
      %v476 = vmul.f32 %v460, 0.1
      %v477 = vmul.f32 %v461, 0.1
      %v478 = vmul.f32 %v462, 0.1
      %v479 = vmul.f32 %v463, 0.1
      %v480 = vmul.f32 %v464, 0.1
      %v481 = vmul.f32 %v465, 0.1
      %v482 = vmul.f32 %v466, 0.1
      %v483 = vsel %vm467, %v459, %v475
      %v484 = vsel %vm468, %v460, %v476
      %v485 = vsel %vm469, %v461, %v477
      %v486 = vsel %vm470, %v462, %v478
      %v487 = vsel %vm471, %v463, %v479
      %v488 = vsel %vm472, %v464, %v480
      %v489 = vsel %vm473, %v465, %v481
      %v490 = vsel %vm474, %v466, %v482
      %vm491 = vcmask 261120
      %492 = vst.msk [vmem:[%s174] sm:$0xff] %vm491, %v483
      %vm493 = vcmask 256000
      %494 = vst.msk [vmem:[%s174 + $0x8] sm:$0x7] %vm493, %v484
      %s495 = scalar_lea.vmem %s174, 16
      %496 = vst.msk [vmem:[%s495] sm:$0xff] %vm491, %v485
      %497 = vst.msk [vmem:[%s495 + $0x8] sm:$0x7] %vm493, %v486
      %s498 = scalar_lea.vmem %s174, 32
      %499 = vst.msk [vmem:[%s498] sm:$0xff] %vm491, %v487
      %500 = vst.msk [vmem:[%s498 + $0x8] sm:$0x7] %vm493, %v488
      %s501 = scalar_lea.vmem %s174, 48
      %502 = vst.msk [vmem:[%s501] sm:$0xff] %vm491, %v489
      %503 = vst.msk [vmem:[%s501 + $0x8] sm:$0x7] %vm493, %v490
      %s504 = smul.u32 4, %s14
      %p505 = scmp.lt.s32.totalorder %s504, 7
      %s506 = scalar_select %p505, %s504, 7
      %s507 = smul.addr %s506, 2
      %s508 = smul.addr %s507, 8
      %s509 = scalar_lea.vmem %s3, %s508
      // Predicated region
      $region33: #{_lambda_.6} parent=31 // pred_check
        %p510 = pneg %p100
      $region34: #{_lambda_.6} parent=31 // pred_check_branch
        %512 = sbr.rel (%p510) target = $region36
      $region35: #{_lambda_.6} parent=31 // pred_region
        %s513 = smul.u32 4, %s14
      $region36: #{_lambda_.6} parent=31 // pred_fallthru
        _
    $region32: #{_lambda_.6} parent=5 // pred_fallthru
      _
    %p514 = scmp.le.s32.totalorder 2, %s9
    // Predicated region
    $region37: #{_lambda_.6} parent=5 // pred_check
      %p515 = pneg %p514
    $region38: #{_lambda_.6} parent=5 // pred_check_branch
      %517 = sbr.rel (%p515) target = $region40
    $region39: #{_lambda_.6} parent=5 // pred_region
      %s518 = ssub.s32 %s9, 2
      // Predicated region
      $region41: #{_lambda_.6} parent=39 // pred_check
        %p519 = pneg %p106
      $region42: #{_lambda_.6} parent=39 // pred_check_branch
        %521 = sbr.rel (%p519) target = $region44
      $region43: #{_lambda_.6} parent=39 // pred_region
        %s522 = smul.u32 4, %s15
        %p523 = scmp.lt.s32.totalorder %s522, 7
        %s524 = scalar_select %p523, %s522, 7
        %s525 = smul.addr %s524, 2
        %s526 = smul.addr %s525, 8
        %s527 = scalar_lea.vmem %s3, %s526
      $region44: #{_lambda_.6} parent=39 // pred_fallthru
        _
    $region40: #{_lambda_.6} parent=5 // pred_fallthru
      _
  $region6: #{_lambda_.6} parent=0 // loop_footer
    %s13 = sadd.s32 1, %s9
  $region7: #{_lambda_.6} parent=0 // loop_footer_branch
    %8 = sbr.rel target = $region3
  $region8: #{_lambda_.6} parent=0 // loop_exit
    _

// kernel: _lambda_.8
$region0: #{_lambda_.8}
  #allocation0 [shape = 'u32[]', space=smem, size = 0x4, offset = 0x4, fixed_abs, tag = 'smem constant byte address 0x4 - core index']
  #allocation1 [shape = 'u32[144,128]{1,0:T(1,128)}', space=vmem, size = 0x12000, scoped, tag = 'internal scratch']
  %s0 = inlined_call_operand.vmem [shape: f32[64,192], index: 0, kind: input, shape index: {}]
  %s1 = inlined_call_operand.vmem [shape: f32[320,64], index: 1, kind: input, shape index: {}]
  %s2 = inlined_call_operand.vmem [shape: f32[1,64], index: 2, kind: input, shape index: {}]
  %s3 = inlined_call_operand.vmem [shape: f32[8,2,64], index: 3, kind: output, shape index: {}]
  %s4 = sld [smem:[#allocation0]]
  $region45: #{_lambda_.8} parent=0
    _
  %s6 = ssub.s32 1, %s4
  %s7 = scalar_select 0, %s6, %s4
  loop: start=0, step=1, limit=4
  $region2: #{_lambda_.8} parent=0 // loop_pre_header
    _
  $region3: #{_lambda_.8} parent=0 // loop_header
    %s9 = sphi 0, %s13
    %p10 = scmp.ge.s32.totalorder %s9, 4
    %s19 = sphi 0, %s21
    %s22 = sphi 0, %s19
    %s23 = sphi 0, %s22
    %s39 = sphi 0, %s23
    %s43 = sphi 0, %s43
    %s45 = sphi 0, %s43
    %s46 = sphi 0, %s45
    %s60 = sphi 0, %s46
    %s64 = sphi 0, %s64
    %s66 = sphi 0, %s64
    %s67 = sphi 0, %s66
    %s81 = sphi 0, %s67
    %s87 = sphi 0, %s89
    %s90 = sphi 0, %s87
    %s91 = sphi 0, %s90
    %s107 = sphi 0, %s91
  $region4: #{_lambda_.8} parent=0 // loop_header_branch
    %12 = sbr.rel (%p10) target = $region8
  $region5: #{_lambda_.8} parent=0 // loop_body
    %s14 = ssub.s32 %s9, 1
    %s15 = ssub.s32 %s9, 2
    %s16 = sadd.s32 %s9, 1
    %s17 = ssub.s32 %s9, %s16
    %p18 = scmp.eq.s32.totalorder %s17, 0
    %s20 = sadd.s32 %s19, 1
    %s21 = scalar_select %p18, %s19, %s20
    %p24 = pneg %p18
    %p25 = scmp.eq.s32.totalorder %s9, 1
    %p26 = por %p24, %p25
    %p27 = scmp.ne.s32.totalorder %s19, %s22
    %p28 = scmp.eq.s32.totalorder %s9, 0
    %p29 = por %p27, %p28
    %p30 = scmp.ne.s32.totalorder %s19, %s22
    %p31 = scmp.eq.s32.totalorder %s14, 1
    %p32 = por %p30, %p31
    %p33 = scmp.ne.s32.totalorder %s22, %s23
    %p34 = scmp.eq.s32.totalorder %s14, 0
    %p35 = por %p33, %p34
    %p36 = scmp.ne.s32.totalorder %s22, %s23
    %p37 = scmp.eq.s32.totalorder %s15, 1
    %p38 = por %p36, %p37
    %p40 = scmp.ne.s32.totalorder %s23, %s39
    %p41 = scmp.eq.s32.totalorder %s15, 0
    %p42 = por %p40, %p41
    %s44 = sadd.s32 %s43, 1
    %p47 = scmp.eq.s32.totalorder %s9, 1
    %p48 = scmp.ne.s32.totalorder %s43, %s45
    %p49 = scmp.eq.s32.totalorder %s9, 0
    %p50 = por %p48, %p49
    %p51 = scmp.ne.s32.totalorder %s43, %s45
    %p52 = scmp.eq.s32.totalorder %s14, 1
    %p53 = por %p51, %p52
    %p54 = scmp.ne.s32.totalorder %s45, %s46
    %p55 = scmp.eq.s32.totalorder %s14, 0
    %p56 = por %p54, %p55
    %p57 = scmp.ne.s32.totalorder %s45, %s46
    %p58 = scmp.eq.s32.totalorder %s15, 1
    %p59 = por %p57, %p58
    %p61 = scmp.ne.s32.totalorder %s46, %s60
    %p62 = scmp.eq.s32.totalorder %s15, 0
    %p63 = por %p61, %p62
    %s65 = sadd.s32 %s64, 1
    %p68 = scmp.eq.s32.totalorder %s9, 1
    %p69 = scmp.ne.s32.totalorder %s64, %s66
    %p70 = scmp.eq.s32.totalorder %s9, 0
    %p71 = por %p69, %p70
    %p72 = scmp.ne.s32.totalorder %s64, %s66
    %p73 = scmp.eq.s32.totalorder %s14, 1
    %p74 = por %p72, %p73
    %p75 = scmp.ne.s32.totalorder %s66, %s67
    %p76 = scmp.eq.s32.totalorder %s14, 0
    %p77 = por %p75, %p76
    %p78 = scmp.ne.s32.totalorder %s66, %s67
    %p79 = scmp.eq.s32.totalorder %s15, 1
    %p80 = por %p78, %p79
    %p82 = scmp.ne.s32.totalorder %s67, %s81
    %p83 = scmp.eq.s32.totalorder %s15, 0
    %p84 = por %p82, %p83
    %s85 = ssub.s32 %s9, %s16
    %p86 = scmp.eq.s32.totalorder %s85, 0
    %s88 = sadd.s32 %s87, 1
    %s89 = scalar_select %p86, %s87, %s88
    %p92 = pneg %p86
    %p93 = scmp.eq.s32.totalorder %s9, 1
    %p94 = por %p92, %p93
    %p95 = scmp.ne.s32.totalorder %s87, %s90
    %p96 = scmp.eq.s32.totalorder %s9, 0
    %p97 = por %p95, %p96
    %p98 = scmp.ne.s32.totalorder %s87, %s90
    %p99 = scmp.eq.s32.totalorder %s14, 1
    %p100 = por %p98, %p99
    %p101 = scmp.ne.s32.totalorder %s90, %s91
    %p102 = scmp.eq.s32.totalorder %s14, 0
    %p103 = por %p101, %p102
    %p104 = scmp.ne.s32.totalorder %s90, %s91
    %p105 = scmp.eq.s32.totalorder %s15, 1
    %p106 = por %p104, %p105
    %p108 = scmp.ne.s32.totalorder %s91, %s107
    %p109 = scmp.eq.s32.totalorder %s15, 0
    %p110 = por %p108, %p109
    %p111 = scmp.le.s32.totalorder 1, %s9
    %p112 = scmp.lt.s32.totalorder %s9, 3
    %p113 = pnand %p111, %p112
    %p114 = pneg %p113
    // Predicated region
    $region9: #{_lambda_.8} parent=5 // pred_check
      _
    $region10: #{_lambda_.8} parent=5 // pred_check_branch
      %116 = sbr.rel (%p113) target = $region12
    $region11: #{_lambda_.8} parent=5 // pred_region
      %s117 = ssub.s32 %s9, 1
      // Predicated region
      $region13: #{_lambda_.8} parent=11 // pred_check
        %p118 = pneg %p56
      $region14: #{_lambda_.8} parent=11 // pred_check_branch
        %120 = sbr.rel (%p118) target = $region16
      $region15: #{_lambda_.8} parent=11 // pred_region
        _
      $region16: #{_lambda_.8} parent=11 // pred_fallthru
        _
      // Predicated region
      $region17: #{_lambda_.8} parent=11 // pred_check
        %p121 = pneg %p77
      $region18: #{_lambda_.8} parent=11 // pred_check_branch
        %123 = sbr.rel (%p121) target = $region20
      $region19: #{_lambda_.8} parent=11 // pred_region
        _
      $region20: #{_lambda_.8} parent=11 // pred_fallthru
        _
    $region12: #{_lambda_.8} parent=5 // pred_fallthru
      _
    %p124 = scmp.lt.s32.totalorder %s9, 2
    // Predicated region
    $region21: #{_lambda_.8} parent=5 // pred_check
      %p125 = pneg %p124
    $region22: #{_lambda_.8} parent=5 // pred_check_branch
      %127 = sbr.rel (%p125) target = $region24
    $region23: #{_lambda_.8} parent=5 // pred_region
      // Predicated region
      $region25: #{_lambda_.8} parent=23 // pred_check
        %p128 = pneg %p29
      $region26: #{_lambda_.8} parent=23 // pred_check_branch
        %130 = sbr.rel (%p128) target = $region28
      $region27: #{_lambda_.8} parent=23 // pred_region
        %s131 = smul.u32 4, %s9
        %p132 = scmp.lt.s32.totalorder %s131, 7
        %s133 = scalar_select %p132, %s131, 7
        %s134 = smul.addr %s133, 2
        %s135 = smul.addr %s134, 8
        %s136 = scalar_lea.vmem %s0, %s135
        %s137 = smul.u32 4, %s9
      $region28: #{_lambda_.8} parent=23 // pred_fallthru
        _
    $region24: #{_lambda_.8} parent=5 // pred_fallthru
      _
    %p138 = scmp.le.s32.totalorder 1, %s9
    %p139 = scmp.lt.s32.totalorder %s9, 3
    %p140 = pnand %p138, %p139
    %p141 = pneg %p140
    // Predicated region
    $region29: #{_lambda_.8} parent=5 // pred_check
      _
    $region30: #{_lambda_.8} parent=5 // pred_check_branch
      %143 = sbr.rel (%p140) target = $region32
    $region31: #{_lambda_.8} parent=5 // pred_region
      %s144 = ssub.s32 %s9, 1
      %s145 = smul.u32 4, %s14
      %p146 = scmp.lt.s32.totalorder %s145, 7
      %s147 = scalar_select %p146, %s145, 7
      %s148 = smul.addr %s147, 2
      %s149 = smul.addr %s148, 8
      %s150 = scalar_lea.vmem %s0, %s149
      %p151 = pneg %p35
      %p152 = pneg %p32
      %p153 = pneg %p56
      %p154 = pneg %p53
      %p155 = pneg %p77
      %p156 = pneg %p74
      %p157 = pneg %p103
      %p158 = pneg %p100
      %s159 = smul.u32 4, %s14
      %p160 = scmp.lt.s32.totalorder %s159, 7
      %s161 = scalar_select %p160, %s159, 7
      %s162 = smul.addr %s161, 2
      %s163 = scalar_lea.vmem %s3, %s162
      %s164 = smul.u32 4, %s14
      %p165 = scmp.lt.s32.totalorder %s164, 7
      %s166 = scalar_select %p165, %s164, 7
      %s167 = smul.addr %s166, 2
      %s168 = smul.addr %s167, 8
      %s169 = scalar_lea.vmem %s0, %s168
      %s170 = smul.u32 4, %s14
      %s171 = smul.u32 4, %s14
      %p172 = scmp.lt.s32.totalorder %s171, 7
      %s173 = scalar_select %p172, %s171, 7
      %s174 = smul.addr %s173, 2
      %s175 = scalar_lea.vmem %s3, %s174
      %s176 = smul.u32 4, %s14
      %v177 = vld [vmem:[%s169] sm:$0xff]
      %v178 = vld [vmem:[%s169 + $0x8] sm:$0xff]
      %v179 = vld [vmem:[%s169 + $0x10] sm:$0xff]
      %v180 = vld [vmem:[%s169 + $0x18] sm:$0xff]
      %v181 = vld [vmem:[%s169 + $0x20] sm:$0xff]
      %v182 = vld [vmem:[%s169 + $0x28] sm:$0xff]
      %v183 = vld [vmem:[%s169 + $0x30] sm:$0xff]
      %v184 = vld [vmem:[%s169 + $0x38] sm:$0xff]
      %v185 = vld [vmem:[%s1] sm:$0xff]
      %v186 = vld [vmem:[%s1 + $0x8] sm:$0xff]
      %v187 = vld [vmem:[%s1 + $0x10] sm:$0xff]
      %v188 = vld [vmem:[%s1 + $0x18] sm:$0xff]
      %v189 = vld [vmem:[%s1 + $0x20] sm:$0xff]
      %v190 = vld [vmem:[%s1 + $0x28] sm:$0xff]
      %v191 = vld [vmem:[%s1 + $0x30] sm:$0xff]
      %v192 = vld [vmem:[%s1 + $0x38] sm:$0xff]
      %v193 = vld [vmem:[%s1 + $0x40] sm:$0xff]
      %v194 = vld [vmem:[%s1 + $0x48] sm:$0xff]
      %v195 = vld [vmem:[%s1 + $0x50] sm:$0xff]
      %v196 = vld [vmem:[%s1 + $0x58] sm:$0xff]
      %v197 = vld [vmem:[%s1 + $0x60] sm:$0xff]
      %v198 = vld [vmem:[%s1 + $0x68] sm:$0xff]
      %v199 = vld [vmem:[%s1 + $0x70] sm:$0xff]
      %v200 = vld [vmem:[%s1 + $0x78] sm:$0xff]
      %v201 = vld [vmem:[%s1 + $0x80] sm:$0xff]
      %v202 = vld [vmem:[%s1 + $0x88] sm:$0xff]
      %v203 = vld [vmem:[%s1 + $0x90] sm:$0xff]
      %v204 = vld [vmem:[%s1 + $0x98] sm:$0xff]
      %v205 = vld [vmem:[%s1 + $0xa0] sm:$0xff]
      %v206 = vld [vmem:[%s1 + $0xa8] sm:$0xff]
      %v207 = vld [vmem:[%s1 + $0xb0] sm:$0xff]
      %v208 = vld [vmem:[%s1 + $0xb8] sm:$0xff]
      %v209 = vld [vmem:[%s1 + $0xc0] sm:$0xff]
      %v210 = vld [vmem:[%s1 + $0xc8] sm:$0xff]
      %v211 = vld [vmem:[%s1 + $0xd0] sm:$0xff]
      %v212 = vld [vmem:[%s1 + $0xd8] sm:$0xff]
      %v213 = vld [vmem:[%s1 + $0xe0] sm:$0xff]
      %v214 = vld [vmem:[%s1 + $0xe8] sm:$0xff]
      %v215 = vld [vmem:[%s1 + $0xf0] sm:$0xff]
      %v216 = vld [vmem:[%s1 + $0xf8] sm:$0xff]
      %v217 = vld [vmem:[%s1 + $0x100] sm:$0xff]
      %v218 = vld [vmem:[%s1 + $0x108] sm:$0xff]
      %v219 = vld [vmem:[%s1 + $0x110] sm:$0xff]
      %v220 = vld [vmem:[%s1 + $0x118] sm:$0xff]
      %v221 = vld [vmem:[%s1 + $0x120] sm:$0xff]
      %v222 = vld [vmem:[%s1 + $0x128] sm:$0xff]
      %v223 = vld [vmem:[%s1 + $0x130] sm:$0xff]
      %v224 = vld [vmem:[%s1 + $0x138] sm:$0xff]
      %vm229 = vcmask 1046528
      %v230 = vrot.slane %v177, 1
      %v231 = vrot.slane %v179, 1
      %v232 = vsel %vm229, %v230, %v231
      %v233 = vrot.slane %v181, 1
      %v234 = vsel %vm229, %v231, %v233
      %v235 = vrot.slane %v183, 1
      %v236 = vsel %vm229, %v233, %v235
      %241 = vmatprep.subr.mxu0 0.0
      %242 = vmatpush1.msra.mxu0 %v209
      %243 = vmatprep.subr.mxu0 0.0
      %244 = vmatpush1.msra.mxu0 %v210
      %245 = vmatprep.subr.mxu0 0.0
      %246 = vmatpush1.msra.mxu0 %v211
      %247 = vmatprep.subr.mxu0 0.0
      %248 = vmatpush1.msra.mxu0 %v212
      %249 = vmatprep.subr.mxu0 0.0
      %250 = vmatpush1.msra.mxu0 %v213
      %251 = vmatprep.subr.mxu0 0.0
      %252 = vmatpush1.msra.mxu0 %v214
      %253 = vmatprep.subr.mxu0 0.0
      %254 = vmatpush1.msra.mxu0 %v215
      %255 = vmatprep.subr.mxu0 0.0
      %256 = vmatpush1.msra.mxu0 %v216
      %257 = vmatprep.subr.mxu0 0.0
      %258 = vmatpush1.msra.mxu0 %v217
      %259 = vmatprep.subr.mxu0 0.0
      %260 = vmatpush1.msra.mxu0 %v218
      %261 = vmatprep.subr.mxu0 0.0
      %262 = vmatpush1.msra.mxu0 %v219
      %263 = vmatprep.subr.mxu0 0.0
      %264 = vmatpush1.msra.mxu0 %v220
      %265 = vmatprep.subr.mxu0 0.0
      %266 = vmatpush1.msra.mxu0 %v221
      %267 = vmatprep.subr.mxu0 0.0
      %268 = vmatpush1.msra.mxu0 %v222
      %269 = vmatprep.subr.mxu0 0.0
      %270 = vmatpush1.msra.mxu0 %v223
      %271 = vmatprep.subr.mxu0 0.0
      %272 = vmatpush1.msra.mxu0 %v224
      %273 = vmatprep.subr.mxu0 0.0
      %274 = vmatpush1.msra.mxu0 0.0
      %275 = vmatprep.subr.mxu0 0.0
      %276 = vmatpush1.msra.mxu0 0.0
      %277 = vmatprep.subr.mxu0 0.0
      %278 = vmatpush1.msra.mxu0 0.0
      %279 = vmatprep.subr.mxu0 0.0
      %280 = vmatpush1.msra.mxu0 0.0
      %281 = vmatprep.subr.mxu0 0.0
      %282 = vmatpush1.msra.mxu0 0.0
      %283 = vmatprep.subr.mxu0 0.0
      %284 = vmatpush1.msra.mxu0 0.0
      %285 = vmatprep.subr.mxu0 0.0
      %286 = vmatpush1.msra.mxu0 0.0
      %287 = vmatprep.subr.mxu0 0.0
      %288 = vmatpush1.msra.mxu0 0.0
      %289 = vmatprep.subr.mxu0 0.0
      %290 = vmatpush1.msra.mxu0 0.0
      %291 = vmatprep.subr.mxu0 0.0
      %292 = vmatpush1.msra.mxu0 0.0
      %293 = vmatprep.subr.mxu0 0.0
      %294 = vmatpush1.msra.mxu0 0.0
      %295 = vmatprep.subr.mxu0 0.0
      %296 = vmatpush1.msra.mxu0 0.0
      %297 = vmatprep.subr.mxu0 0.0
      %298 = vmatpush1.msra.mxu0 0.0
      %299 = vmatprep.subr.mxu0 0.0
      %300 = vmatpush1.msra.mxu0 0.0
      %301 = vmatprep.subr.mxu0 0.0
      %302 = vmatpush1.msra.mxu0 0.0
      %303 = vmatprep.subr.mxu0 0.0
      %304 = vmatpush1.msra.mxu0 0.0
      %305 = vmatprep.mubr.f32.mxu0 0.0
      %306 = vmatmul.mubr.f32.gmra.mrb[0].mxu0 %v232
      %v307 = vpop.f32.mrb[0].mxu0
      %v308 = vadd.f32 0.0, %v307
      %v309 = vpop.f32.mrb[0].mxu0
      %310 = vmatprep.mubr.f32.mxu0 0.0
      %311 = vmatmul.mubr.f32.gmra.mrb[0].mxu0 %v234
      %v312 = vpop.f32.mrb[0].mxu0
      %v313 = vadd.f32 0.0, %v312
      %v314 = vpop.f32.mrb[0].mxu0
      %315 = vmatprep.mubr.f32.mxu0 0.0
      %316 = vmatmul.mubr.f32.gmra.mrb[0].mxu0 %v236
      %v317 = vpop.f32.mrb[0].mxu0
      %v318 = vadd.f32 0.0, %v317
      %v319 = vpop.f32.mrb[0].mxu0
      %320 = vmatprep.mubr.f32.mxu0 0.0
      %321 = vmatmul.mubr.f32.gmra.mrb[0].mxu0 %v235
      %v322 = vpop.f32.mrb[0].mxu0
      %v323 = vadd.f32 0.0, %v322
      %v324 = vpop.f32.mrb[0].mxu0
      %325 = vdwg.mxu0
      %vm326 = vcmask 523264
      %v328 = vsel %vm326, %v178, 0
      %v331 = vsel %vm326, %v180, 0
      %v334 = vsel %vm326, %v182, 0
      %v337 = vsel %vm326, %v184, 0
      %339 = vmatprep.subr.mxu0 0.0
      %340 = vmatpush1.msra.mxu0 %v185
      %341 = vmatprep.subr.mxu0 0.0
      %342 = vmatpush1.msra.mxu0 %v186
      %343 = vmatprep.subr.mxu0 0.0
      %344 = vmatpush1.msra.mxu0 %v187
      %345 = vmatprep.subr.mxu0 0.0
      %346 = vmatpush1.msra.mxu0 %v188
      %347 = vmatprep.subr.mxu0 0.0
      %348 = vmatpush1.msra.mxu0 %v189
      %349 = vmatprep.subr.mxu0 0.0
      %350 = vmatpush1.msra.mxu0 %v190
      %351 = vmatprep.subr.mxu0 0.0
      %352 = vmatpush1.msra.mxu0 %v191
      %353 = vmatprep.subr.mxu0 0.0
      %354 = vmatpush1.msra.mxu0 %v192
      %355 = vmatprep.subr.mxu0 0.0
      %356 = vmatpush1.msra.mxu0 %v193
      %357 = vmatprep.subr.mxu0 0.0
      %358 = vmatpush1.msra.mxu0 %v194
      %359 = vmatprep.subr.mxu0 0.0
      %360 = vmatpush1.msra.mxu0 %v195
      %361 = vmatprep.subr.mxu0 0.0
      %362 = vmatpush1.msra.mxu0 %v196
      %363 = vmatprep.subr.mxu0 0.0
      %364 = vmatpush1.msra.mxu0 %v197
      %365 = vmatprep.subr.mxu0 0.0
      %366 = vmatpush1.msra.mxu0 %v198
      %367 = vmatprep.subr.mxu0 0.0
      %368 = vmatpush1.msra.mxu0 %v199
      %369 = vmatprep.subr.mxu0 0.0
      %370 = vmatpush1.msra.mxu0 %v200
      %371 = vmatprep.subr.mxu0 0.0
      %372 = vmatpush1.msra.mxu0 %v201
      %373 = vmatprep.subr.mxu0 0.0
      %374 = vmatpush1.msra.mxu0 %v202
      %375 = vmatprep.subr.mxu0 0.0
      %376 = vmatpush1.msra.mxu0 %v203
      %377 = vmatprep.subr.mxu0 0.0
      %378 = vmatpush1.msra.mxu0 %v204
      %379 = vmatprep.subr.mxu0 0.0
      %380 = vmatpush1.msra.mxu0 %v205
      %381 = vmatprep.subr.mxu0 0.0
      %382 = vmatpush1.msra.mxu0 %v206
      %383 = vmatprep.subr.mxu0 0.0
      %384 = vmatpush1.msra.mxu0 %v207
      %385 = vmatprep.subr.mxu0 0.0
      %386 = vmatpush1.msra.mxu0 %v208
      %387 = vmatprep.subr.mxu0 0.0
      %388 = vmatpush1.msra.mxu0 0.0
      %389 = vmatprep.subr.mxu0 0.0
      %390 = vmatpush1.msra.mxu0 0.0
      %391 = vmatprep.subr.mxu0 0.0
      %392 = vmatpush1.msra.mxu0 0.0
      %393 = vmatprep.subr.mxu0 0.0
      %394 = vmatpush1.msra.mxu0 0.0
      %395 = vmatprep.subr.mxu0 0.0
      %396 = vmatpush1.msra.mxu0 0.0
      %397 = vmatprep.subr.mxu0 0.0
      %398 = vmatpush1.msra.mxu0 0.0
      %399 = vmatprep.subr.mxu0 0.0
      %400 = vmatpush1.msra.mxu0 0.0
      %401 = vmatprep.subr.mxu0 0.0
      %402 = vmatpush1.msra.mxu0 0.0
      %403 = vmatprep.mubr.f32.mxu0 %v328
      %404 = vmatmul.mubr.f32.gmra.mrb[0].mxu0 %v177
      %v405 = vpop.f32.mrb[0].mxu0
      %v406 = vadd.f32 %v308, %v405
      %v407 = vpop.f32.mrb[0].mxu0
      %408 = vmatprep.mubr.f32.mxu0 %v331
      %409 = vmatmul.mubr.f32.gmra.mrb[0].mxu0 %v179
      %v410 = vpop.f32.mrb[0].mxu0
      %v411 = vadd.f32 %v313, %v410
      %v412 = vpop.f32.mrb[0].mxu0
      %413 = vmatprep.mubr.f32.mxu0 %v334
      %414 = vmatmul.mubr.f32.gmra.mrb[0].mxu0 %v181
      %v415 = vpop.f32.mrb[0].mxu0
      %v416 = vadd.f32 %v318, %v415
      %v417 = vpop.f32.mrb[0].mxu0
      %418 = vmatprep.mubr.f32.mxu0 %v337
      %419 = vmatmul.mubr.f32.gmra.mrb[0].mxu0 %v183
      %v420 = vpop.f32.mrb[0].mxu0
      %v421 = vadd.f32 %v323, %v420
      %v422 = vpop.f32.mrb[0].mxu0
      %423 = vdwg.mxu0
      %v424 = vld [vmem:[%s2] sm:$0x1]
      %v426 = vlaneseq
      %v427 = vshrl.u32 %v426, 7
      %v428 = vsub.s32 0, %v427
      %v429 = vrot.slane %v424, %v428
      %v431 = vadd.f32 %v406, %v429
      %v432 = vadd.f32 %v411, %v429
      %v433 = vadd.f32 %v416, %v429
      %v434 = vadd.f32 %v421, %v429
      %vm435 = vcmp.ge.f32.partialorder %v431, 0.0
      %vm436 = vcmp.ge.f32.partialorder %v432, 0.0
      %vm437 = vcmp.ge.f32.partialorder %v433, 0.0
      %vm438 = vcmp.ge.f32.partialorder %v434, 0.0
      %v439 = vmul.f32 %v431, 0.1
      %v440 = vmul.f32 %v432, 0.1
      %v441 = vmul.f32 %v433, 0.1
      %v442 = vmul.f32 %v434, 0.1
      %v443 = vsel %vm435, %v431, %v439
      %v444 = vsel %vm436, %v432, %v440
      %v445 = vsel %vm437, %v433, %v441
      %v446 = vsel %vm438, %v434, %v442
      %vm447 = vcmask 517120
      %448 = vst.msk [vmem:[%s175] sm:$0x3] %vm447, %v443
      %s449 = scalar_lea.vmem %s175, 2
      %450 = vst.msk [vmem:[%s449] sm:$0x3] %vm447, %v444
      %s451 = scalar_lea.vmem %s175, 4
      %452 = vst.msk [vmem:[%s451] sm:$0x3] %vm447, %v445
      %s453 = scalar_lea.vmem %s175, 6
      %454 = vst.msk [vmem:[%s453] sm:$0x3] %vm447, %v446
      %s455 = smul.u32 4, %s14
      %p456 = scmp.lt.s32.totalorder %s455, 7
      %s457 = scalar_select %p456, %s455, 7
      %s458 = smul.addr %s457, 2
      %s459 = scalar_lea.vmem %s3, %s458
      // Predicated region
      $region33: #{_lambda_.8} parent=31 // pred_check
        %p460 = pneg %p100
      $region34: #{_lambda_.8} parent=31 // pred_check_branch
        %462 = sbr.rel (%p460) target = $region36
      $region35: #{_lambda_.8} parent=31 // pred_region
        %s463 = smul.u32 4, %s14
      $region36: #{_lambda_.8} parent=31 // pred_fallthru
        _
    $region32: #{_lambda_.8} parent=5 // pred_fallthru
      _
    %p464 = scmp.le.s32.totalorder 2, %s9
    // Predicated region
    $region37: #{_lambda_.8} parent=5 // pred_check
      %p465 = pneg %p464
    $region38: #{_lambda_.8} parent=5 // pred_check_branch
      %467 = sbr.rel (%p465) target = $region40
    $region39: #{_lambda_.8} parent=5 // pred_region
      %s468 = ssub.s32 %s9, 2
      // Predicated region
      $region41: #{_lambda_.8} parent=39 // pred_check
        %p469 = pneg %p106
      $region42: #{_lambda_.8} parent=39 // pred_check_branch
        %471 = sbr.rel (%p469) target = $region44
      $region43: #{_lambda_.8} parent=39 // pred_region
        %s472 = smul.u32 4, %s15
        %p473 = scmp.lt.s32.totalorder %s472, 7
        %s474 = scalar_select %p473, %s472, 7
        %s475 = smul.addr %s474, 2
        %s476 = scalar_lea.vmem %s3, %s475
      $region44: #{_lambda_.8} parent=39 // pred_fallthru
        _
    $region40: #{_lambda_.8} parent=5 // pred_fallthru
      _
  $region6: #{_lambda_.8} parent=0 // loop_footer
    %s13 = sadd.s32 1, %s9
  $region7: #{_lambda_.8} parent=0 // loop_footer_branch
    %8 = sbr.rel target = $region3
  $region8: #{_lambda_.8} parent=0 // loop_exit
    _

// kernel: _lambda_.11
$region0: #{_lambda_.11}
  #allocation0 [shape = 'u32[]', space=smem, size = 0x4, offset = 0x4, fixed_abs, tag = 'smem constant byte address 0x4 - core index']
  #allocation1 [shape = 'u32[144,128]{1,0:T(1,128)}', space=vmem, size = 0x12000, scoped, tag = 'internal scratch']
  #allocation2 [shape = 'f32[1,1]{1,0:T(1,128)S(1)}', space=vmem, size = 0x200, scoped, tag = 'scoped memory for _lambda_.11']
  %s0 = inlined_call_operand.vmem [shape: f32[64,64], index: 0, kind: input, shape index: {}]
  %s1 = inlined_call_operand.vmem [shape: f32[192,1], index: 1, kind: input, shape index: {}]
  %s2 = inlined_call_operand.<no memory space> [shape: f32[1,1], index: 2, kind: input, shape index: {}]
  %s3 = inlined_call_operand.vmem [shape: f32[8,1,1], index: 3, kind: output, shape index: {}]
  %s4 = sld [smem:[#allocation0]]
  $region45: #{_lambda_.11} parent=0
    _
  %s6 = ssub.s32 1, %s4
  %s7 = scalar_select 0, %s6, %s4
  %v8 = vstv %s2
  %9 = vst [vmem:[#allocation2] sm:$0x1] %v8
  loop: start=0, step=1, limit=4
  $region2: #{_lambda_.11} parent=0 // loop_pre_header
    _
  $region3: #{_lambda_.11} parent=0 // loop_header
    %s11 = sphi 0, %s15
    %p12 = scmp.ge.s32.totalorder %s11, 4
    %s21 = sphi 0, %s23
    %s24 = sphi 0, %s21
    %s25 = sphi 0, %s24
    %s41 = sphi 0, %s25
    %s45 = sphi 0, %s45
    %s47 = sphi 0, %s45
    %s48 = sphi 0, %s47
    %s62 = sphi 0, %s48
    %s66 = sphi 0, %s66
    %s68 = sphi 0, %s66
    %s69 = sphi 0, %s68
    %s83 = sphi 0, %s69
    %s89 = sphi 0, %s91
    %s92 = sphi 0, %s89
    %s93 = sphi 0, %s92
    %s109 = sphi 0, %s93
  $region4: #{_lambda_.11} parent=0 // loop_header_branch
    %14 = sbr.rel (%p12) target = $region8
  $region5: #{_lambda_.11} parent=0 // loop_body
    %s16 = ssub.s32 %s11, 1
    %s17 = ssub.s32 %s11, 2
    %s18 = sadd.s32 %s11, 1
    %s19 = ssub.s32 %s11, %s18
    %p20 = scmp.eq.s32.totalorder %s19, 0
    %s22 = sadd.s32 %s21, 1
    %s23 = scalar_select %p20, %s21, %s22
    %p26 = pneg %p20
    %p27 = scmp.eq.s32.totalorder %s11, 1
    %p28 = por %p26, %p27
    %p29 = scmp.ne.s32.totalorder %s21, %s24
    %p30 = scmp.eq.s32.totalorder %s11, 0
    %p31 = por %p29, %p30
    %p32 = scmp.ne.s32.totalorder %s21, %s24
    %p33 = scmp.eq.s32.totalorder %s16, 1
    %p34 = por %p32, %p33
    %p35 = scmp.ne.s32.totalorder %s24, %s25
    %p36 = scmp.eq.s32.totalorder %s16, 0
    %p37 = por %p35, %p36
    %p38 = scmp.ne.s32.totalorder %s24, %s25
    %p39 = scmp.eq.s32.totalorder %s17, 1
    %p40 = por %p38, %p39
    %p42 = scmp.ne.s32.totalorder %s25, %s41
    %p43 = scmp.eq.s32.totalorder %s17, 0
    %p44 = por %p42, %p43
    %s46 = sadd.s32 %s45, 1
    %p49 = scmp.eq.s32.totalorder %s11, 1
    %p50 = scmp.ne.s32.totalorder %s45, %s47
    %p51 = scmp.eq.s32.totalorder %s11, 0
    %p52 = por %p50, %p51
    %p53 = scmp.ne.s32.totalorder %s45, %s47
    %p54 = scmp.eq.s32.totalorder %s16, 1
    %p55 = por %p53, %p54
    %p56 = scmp.ne.s32.totalorder %s47, %s48
    %p57 = scmp.eq.s32.totalorder %s16, 0
    %p58 = por %p56, %p57
    %p59 = scmp.ne.s32.totalorder %s47, %s48
    %p60 = scmp.eq.s32.totalorder %s17, 1
    %p61 = por %p59, %p60
    %p63 = scmp.ne.s32.totalorder %s48, %s62
    %p64 = scmp.eq.s32.totalorder %s17, 0
    %p65 = por %p63, %p64
    %s67 = sadd.s32 %s66, 1
    %p70 = scmp.eq.s32.totalorder %s11, 1
    %p71 = scmp.ne.s32.totalorder %s66, %s68
    %p72 = scmp.eq.s32.totalorder %s11, 0
    %p73 = por %p71, %p72
    %p74 = scmp.ne.s32.totalorder %s66, %s68
    %p75 = scmp.eq.s32.totalorder %s16, 1
    %p76 = por %p74, %p75
    %p77 = scmp.ne.s32.totalorder %s68, %s69
    %p78 = scmp.eq.s32.totalorder %s16, 0
    %p79 = por %p77, %p78
    %p80 = scmp.ne.s32.totalorder %s68, %s69
    %p81 = scmp.eq.s32.totalorder %s17, 1
    %p82 = por %p80, %p81
    %p84 = scmp.ne.s32.totalorder %s69, %s83
    %p85 = scmp.eq.s32.totalorder %s17, 0
    %p86 = por %p84, %p85
    %s87 = ssub.s32 %s11, %s18
    %p88 = scmp.eq.s32.totalorder %s87, 0
    %s90 = sadd.s32 %s89, 1
    %s91 = scalar_select %p88, %s89, %s90
    %p94 = pneg %p88
    %p95 = scmp.eq.s32.totalorder %s11, 1
    %p96 = por %p94, %p95
    %p97 = scmp.ne.s32.totalorder %s89, %s92
    %p98 = scmp.eq.s32.totalorder %s11, 0
    %p99 = por %p97, %p98
    %p100 = scmp.ne.s32.totalorder %s89, %s92
    %p101 = scmp.eq.s32.totalorder %s16, 1
    %p102 = por %p100, %p101
    %p103 = scmp.ne.s32.totalorder %s92, %s93
    %p104 = scmp.eq.s32.totalorder %s16, 0
    %p105 = por %p103, %p104
    %p106 = scmp.ne.s32.totalorder %s92, %s93
    %p107 = scmp.eq.s32.totalorder %s17, 1
    %p108 = por %p106, %p107
    %p110 = scmp.ne.s32.totalorder %s93, %s109
    %p111 = scmp.eq.s32.totalorder %s17, 0
    %p112 = por %p110, %p111
    %p113 = scmp.le.s32.totalorder 1, %s11
    %p114 = scmp.lt.s32.totalorder %s11, 3
    %p115 = pnand %p113, %p114
    %p116 = pneg %p115
    // Predicated region
    $region9: #{_lambda_.11} parent=5 // pred_check
      _
    $region10: #{_lambda_.11} parent=5 // pred_check_branch
      %118 = sbr.rel (%p115) target = $region12
    $region11: #{_lambda_.11} parent=5 // pred_region
      %s119 = ssub.s32 %s11, 1
      // Predicated region
      $region13: #{_lambda_.11} parent=11 // pred_check
        %p120 = pneg %p58
      $region14: #{_lambda_.11} parent=11 // pred_check_branch
        %122 = sbr.rel (%p120) target = $region16
      $region15: #{_lambda_.11} parent=11 // pred_region
        _
      $region16: #{_lambda_.11} parent=11 // pred_fallthru
        _
      // Predicated region
      $region17: #{_lambda_.11} parent=11 // pred_check
        %p123 = pneg %p79
      $region18: #{_lambda_.11} parent=11 // pred_check_branch
        %125 = sbr.rel (%p123) target = $region20
      $region19: #{_lambda_.11} parent=11 // pred_region
        _
      $region20: #{_lambda_.11} parent=11 // pred_fallthru
        _
    $region12: #{_lambda_.11} parent=5 // pred_fallthru
      _
    %p126 = scmp.lt.s32.totalorder %s11, 2
    // Predicated region
    $region21: #{_lambda_.11} parent=5 // pred_check
      %p127 = pneg %p126
    $region22: #{_lambda_.11} parent=5 // pred_check_branch
      %129 = sbr.rel (%p127) target = $region24
    $region23: #{_lambda_.11} parent=5 // pred_region
      // Predicated region
      $region25: #{_lambda_.11} parent=23 // pred_check
        %p130 = pneg %p31
      $region26: #{_lambda_.11} parent=23 // pred_check_branch
        %132 = sbr.rel (%p130) target = $region28
      $region27: #{_lambda_.11} parent=23 // pred_region
        %s133 = smul.u32 4, %s11
        %p134 = scmp.lt.s32.totalorder %s133, 7
        %s135 = scalar_select %p134, %s133, 7
        %s136 = smul.addr %s135, 8
        %s137 = scalar_lea.vmem %s0, %s136
        %s138 = smul.u32 4, %s11
      $region28: #{_lambda_.11} parent=23 // pred_fallthru
        _
    $region24: #{_lambda_.11} parent=5 // pred_fallthru
      _
    %p139 = scmp.le.s32.totalorder 1, %s11
    %p140 = scmp.lt.s32.totalorder %s11, 3
    %p141 = pnand %p139, %p140
    %p142 = pneg %p141
    // Predicated region
    $region29: #{_lambda_.11} parent=5 // pred_check
      _
    $region30: #{_lambda_.11} parent=5 // pred_check_branch
      %144 = sbr.rel (%p141) target = $region32
    $region31: #{_lambda_.11} parent=5 // pred_region
      %s145 = ssub.s32 %s11, 1
      %s146 = smul.u32 4, %s16
      %p147 = scmp.lt.s32.totalorder %s146, 7
      %s148 = scalar_select %p147, %s146, 7
      %s149 = smul.addr %s148, 8
      %s150 = scalar_lea.vmem %s0, %s149
      %p151 = pneg %p37
      %p152 = pneg %p34
      %p153 = pneg %p58
      %p154 = pneg %p55
      %p155 = pneg %p79
      %p156 = pneg %p76
      %p157 = pneg %p105
      %p158 = pneg %p102
      %s159 = smul.u32 4, %s16
      %p160 = scmp.lt.s32.totalorder %s159, 7
      %s161 = scalar_select %p160, %s159, 7
      %s162 = scalar_lea.vmem %s3, %s161
      %s163 = smul.u32 4, %s16
      %p164 = scmp.lt.s32.totalorder %s163, 7
      %s165 = scalar_select %p164, %s163, 7
      %s166 = smul.addr %s165, 8
      %s167 = scalar_lea.vmem %s0, %s166
      %s168 = smul.u32 4, %s16
      %s169 = smul.u32 4, %s16
      %p170 = scmp.lt.s32.totalorder %s169, 7
      %s171 = scalar_select %p170, %s169, 7
      %s172 = scalar_lea.vmem %s3, %s171
      %s173 = smul.u32 4, %s16
      %v174 = vld [vmem:[%s167] sm:$0xff]
      %v175 = vld [vmem:[%s167 + $0x8] sm:$0xff]
      %v176 = vld [vmem:[%s167 + $0x10] sm:$0xff]
      %v177 = vld [vmem:[%s167 + $0x18] sm:$0xff]
      %v178 = vld [vmem:[%s1] sm:$0xff]
      %v179 = vld [vmem:[%s1 + $0x8] sm:$0xff]
      %v180 = vld [vmem:[%s1 + $0x10] sm:$0xff]
      %v181 = vld [vmem:[%s1 + $0x18] sm:$0xff]
      %v182 = vld [vmem:[%s1 + $0x20] sm:$0xff]
      %v183 = vld [vmem:[%s1 + $0x28] sm:$0xff]
      %v184 = vld [vmem:[%s1 + $0x30] sm:$0xff]
      %v185 = vld [vmem:[%s1 + $0x38] sm:$0xff]
      %v186 = vld [vmem:[%s1 + $0x40] sm:$0xff]
      %v187 = vld [vmem:[%s1 + $0x48] sm:$0xff]
      %v188 = vld [vmem:[%s1 + $0x50] sm:$0xff]
      %v189 = vld [vmem:[%s1 + $0x58] sm:$0xff]
      %v190 = vld [vmem:[%s1 + $0x60] sm:$0xff]
      %v191 = vld [vmem:[%s1 + $0x68] sm:$0xff]
      %v192 = vld [vmem:[%s1 + $0x70] sm:$0xff]
      %v193 = vld [vmem:[%s1 + $0x78] sm:$0xff]
      %v194 = vld [vmem:[%s1 + $0x80] sm:$0xff]
      %v195 = vld [vmem:[%s1 + $0x88] sm:$0xff]
      %v196 = vld [vmem:[%s1 + $0x90] sm:$0xff]
      %v197 = vld [vmem:[%s1 + $0x98] sm:$0xff]
      %v198 = vld [vmem:[%s1 + $0xa0] sm:$0xff]
      %v199 = vld [vmem:[%s1 + $0xa8] sm:$0xff]
      %v200 = vld [vmem:[%s1 + $0xb0] sm:$0xff]
      %v201 = vld [vmem:[%s1 + $0xb8] sm:$0xff]
      %vm206 = vcmask 1046528
      %v207 = vrot.slane %v174, 1
      %v208 = vrot.slane %v175, 1
      %v209 = vsel %vm206, %v207, %v208
      %v210 = vrot.slane %v176, 1
      %v211 = vsel %vm206, %v208, %v210
      %v212 = vrot.slane %v177, 1
      %v213 = vsel %vm206, %v210, %v212
      %vm214 = vcmask 523264
      %v215 = vsel %vm214, %v209, 0
      %v217 = vsel %vm214, %v211, 0
      %v219 = vsel %vm214, %v213, 0
      %v221 = vsel %vm214, %v212, 0
      %223 = vmatprep.subr.mxu0 0.0
      %224 = vmatpush1.msra.mxu0 %v186
      %225 = vmatprep.subr.mxu0 0.0
      %226 = vmatpush1.msra.mxu0 %v187
      %227 = vmatprep.subr.mxu0 0.0
      %228 = vmatpush1.msra.mxu0 %v188
      %229 = vmatprep.subr.mxu0 0.0
      %230 = vmatpush1.msra.mxu0 %v189
      %231 = vmatprep.subr.mxu0 0.0
      %232 = vmatpush1.msra.mxu0 %v190
      %233 = vmatprep.subr.mxu0 0.0
      %234 = vmatpush1.msra.mxu0 %v191
      %235 = vmatprep.subr.mxu0 0.0
      %236 = vmatpush1.msra.mxu0 %v192
      %237 = vmatprep.subr.mxu0 0.0
      %238 = vmatpush1.msra.mxu0 %v193
      %239 = vmatprep.subr.mxu0 0.0
      %240 = vmatpush1.msra.mxu0 0.0
      %241 = vmatprep.subr.mxu0 0.0
      %242 = vmatpush1.msra.mxu0 0.0
      %243 = vmatprep.subr.mxu0 0.0
      %244 = vmatpush1.msra.mxu0 0.0
      %245 = vmatprep.subr.mxu0 0.0
      %246 = vmatpush1.msra.mxu0 0.0
      %247 = vmatprep.subr.mxu0 0.0
      %248 = vmatpush1.msra.mxu0 0.0
      %249 = vmatprep.subr.mxu0 0.0
      %250 = vmatpush1.msra.mxu0 0.0
      %251 = vmatprep.subr.mxu0 0.0
      %252 = vmatpush1.msra.mxu0 0.0
      %253 = vmatprep.subr.mxu0 0.0
      %254 = vmatpush1.msra.mxu0 0.0
      %255 = vmatprep.subr.mxu0 0.0
      %256 = vmatpush1.msra.mxu0 0.0
      %257 = vmatprep.subr.mxu0 0.0
      %258 = vmatpush1.msra.mxu0 0.0
      %259 = vmatprep.subr.mxu0 0.0
      %260 = vmatpush1.msra.mxu0 0.0
      %261 = vmatprep.subr.mxu0 0.0
      %262 = vmatpush1.msra.mxu0 0.0
      %263 = vmatprep.subr.mxu0 0.0
      %264 = vmatpush1.msra.mxu0 0.0
      %265 = vmatprep.subr.mxu0 0.0
      %266 = vmatpush1.msra.mxu0 0.0
      %267 = vmatprep.subr.mxu0 0.0
      %268 = vmatpush1.msra.mxu0 0.0
      %269 = vmatprep.subr.mxu0 0.0
      %270 = vmatpush1.msra.mxu0 0.0
      %271 = vmatprep.subr.mxu0 0.0
      %272 = vmatpush1.msra.mxu0 0.0
      %273 = vmatprep.subr.mxu0 0.0
      %274 = vmatpush1.msra.mxu0 0.0
      %275 = vmatprep.subr.mxu0 0.0
      %276 = vmatpush1.msra.mxu0 0.0
      %277 = vmatprep.subr.mxu0 0.0
      %278 = vmatpush1.msra.mxu0 0.0
      %279 = vmatprep.subr.mxu0 0.0
      %280 = vmatpush1.msra.mxu0 0.0
      %281 = vmatprep.subr.mxu0 0.0
      %282 = vmatpush1.msra.mxu0 0.0
      %283 = vmatprep.subr.mxu0 0.0
      %284 = vmatpush1.msra.mxu0 0.0
      %285 = vmatprep.subr.mxu0 0.0
      %286 = vmatpush1.msra.mxu0 0.0
      %287 = vmatprep.mubr.f32.mxu0 0.0
      %288 = vmatmul.mubr.f32.gmra.mrb[0].mxu0 %v215
      %v289 = vpop.f32.mrb[0].mxu0
      %v290 = vadd.f32 0.0, %v289
      %v291 = vpop.f32.mrb[0].mxu0
      %292 = vmatprep.mubr.f32.mxu0 0.0
      %293 = vmatmul.mubr.f32.gmra.mrb[0].mxu0 %v217
      %v294 = vpop.f32.mrb[0].mxu0
      %v295 = vadd.f32 0.0, %v294
      %v296 = vpop.f32.mrb[0].mxu0
      %297 = vmatprep.mubr.f32.mxu0 0.0
      %298 = vmatmul.mubr.f32.gmra.mrb[0].mxu0 %v219
      %v299 = vpop.f32.mrb[0].mxu0
      %v300 = vadd.f32 0.0, %v299
      %v301 = vpop.f32.mrb[0].mxu0
      %302 = vmatprep.mubr.f32.mxu0 0.0
      %303 = vmatmul.mubr.f32.gmra.mrb[0].mxu0 %v221
      %v304 = vpop.f32.mrb[0].mxu0
      %v305 = vadd.f32 0.0, %v304
      %v306 = vpop.f32.mrb[0].mxu0
      %307 = vdwg.mxu0
      %v308 = vsel %vm214, %v174, 0
      %v310 = vsel %vm214, %v175, 0
      %v312 = vsel %vm214, %v176, 0
      %v314 = vsel %vm214, %v177, 0
      %316 = vmatprep.subr.mxu0 0.0
      %317 = vmatpush1.msra.mxu0 %v178
      %318 = vmatprep.subr.mxu0 0.0
      %319 = vmatpush1.msra.mxu0 %v179
      %320 = vmatprep.subr.mxu0 0.0
      %321 = vmatpush1.msra.mxu0 %v180
      %322 = vmatprep.subr.mxu0 0.0
      %323 = vmatpush1.msra.mxu0 %v181
      %324 = vmatprep.subr.mxu0 0.0
      %325 = vmatpush1.msra.mxu0 %v182
      %326 = vmatprep.subr.mxu0 0.0
      %327 = vmatpush1.msra.mxu0 %v183
      %328 = vmatprep.subr.mxu0 0.0
      %329 = vmatpush1.msra.mxu0 %v184
      %330 = vmatprep.subr.mxu0 0.0
      %331 = vmatpush1.msra.mxu0 %v185
      %332 = vmatprep.subr.mxu0 0.0
      %333 = vmatpush1.msra.mxu0 0.0
      %334 = vmatprep.subr.mxu0 0.0
      %335 = vmatpush1.msra.mxu0 0.0
      %336 = vmatprep.subr.mxu0 0.0
      %337 = vmatpush1.msra.mxu0 0.0
      %338 = vmatprep.subr.mxu0 0.0
      %339 = vmatpush1.msra.mxu0 0.0
      %340 = vmatprep.subr.mxu0 0.0
      %341 = vmatpush1.msra.mxu0 0.0
      %342 = vmatprep.subr.mxu0 0.0
      %343 = vmatpush1.msra.mxu0 0.0
      %344 = vmatprep.subr.mxu0 0.0
      %345 = vmatpush1.msra.mxu0 0.0
      %346 = vmatprep.subr.mxu0 0.0
      %347 = vmatpush1.msra.mxu0 0.0
      %348 = vmatprep.subr.mxu0 0.0
      %349 = vmatpush1.msra.mxu0 0.0
      %350 = vmatprep.subr.mxu0 0.0
      %351 = vmatpush1.msra.mxu0 0.0
      %352 = vmatprep.subr.mxu0 0.0
      %353 = vmatpush1.msra.mxu0 0.0
      %354 = vmatprep.subr.mxu0 0.0
      %355 = vmatpush1.msra.mxu0 0.0
      %356 = vmatprep.subr.mxu0 0.0
      %357 = vmatpush1.msra.mxu0 0.0
      %358 = vmatprep.subr.mxu0 0.0
      %359 = vmatpush1.msra.mxu0 0.0
      %360 = vmatprep.subr.mxu0 0.0
      %361 = vmatpush1.msra.mxu0 0.0
      %362 = vmatprep.subr.mxu0 0.0
      %363 = vmatpush1.msra.mxu0 0.0
      %364 = vmatprep.subr.mxu0 0.0
      %365 = vmatpush1.msra.mxu0 0.0
      %366 = vmatprep.subr.mxu0 0.0
      %367 = vmatpush1.msra.mxu0 0.0
      %368 = vmatprep.subr.mxu0 0.0
      %369 = vmatpush1.msra.mxu0 0.0
      %370 = vmatprep.subr.mxu0 0.0
      %371 = vmatpush1.msra.mxu0 0.0
      %372 = vmatprep.subr.mxu0 0.0
      %373 = vmatpush1.msra.mxu0 0.0
      %374 = vmatprep.subr.mxu0 0.0
      %375 = vmatpush1.msra.mxu0 0.0
      %376 = vmatprep.subr.mxu0 0.0
      %377 = vmatpush1.msra.mxu0 0.0
      %378 = vmatprep.subr.mxu0 0.0
      %379 = vmatpush1.msra.mxu0 0.0
      %380 = vmatprep.mubr.f32.mxu0 0.0
      %381 = vmatmul.mubr.f32.gmra.mrb[0].mxu0 %v308
      %v382 = vpop.f32.mrb[0].mxu0
      %v383 = vadd.f32 %v290, %v382
      %v384 = vpop.f32.mrb[0].mxu0
      %385 = vmatprep.mubr.f32.mxu0 0.0
      %386 = vmatmul.mubr.f32.gmra.mrb[0].mxu0 %v310
      %v387 = vpop.f32.mrb[0].mxu0
      %v388 = vadd.f32 %v295, %v387
      %v389 = vpop.f32.mrb[0].mxu0
      %390 = vmatprep.mubr.f32.mxu0 0.0
      %391 = vmatmul.mubr.f32.gmra.mrb[0].mxu0 %v312
      %v392 = vpop.f32.mrb[0].mxu0
      %v393 = vadd.f32 %v300, %v392
      %v394 = vpop.f32.mrb[0].mxu0
      %395 = vmatprep.mubr.f32.mxu0 0.0
      %396 = vmatmul.mubr.f32.gmra.mrb[0].mxu0 %v314
      %v397 = vpop.f32.mrb[0].mxu0
      %v398 = vadd.f32 %v305, %v397
      %v399 = vpop.f32.mrb[0].mxu0
      %400 = vdwg.mxu0
      %vm401 = vcmask 1045504
      %v402 = vrot.slane %v174, 2
      %v403 = vrot.slane %v175, 2
      %v404 = vsel %vm401, %v402, %v403
      %v405 = vrot.slane %v176, 2
      %v406 = vsel %vm401, %v403, %v405
      %v407 = vrot.slane %v177, 2
      %v408 = vsel %vm401, %v405, %v407
      %v409 = vsel %vm214, %v404, 0
      %v411 = vsel %vm214, %v406, 0
      %v413 = vsel %vm214, %v408, 0
      %v415 = vsel %vm214, %v407, 0
      %417 = vmatprep.subr.mxu0 0.0
      %418 = vmatpush1.msra.mxu0 %v194
      %419 = vmatprep.subr.mxu0 0.0
      %420 = vmatpush1.msra.mxu0 %v195
      %421 = vmatprep.subr.mxu0 0.0
      %422 = vmatpush1.msra.mxu0 %v196
      %423 = vmatprep.subr.mxu0 0.0
      %424 = vmatpush1.msra.mxu0 %v197
      %425 = vmatprep.subr.mxu0 0.0
      %426 = vmatpush1.msra.mxu0 %v198
      %427 = vmatprep.subr.mxu0 0.0
      %428 = vmatpush1.msra.mxu0 %v199
      %429 = vmatprep.subr.mxu0 0.0
      %430 = vmatpush1.msra.mxu0 %v200
      %431 = vmatprep.subr.mxu0 0.0
      %432 = vmatpush1.msra.mxu0 %v201
      %433 = vmatprep.subr.mxu0 0.0
      %434 = vmatpush1.msra.mxu0 0.0
      %435 = vmatprep.subr.mxu0 0.0
      %436 = vmatpush1.msra.mxu0 0.0
      %437 = vmatprep.subr.mxu0 0.0
      %438 = vmatpush1.msra.mxu0 0.0
      %439 = vmatprep.subr.mxu0 0.0
      %440 = vmatpush1.msra.mxu0 0.0
      %441 = vmatprep.subr.mxu0 0.0
      %442 = vmatpush1.msra.mxu0 0.0
      %443 = vmatprep.subr.mxu0 0.0
      %444 = vmatpush1.msra.mxu0 0.0
      %445 = vmatprep.subr.mxu0 0.0
      %446 = vmatpush1.msra.mxu0 0.0
      %447 = vmatprep.subr.mxu0 0.0
      %448 = vmatpush1.msra.mxu0 0.0
      %449 = vmatprep.subr.mxu0 0.0
      %450 = vmatpush1.msra.mxu0 0.0
      %451 = vmatprep.subr.mxu0 0.0
      %452 = vmatpush1.msra.mxu0 0.0
      %453 = vmatprep.subr.mxu0 0.0
      %454 = vmatpush1.msra.mxu0 0.0
      %455 = vmatprep.subr.mxu0 0.0
      %456 = vmatpush1.msra.mxu0 0.0
      %457 = vmatprep.subr.mxu0 0.0
      %458 = vmatpush1.msra.mxu0 0.0
      %459 = vmatprep.subr.mxu0 0.0
      %460 = vmatpush1.msra.mxu0 0.0
      %461 = vmatprep.subr.mxu0 0.0
      %462 = vmatpush1.msra.mxu0 0.0
      %463 = vmatprep.subr.mxu0 0.0
      %464 = vmatpush1.msra.mxu0 0.0
      %465 = vmatprep.subr.mxu0 0.0
      %466 = vmatpush1.msra.mxu0 0.0
      %467 = vmatprep.subr.mxu0 0.0
      %468 = vmatpush1.msra.mxu0 0.0
      %469 = vmatprep.subr.mxu0 0.0
      %470 = vmatpush1.msra.mxu0 0.0
      %471 = vmatprep.subr.mxu0 0.0
      %472 = vmatpush1.msra.mxu0 0.0
      %473 = vmatprep.subr.mxu0 0.0
      %474 = vmatpush1.msra.mxu0 0.0
      %475 = vmatprep.subr.mxu0 0.0
      %476 = vmatpush1.msra.mxu0 0.0
      %477 = vmatprep.subr.mxu0 0.0
      %478 = vmatpush1.msra.mxu0 0.0
      %479 = vmatprep.subr.mxu0 0.0
      %480 = vmatpush1.msra.mxu0 0.0
      %481 = vmatprep.mubr.f32.mxu0 0.0
      %482 = vmatmul.mubr.f32.gmra.mrb[0].mxu0 %v409
      %v483 = vpop.f32.mrb[0].mxu0
      %v484 = vadd.f32 0.0, %v483
      %v485 = vpop.f32.mrb[0].mxu0
      %486 = vmatprep.mubr.f32.mxu0 0.0
      %487 = vmatmul.mubr.f32.gmra.mrb[0].mxu0 %v411
      %v488 = vpop.f32.mrb[0].mxu0
      %v489 = vadd.f32 0.0, %v488
      %v490 = vpop.f32.mrb[0].mxu0
      %491 = vmatprep.mubr.f32.mxu0 0.0
      %492 = vmatmul.mubr.f32.gmra.mrb[0].mxu0 %v413
      %v493 = vpop.f32.mrb[0].mxu0
      %v494 = vadd.f32 0.0, %v493
      %v495 = vpop.f32.mrb[0].mxu0
      %496 = vmatprep.mubr.f32.mxu0 0.0
      %497 = vmatmul.mubr.f32.gmra.mrb[0].mxu0 %v415
      %v498 = vpop.f32.mrb[0].mxu0
      %v499 = vadd.f32 0.0, %v498
      %v500 = vpop.f32.mrb[0].mxu0
      %501 = vdwg.mxu0
      %v502 = vadd.f32 %v383, %v484
      %v503 = vadd.f32 %v388, %v489
      %v504 = vadd.f32 %v393, %v494
      %v505 = vadd.f32 %v398, %v499
      %v506 = vld [vmem:[#allocation2] sm:$0x1]
      %v508 = vlaneseq
      %v509 = vshrl.u32 %v508, 7
      %v510 = vsub.s32 0, %v509
      %v511 = vrot.slane %v506, %v510
      %v513 = vadd.f32 %v502, %v511
      %v514 = vadd.f32 %v503, %v511
      %v515 = vadd.f32 %v504, %v511
      %v516 = vadd.f32 %v505, %v511
      %vm517 = vcmask 0
      %518 = vst.msk [vmem:[%s172] sm:$0x1] %vm517, %v513
      %s519 = scalar_lea.vmem %s172, 1
      %520 = vst.msk [vmem:[%s519] sm:$0x1] %vm517, %v514
      %s521 = scalar_lea.vmem %s172, 2
      %522 = vst.msk [vmem:[%s521] sm:$0x1] %vm517, %v515
      %s523 = scalar_lea.vmem %s172, 3
      %524 = vst.msk [vmem:[%s523] sm:$0x1] %vm517, %v516
      %s525 = smul.u32 4, %s16
      %p526 = scmp.lt.s32.totalorder %s525, 7
      %s527 = scalar_select %p526, %s525, 7
      %s528 = scalar_lea.vmem %s3, %s527
      // Predicated region
      $region33: #{_lambda_.11} parent=31 // pred_check
        %p529 = pneg %p102
      $region34: #{_lambda_.11} parent=31 // pred_check_branch
        %531 = sbr.rel (%p529) target = $region36
      $region35: #{_lambda_.11} parent=31 // pred_region
        %s532 = smul.u32 4, %s16
      $region36: #{_lambda_.11} parent=31 // pred_fallthru
        _
    $region32: #{_lambda_.11} parent=5 // pred_fallthru
      _
    %p533 = scmp.le.s32.totalorder 2, %s11
    // Predicated region
    $region37: #{_lambda_.11} parent=5 // pred_check
      %p534 = pneg %p533
    $region38: #{_lambda_.11} parent=5 // pred_check_branch
      %536 = sbr.rel (%p534) target = $region40
    $region39: #{_lambda_.11} parent=5 // pred_region
      %s537 = ssub.s32 %s11, 2
      // Predicated region
      $region41: #{_lambda_.11} parent=39 // pred_check
        %p538 = pneg %p108
      $region42: #{_lambda_.11} parent=39 // pred_check_branch
        %540 = sbr.rel (%p538) target = $region44
      $region43: #{_lambda_.11} parent=39 // pred_region
        %s541 = smul.u32 4, %s17
        %p542 = scmp.lt.s32.totalorder %s541, 7
        %s543 = scalar_select %p542, %s541, 7
        %s544 = scalar_lea.vmem %s3, %s543
      $region44: #{_lambda_.11} parent=39 // pred_fallthru
        _
    $region40: #{_lambda_.11} parent=5 // pred_fallthru
      _
  $region6: #{_lambda_.11} parent=0 // loop_footer
    %s15 = sadd.s32 1, %s11
  $region7: #{_lambda_.11} parent=0 // loop_footer_branch
    %10 = sbr.rel target = $region3
  $region8: #{_lambda_.11} parent=0 // loop_exit
    _

// kernel: _lambda_.10
$region0: #{_lambda_.10}
  #allocation0 [shape = 'u32[]', space=smem, size = 0x4, offset = 0x4, fixed_abs, tag = 'smem constant byte address 0x4 - core index']
  #allocation1 [shape = 'u32[144,128]{1,0:T(1,128)}', space=vmem, size = 0x12000, scoped, tag = 'internal scratch']
  %s0 = inlined_call_operand.vmem [shape: f32[64,64], index: 0, kind: input, shape index: {}]
  %s1 = inlined_call_operand.vmem [shape: f32[320,64], index: 1, kind: input, shape index: {}]
  %s2 = inlined_call_operand.vmem [shape: f32[1,64], index: 2, kind: input, shape index: {}]
  %s3 = inlined_call_operand.vmem [shape: f32[8,1,64], index: 3, kind: output, shape index: {}]
  %s4 = sld [smem:[#allocation0]]
  $region45: #{_lambda_.10} parent=0
    _
  %s6 = ssub.s32 1, %s4
  %s7 = scalar_select 0, %s6, %s4
  loop: start=0, step=1, limit=4
  $region2: #{_lambda_.10} parent=0 // loop_pre_header
    _
  $region3: #{_lambda_.10} parent=0 // loop_header
    %s9 = sphi 0, %s13
    %p10 = scmp.ge.s32.totalorder %s9, 4
    %s19 = sphi 0, %s21
    %s22 = sphi 0, %s19
    %s23 = sphi 0, %s22
    %s39 = sphi 0, %s23
    %s43 = sphi 0, %s43
    %s45 = sphi 0, %s43
    %s46 = sphi 0, %s45
    %s60 = sphi 0, %s46
    %s64 = sphi 0, %s64
    %s66 = sphi 0, %s64
    %s67 = sphi 0, %s66
    %s81 = sphi 0, %s67
    %s87 = sphi 0, %s89
    %s90 = sphi 0, %s87
    %s91 = sphi 0, %s90
    %s107 = sphi 0, %s91
  $region4: #{_lambda_.10} parent=0 // loop_header_branch
    %12 = sbr.rel (%p10) target = $region8
  $region5: #{_lambda_.10} parent=0 // loop_body
    %s14 = ssub.s32 %s9, 1
    %s15 = ssub.s32 %s9, 2
    %s16 = sadd.s32 %s9, 1
    %s17 = ssub.s32 %s9, %s16
    %p18 = scmp.eq.s32.totalorder %s17, 0
    %s20 = sadd.s32 %s19, 1
    %s21 = scalar_select %p18, %s19, %s20
    %p24 = pneg %p18
    %p25 = scmp.eq.s32.totalorder %s9, 1
    %p26 = por %p24, %p25
    %p27 = scmp.ne.s32.totalorder %s19, %s22
    %p28 = scmp.eq.s32.totalorder %s9, 0
    %p29 = por %p27, %p28
    %p30 = scmp.ne.s32.totalorder %s19, %s22
    %p31 = scmp.eq.s32.totalorder %s14, 1
    %p32 = por %p30, %p31
    %p33 = scmp.ne.s32.totalorder %s22, %s23
    %p34 = scmp.eq.s32.totalorder %s14, 0
    %p35 = por %p33, %p34
    %p36 = scmp.ne.s32.totalorder %s22, %s23
    %p37 = scmp.eq.s32.totalorder %s15, 1
    %p38 = por %p36, %p37
    %p40 = scmp.ne.s32.totalorder %s23, %s39
    %p41 = scmp.eq.s32.totalorder %s15, 0
    %p42 = por %p40, %p41
    %s44 = sadd.s32 %s43, 1
    %p47 = scmp.eq.s32.totalorder %s9, 1
    %p48 = scmp.ne.s32.totalorder %s43, %s45
    %p49 = scmp.eq.s32.totalorder %s9, 0
    %p50 = por %p48, %p49
    %p51 = scmp.ne.s32.totalorder %s43, %s45
    %p52 = scmp.eq.s32.totalorder %s14, 1
    %p53 = por %p51, %p52
    %p54 = scmp.ne.s32.totalorder %s45, %s46
    %p55 = scmp.eq.s32.totalorder %s14, 0
    %p56 = por %p54, %p55
    %p57 = scmp.ne.s32.totalorder %s45, %s46
    %p58 = scmp.eq.s32.totalorder %s15, 1
    %p59 = por %p57, %p58
    %p61 = scmp.ne.s32.totalorder %s46, %s60
    %p62 = scmp.eq.s32.totalorder %s15, 0
    %p63 = por %p61, %p62
    %s65 = sadd.s32 %s64, 1
    %p68 = scmp.eq.s32.totalorder %s9, 1
    %p69 = scmp.ne.s32.totalorder %s64, %s66
    %p70 = scmp.eq.s32.totalorder %s9, 0
    %p71 = por %p69, %p70
    %p72 = scmp.ne.s32.totalorder %s64, %s66
    %p73 = scmp.eq.s32.totalorder %s14, 1
    %p74 = por %p72, %p73
    %p75 = scmp.ne.s32.totalorder %s66, %s67
    %p76 = scmp.eq.s32.totalorder %s14, 0
    %p77 = por %p75, %p76
    %p78 = scmp.ne.s32.totalorder %s66, %s67
    %p79 = scmp.eq.s32.totalorder %s15, 1
    %p80 = por %p78, %p79
    %p82 = scmp.ne.s32.totalorder %s67, %s81
    %p83 = scmp.eq.s32.totalorder %s15, 0
    %p84 = por %p82, %p83
    %s85 = ssub.s32 %s9, %s16
    %p86 = scmp.eq.s32.totalorder %s85, 0
    %s88 = sadd.s32 %s87, 1
    %s89 = scalar_select %p86, %s87, %s88
    %p92 = pneg %p86
    %p93 = scmp.eq.s32.totalorder %s9, 1
    %p94 = por %p92, %p93
    %p95 = scmp.ne.s32.totalorder %s87, %s90
    %p96 = scmp.eq.s32.totalorder %s9, 0
    %p97 = por %p95, %p96
    %p98 = scmp.ne.s32.totalorder %s87, %s90
    %p99 = scmp.eq.s32.totalorder %s14, 1
    %p100 = por %p98, %p99
    %p101 = scmp.ne.s32.totalorder %s90, %s91
    %p102 = scmp.eq.s32.totalorder %s14, 0
    %p103 = por %p101, %p102
    %p104 = scmp.ne.s32.totalorder %s90, %s91
    %p105 = scmp.eq.s32.totalorder %s15, 1
    %p106 = por %p104, %p105
    %p108 = scmp.ne.s32.totalorder %s91, %s107
    %p109 = scmp.eq.s32.totalorder %s15, 0
    %p110 = por %p108, %p109
    %p111 = scmp.le.s32.totalorder 1, %s9
    %p112 = scmp.lt.s32.totalorder %s9, 3
    %p113 = pnand %p111, %p112
    %p114 = pneg %p113
    // Predicated region
    $region9: #{_lambda_.10} parent=5 // pred_check
      _
    $region10: #{_lambda_.10} parent=5 // pred_check_branch
      %116 = sbr.rel (%p113) target = $region12
    $region11: #{_lambda_.10} parent=5 // pred_region
      %s117 = ssub.s32 %s9, 1
      // Predicated region
      $region13: #{_lambda_.10} parent=11 // pred_check
        %p118 = pneg %p56
      $region14: #{_lambda_.10} parent=11 // pred_check_branch
        %120 = sbr.rel (%p118) target = $region16
      $region15: #{_lambda_.10} parent=11 // pred_region
        _
      $region16: #{_lambda_.10} parent=11 // pred_fallthru
        _
      // Predicated region
      $region17: #{_lambda_.10} parent=11 // pred_check
        %p121 = pneg %p77
      $region18: #{_lambda_.10} parent=11 // pred_check_branch
        %123 = sbr.rel (%p121) target = $region20
      $region19: #{_lambda_.10} parent=11 // pred_region
        _
      $region20: #{_lambda_.10} parent=11 // pred_fallthru
        _
    $region12: #{_lambda_.10} parent=5 // pred_fallthru
      _
    %p124 = scmp.lt.s32.totalorder %s9, 2
    // Predicated region
    $region21: #{_lambda_.10} parent=5 // pred_check
      %p125 = pneg %p124
    $region22: #{_lambda_.10} parent=5 // pred_check_branch
      %127 = sbr.rel (%p125) target = $region24
    $region23: #{_lambda_.10} parent=5 // pred_region
      // Predicated region
      $region25: #{_lambda_.10} parent=23 // pred_check
        %p128 = pneg %p29
      $region26: #{_lambda_.10} parent=23 // pred_check_branch
        %130 = sbr.rel (%p128) target = $region28
      $region27: #{_lambda_.10} parent=23 // pred_region
        %s131 = smul.u32 4, %s9
        %p132 = scmp.lt.s32.totalorder %s131, 7
        %s133 = scalar_select %p132, %s131, 7
        %s134 = smul.addr %s133, 8
        %s135 = scalar_lea.vmem %s0, %s134
        %s136 = smul.u32 4, %s9
      $region28: #{_lambda_.10} parent=23 // pred_fallthru
        _
    $region24: #{_lambda_.10} parent=5 // pred_fallthru
      _
    %p137 = scmp.le.s32.totalorder 1, %s9
    %p138 = scmp.lt.s32.totalorder %s9, 3
    %p139 = pnand %p137, %p138
    %p140 = pneg %p139
    // Predicated region
    $region29: #{_lambda_.10} parent=5 // pred_check
      _
    $region30: #{_lambda_.10} parent=5 // pred_check_branch
      %142 = sbr.rel (%p139) target = $region32
    $region31: #{_lambda_.10} parent=5 // pred_region
      %s143 = ssub.s32 %s9, 1
      %s144 = smul.u32 4, %s14
      %p145 = scmp.lt.s32.totalorder %s144, 7
      %s146 = scalar_select %p145, %s144, 7
      %s147 = smul.addr %s146, 8
      %s148 = scalar_lea.vmem %s0, %s147
      %p149 = pneg %p35
      %p150 = pneg %p32
      %p151 = pneg %p56
      %p152 = pneg %p53
      %p153 = pneg %p77
      %p154 = pneg %p74
      %p155 = pneg %p103
      %p156 = pneg %p100
      %s157 = smul.u32 4, %s14
      %p158 = scmp.lt.s32.totalorder %s157, 7
      %s159 = scalar_select %p158, %s157, 7
      %s160 = scalar_lea.vmem %s3, %s159
      %s161 = smul.u32 4, %s14
      %p162 = scmp.lt.s32.totalorder %s161, 7
      %s163 = scalar_select %p162, %s161, 7
      %s164 = smul.addr %s163, 8
      %s165 = scalar_lea.vmem %s0, %s164
      %s166 = smul.u32 4, %s14
      %s167 = smul.u32 4, %s14
      %p168 = scmp.lt.s32.totalorder %s167, 7
      %s169 = scalar_select %p168, %s167, 7
      %s170 = scalar_lea.vmem %s3, %s169
      %s171 = smul.u32 4, %s14
      %v172 = vld [vmem:[%s165] sm:$0xff]
      %v173 = vld [vmem:[%s165 + $0x8] sm:$0xff]
      %v174 = vld [vmem:[%s165 + $0x10] sm:$0xff]
      %v175 = vld [vmem:[%s165 + $0x18] sm:$0xff]
      %v176 = vld [vmem:[%s1] sm:$0xff]
      %v177 = vld [vmem:[%s1 + $0x8] sm:$0xff]
      %v178 = vld [vmem:[%s1 + $0x10] sm:$0xff]
      %v179 = vld [vmem:[%s1 + $0x18] sm:$0xff]
      %v180 = vld [vmem:[%s1 + $0x20] sm:$0xff]
      %v181 = vld [vmem:[%s1 + $0x28] sm:$0xff]
      %v182 = vld [vmem:[%s1 + $0x30] sm:$0xff]
      %v183 = vld [vmem:[%s1 + $0x38] sm:$0xff]
      %v184 = vld [vmem:[%s1 + $0x40] sm:$0xff]
      %v185 = vld [vmem:[%s1 + $0x48] sm:$0xff]
      %v186 = vld [vmem:[%s1 + $0x50] sm:$0xff]
      %v187 = vld [vmem:[%s1 + $0x58] sm:$0xff]
      %v188 = vld [vmem:[%s1 + $0x60] sm:$0xff]
      %v189 = vld [vmem:[%s1 + $0x68] sm:$0xff]
      %v190 = vld [vmem:[%s1 + $0x70] sm:$0xff]
      %v191 = vld [vmem:[%s1 + $0x78] sm:$0xff]
      %v192 = vld [vmem:[%s1 + $0x80] sm:$0xff]
      %v193 = vld [vmem:[%s1 + $0x88] sm:$0xff]
      %v194 = vld [vmem:[%s1 + $0x90] sm:$0xff]
      %v195 = vld [vmem:[%s1 + $0x98] sm:$0xff]
      %v196 = vld [vmem:[%s1 + $0xa0] sm:$0xff]
      %v197 = vld [vmem:[%s1 + $0xa8] sm:$0xff]
      %v198 = vld [vmem:[%s1 + $0xb0] sm:$0xff]
      %v199 = vld [vmem:[%s1 + $0xb8] sm:$0xff]
      %v200 = vld [vmem:[%s1 + $0xc0] sm:$0xff]
      %v201 = vld [vmem:[%s1 + $0xc8] sm:$0xff]
      %v202 = vld [vmem:[%s1 + $0xd0] sm:$0xff]
      %v203 = vld [vmem:[%s1 + $0xd8] sm:$0xff]
      %v204 = vld [vmem:[%s1 + $0xe0] sm:$0xff]
      %v205 = vld [vmem:[%s1 + $0xe8] sm:$0xff]
      %v206 = vld [vmem:[%s1 + $0xf0] sm:$0xff]
      %v207 = vld [vmem:[%s1 + $0xf8] sm:$0xff]
      %v208 = vld [vmem:[%s1 + $0x100] sm:$0xff]
      %v209 = vld [vmem:[%s1 + $0x108] sm:$0xff]
      %v210 = vld [vmem:[%s1 + $0x110] sm:$0xff]
      %v211 = vld [vmem:[%s1 + $0x118] sm:$0xff]
      %v212 = vld [vmem:[%s1 + $0x120] sm:$0xff]
      %v213 = vld [vmem:[%s1 + $0x128] sm:$0xff]
      %v214 = vld [vmem:[%s1 + $0x130] sm:$0xff]
      %v215 = vld [vmem:[%s1 + $0x138] sm:$0xff]
      %vm220 = vcmask 1046528
      %v221 = vrot.slane %v172, 1
      %v222 = vrot.slane %v173, 1
      %v223 = vsel %vm220, %v221, %v222
      %v224 = vrot.slane %v174, 1
      %v225 = vsel %vm220, %v222, %v224
      %v226 = vrot.slane %v175, 1
      %v227 = vsel %vm220, %v224, %v226
      %vm228 = vcmask 523264
      %v229 = vsel %vm228, %v223, 0
      %v231 = vsel %vm228, %v225, 0
      %v233 = vsel %vm228, %v227, 0
      %v235 = vsel %vm228, %v226, 0
      %237 = vmatprep.subr.mxu0 0.0
      %238 = vmatpush1.msra.mxu0 %v184
      %239 = vmatprep.subr.mxu0 0.0
      %240 = vmatpush1.msra.mxu0 %v185
      %241 = vmatprep.subr.mxu0 0.0
      %242 = vmatpush1.msra.mxu0 %v186
      %243 = vmatprep.subr.mxu0 0.0
      %244 = vmatpush1.msra.mxu0 %v187
      %245 = vmatprep.subr.mxu0 0.0
      %246 = vmatpush1.msra.mxu0 %v188
      %247 = vmatprep.subr.mxu0 0.0
      %248 = vmatpush1.msra.mxu0 %v189
      %249 = vmatprep.subr.mxu0 0.0
      %250 = vmatpush1.msra.mxu0 %v190
      %251 = vmatprep.subr.mxu0 0.0
      %252 = vmatpush1.msra.mxu0 %v191
      %253 = vmatprep.subr.mxu0 0.0
      %254 = vmatpush1.msra.mxu0 0.0
      %255 = vmatprep.subr.mxu0 0.0
      %256 = vmatpush1.msra.mxu0 0.0
      %257 = vmatprep.subr.mxu0 0.0
      %258 = vmatpush1.msra.mxu0 0.0
      %259 = vmatprep.subr.mxu0 0.0
      %260 = vmatpush1.msra.mxu0 0.0
      %261 = vmatprep.subr.mxu0 0.0
      %262 = vmatpush1.msra.mxu0 0.0
      %263 = vmatprep.subr.mxu0 0.0
      %264 = vmatpush1.msra.mxu0 0.0
      %265 = vmatprep.subr.mxu0 0.0
      %266 = vmatpush1.msra.mxu0 0.0
      %267 = vmatprep.subr.mxu0 0.0
      %268 = vmatpush1.msra.mxu0 0.0
      %269 = vmatprep.subr.mxu0 0.0
      %270 = vmatpush1.msra.mxu0 0.0
      %271 = vmatprep.subr.mxu0 0.0
      %272 = vmatpush1.msra.mxu0 0.0
      %273 = vmatprep.subr.mxu0 0.0
      %274 = vmatpush1.msra.mxu0 0.0
      %275 = vmatprep.subr.mxu0 0.0
      %276 = vmatpush1.msra.mxu0 0.0
      %277 = vmatprep.subr.mxu0 0.0
      %278 = vmatpush1.msra.mxu0 0.0
      %279 = vmatprep.subr.mxu0 0.0
      %280 = vmatpush1.msra.mxu0 0.0
      %281 = vmatprep.subr.mxu0 0.0
      %282 = vmatpush1.msra.mxu0 0.0
      %283 = vmatprep.subr.mxu0 0.0
      %284 = vmatpush1.msra.mxu0 0.0
      %285 = vmatprep.subr.mxu0 0.0
      %286 = vmatpush1.msra.mxu0 0.0
      %287 = vmatprep.subr.mxu0 0.0
      %288 = vmatpush1.msra.mxu0 0.0
      %289 = vmatprep.subr.mxu0 0.0
      %290 = vmatpush1.msra.mxu0 0.0
      %291 = vmatprep.subr.mxu0 0.0
      %292 = vmatpush1.msra.mxu0 0.0
      %293 = vmatprep.subr.mxu0 0.0
      %294 = vmatpush1.msra.mxu0 0.0
      %295 = vmatprep.subr.mxu0 0.0
      %296 = vmatpush1.msra.mxu0 0.0
      %297 = vmatprep.subr.mxu0 0.0
      %298 = vmatpush1.msra.mxu0 0.0
      %299 = vmatprep.subr.mxu0 0.0
      %300 = vmatpush1.msra.mxu0 0.0
      %301 = vmatprep.mubr.f32.mxu0 0.0
      %302 = vmatmul.mubr.f32.gmra.mrb[0].mxu0 %v229
      %v303 = vpop.f32.mrb[0].mxu0
      %v304 = vadd.f32 0.0, %v303
      %v305 = vpop.f32.mrb[0].mxu0
      %306 = vmatprep.mubr.f32.mxu0 0.0
      %307 = vmatmul.mubr.f32.gmra.mrb[0].mxu0 %v231
      %v308 = vpop.f32.mrb[0].mxu0
      %v309 = vadd.f32 0.0, %v308
      %v310 = vpop.f32.mrb[0].mxu0
      %311 = vmatprep.mubr.f32.mxu0 0.0
      %312 = vmatmul.mubr.f32.gmra.mrb[0].mxu0 %v233
      %v313 = vpop.f32.mrb[0].mxu0
      %v314 = vadd.f32 0.0, %v313
      %v315 = vpop.f32.mrb[0].mxu0
      %316 = vmatprep.mubr.f32.mxu0 0.0
      %317 = vmatmul.mubr.f32.gmra.mrb[0].mxu0 %v235
      %v318 = vpop.f32.mrb[0].mxu0
      %v319 = vadd.f32 0.0, %v318
      %v320 = vpop.f32.mrb[0].mxu0
      %321 = vdwg.mxu0
      %v322 = vsel %vm228, %v172, 0
      %v324 = vsel %vm228, %v173, 0
      %v326 = vsel %vm228, %v174, 0
      %v328 = vsel %vm228, %v175, 0
      %330 = vmatprep.subr.mxu0 0.0
      %331 = vmatpush1.msra.mxu0 %v176
      %332 = vmatprep.subr.mxu0 0.0
      %333 = vmatpush1.msra.mxu0 %v177
      %334 = vmatprep.subr.mxu0 0.0
      %335 = vmatpush1.msra.mxu0 %v178
      %336 = vmatprep.subr.mxu0 0.0
      %337 = vmatpush1.msra.mxu0 %v179
      %338 = vmatprep.subr.mxu0 0.0
      %339 = vmatpush1.msra.mxu0 %v180
      %340 = vmatprep.subr.mxu0 0.0
      %341 = vmatpush1.msra.mxu0 %v181
      %342 = vmatprep.subr.mxu0 0.0
      %343 = vmatpush1.msra.mxu0 %v182
      %344 = vmatprep.subr.mxu0 0.0
      %345 = vmatpush1.msra.mxu0 %v183
      %346 = vmatprep.subr.mxu0 0.0
      %347 = vmatpush1.msra.mxu0 0.0
      %348 = vmatprep.subr.mxu0 0.0
      %349 = vmatpush1.msra.mxu0 0.0
      %350 = vmatprep.subr.mxu0 0.0
      %351 = vmatpush1.msra.mxu0 0.0
      %352 = vmatprep.subr.mxu0 0.0
      %353 = vmatpush1.msra.mxu0 0.0
      %354 = vmatprep.subr.mxu0 0.0
      %355 = vmatpush1.msra.mxu0 0.0
      %356 = vmatprep.subr.mxu0 0.0
      %357 = vmatpush1.msra.mxu0 0.0
      %358 = vmatprep.subr.mxu0 0.0
      %359 = vmatpush1.msra.mxu0 0.0
      %360 = vmatprep.subr.mxu0 0.0
      %361 = vmatpush1.msra.mxu0 0.0
      %362 = vmatprep.subr.mxu0 0.0
      %363 = vmatpush1.msra.mxu0 0.0
      %364 = vmatprep.subr.mxu0 0.0
      %365 = vmatpush1.msra.mxu0 0.0
      %366 = vmatprep.subr.mxu0 0.0
      %367 = vmatpush1.msra.mxu0 0.0
      %368 = vmatprep.subr.mxu0 0.0
      %369 = vmatpush1.msra.mxu0 0.0
      %370 = vmatprep.subr.mxu0 0.0
      %371 = vmatpush1.msra.mxu0 0.0
      %372 = vmatprep.subr.mxu0 0.0
      %373 = vmatpush1.msra.mxu0 0.0
      %374 = vmatprep.subr.mxu0 0.0
      %375 = vmatpush1.msra.mxu0 0.0
      %376 = vmatprep.subr.mxu0 0.0
      %377 = vmatpush1.msra.mxu0 0.0
      %378 = vmatprep.subr.mxu0 0.0
      %379 = vmatpush1.msra.mxu0 0.0
      %380 = vmatprep.subr.mxu0 0.0
      %381 = vmatpush1.msra.mxu0 0.0
      %382 = vmatprep.subr.mxu0 0.0
      %383 = vmatpush1.msra.mxu0 0.0
      %384 = vmatprep.subr.mxu0 0.0
      %385 = vmatpush1.msra.mxu0 0.0
      %386 = vmatprep.subr.mxu0 0.0
      %387 = vmatpush1.msra.mxu0 0.0
      %388 = vmatprep.subr.mxu0 0.0
      %389 = vmatpush1.msra.mxu0 0.0
      %390 = vmatprep.subr.mxu0 0.0
      %391 = vmatpush1.msra.mxu0 0.0
      %392 = vmatprep.subr.mxu0 0.0
      %393 = vmatpush1.msra.mxu0 0.0
      %394 = vmatprep.mubr.f32.mxu0 0.0
      %395 = vmatmul.mubr.f32.gmra.mrb[0].mxu0 %v322
      %v396 = vpop.f32.mrb[0].mxu0
      %v397 = vadd.f32 %v304, %v396
      %v398 = vpop.f32.mrb[0].mxu0
      %399 = vmatprep.mubr.f32.mxu0 0.0
      %400 = vmatmul.mubr.f32.gmra.mrb[0].mxu0 %v324
      %v401 = vpop.f32.mrb[0].mxu0
      %v402 = vadd.f32 %v309, %v401
      %v403 = vpop.f32.mrb[0].mxu0
      %404 = vmatprep.mubr.f32.mxu0 0.0
      %405 = vmatmul.mubr.f32.gmra.mrb[0].mxu0 %v326
      %v406 = vpop.f32.mrb[0].mxu0
      %v407 = vadd.f32 %v314, %v406
      %v408 = vpop.f32.mrb[0].mxu0
      %409 = vmatprep.mubr.f32.mxu0 0.0
      %410 = vmatmul.mubr.f32.gmra.mrb[0].mxu0 %v328
      %v411 = vpop.f32.mrb[0].mxu0
      %v412 = vadd.f32 %v319, %v411
      %v413 = vpop.f32.mrb[0].mxu0
      %414 = vdwg.mxu0
      %vm415 = vcmask 1045504
      %v416 = vrot.slane %v172, 2
      %v417 = vrot.slane %v173, 2
      %v418 = vsel %vm415, %v416, %v417
      %v419 = vrot.slane %v174, 2
      %v420 = vsel %vm415, %v417, %v419
      %v421 = vrot.slane %v175, 2
      %v422 = vsel %vm415, %v419, %v421
      %v423 = vsel %vm228, %v418, 0
      %v425 = vsel %vm228, %v420, 0
      %v427 = vsel %vm228, %v422, 0
      %v429 = vsel %vm228, %v421, 0
      %431 = vmatprep.subr.mxu0 0.0
      %432 = vmatpush1.msra.mxu0 %v192
      %433 = vmatprep.subr.mxu0 0.0
      %434 = vmatpush1.msra.mxu0 %v193
      %435 = vmatprep.subr.mxu0 0.0
      %436 = vmatpush1.msra.mxu0 %v194
      %437 = vmatprep.subr.mxu0 0.0
      %438 = vmatpush1.msra.mxu0 %v195
      %439 = vmatprep.subr.mxu0 0.0
      %440 = vmatpush1.msra.mxu0 %v196
      %441 = vmatprep.subr.mxu0 0.0
      %442 = vmatpush1.msra.mxu0 %v197
      %443 = vmatprep.subr.mxu0 0.0
      %444 = vmatpush1.msra.mxu0 %v198
      %445 = vmatprep.subr.mxu0 0.0
      %446 = vmatpush1.msra.mxu0 %v199
      %447 = vmatprep.subr.mxu0 0.0
      %448 = vmatpush1.msra.mxu0 0.0
      %449 = vmatprep.subr.mxu0 0.0
      %450 = vmatpush1.msra.mxu0 0.0
      %451 = vmatprep.subr.mxu0 0.0
      %452 = vmatpush1.msra.mxu0 0.0
      %453 = vmatprep.subr.mxu0 0.0
      %454 = vmatpush1.msra.mxu0 0.0
      %455 = vmatprep.subr.mxu0 0.0
      %456 = vmatpush1.msra.mxu0 0.0
      %457 = vmatprep.subr.mxu0 0.0
      %458 = vmatpush1.msra.mxu0 0.0
      %459 = vmatprep.subr.mxu0 0.0
      %460 = vmatpush1.msra.mxu0 0.0
      %461 = vmatprep.subr.mxu0 0.0
      %462 = vmatpush1.msra.mxu0 0.0
      %463 = vmatprep.subr.mxu0 0.0
      %464 = vmatpush1.msra.mxu0 0.0
      %465 = vmatprep.subr.mxu0 0.0
      %466 = vmatpush1.msra.mxu0 0.0
      %467 = vmatprep.subr.mxu0 0.0
      %468 = vmatpush1.msra.mxu0 0.0
      %469 = vmatprep.subr.mxu0 0.0
      %470 = vmatpush1.msra.mxu0 0.0
      %471 = vmatprep.subr.mxu0 0.0
      %472 = vmatpush1.msra.mxu0 0.0
      %473 = vmatprep.subr.mxu0 0.0
      %474 = vmatpush1.msra.mxu0 0.0
      %475 = vmatprep.subr.mxu0 0.0
      %476 = vmatpush1.msra.mxu0 0.0
      %477 = vmatprep.subr.mxu0 0.0
      %478 = vmatpush1.msra.mxu0 0.0
      %479 = vmatprep.subr.mxu0 0.0
      %480 = vmatpush1.msra.mxu0 0.0
      %481 = vmatprep.subr.mxu0 0.0
      %482 = vmatpush1.msra.mxu0 0.0
      %483 = vmatprep.subr.mxu0 0.0
      %484 = vmatpush1.msra.mxu0 0.0
      %485 = vmatprep.subr.mxu0 0.0
      %486 = vmatpush1.msra.mxu0 0.0
      %487 = vmatprep.subr.mxu0 0.0
      %488 = vmatpush1.msra.mxu0 0.0
      %489 = vmatprep.subr.mxu0 0.0
      %490 = vmatpush1.msra.mxu0 0.0
      %491 = vmatprep.subr.mxu0 0.0
      %492 = vmatpush1.msra.mxu0 0.0
      %493 = vmatprep.subr.mxu0 0.0
      %494 = vmatpush1.msra.mxu0 0.0
      %495 = vmatprep.mubr.f32.mxu0 0.0
      %496 = vmatmul.mubr.f32.gmra.mrb[0].mxu0 %v423
      %v497 = vpop.f32.mrb[0].mxu0
      %v498 = vadd.f32 0.0, %v497
      %v499 = vpop.f32.mrb[0].mxu0
      %500 = vmatprep.mubr.f32.mxu0 0.0
      %501 = vmatmul.mubr.f32.gmra.mrb[0].mxu0 %v425
      %v502 = vpop.f32.mrb[0].mxu0
      %v503 = vadd.f32 0.0, %v502
      %v504 = vpop.f32.mrb[0].mxu0
      %505 = vmatprep.mubr.f32.mxu0 0.0
      %506 = vmatmul.mubr.f32.gmra.mrb[0].mxu0 %v427
      %v507 = vpop.f32.mrb[0].mxu0
      %v508 = vadd.f32 0.0, %v507
      %v509 = vpop.f32.mrb[0].mxu0
      %510 = vmatprep.mubr.f32.mxu0 0.0
      %511 = vmatmul.mubr.f32.gmra.mrb[0].mxu0 %v429
      %v512 = vpop.f32.mrb[0].mxu0
      %v513 = vadd.f32 0.0, %v512
      %v514 = vpop.f32.mrb[0].mxu0
      %515 = vdwg.mxu0
      %v516 = vadd.f32 %v397, %v498
      %v517 = vadd.f32 %v402, %v503
      %v518 = vadd.f32 %v407, %v508
      %v519 = vadd.f32 %v412, %v513
      %vm520 = vcmask 1044480
      %v521 = vrot.slane %v172, 3
      %v522 = vrot.slane %v173, 3
      %v523 = vsel %vm520, %v521, %v522
      %v524 = vrot.slane %v174, 3
      %v525 = vsel %vm520, %v522, %v524
      %v526 = vrot.slane %v175, 3
      %v527 = vsel %vm520, %v524, %v526
      %v528 = vsel %vm228, %v523, 0
      %v530 = vsel %vm228, %v525, 0
      %v532 = vsel %vm228, %v527, 0
      %v534 = vsel %vm228, %v526, 0
      %536 = vmatprep.subr.mxu0 0.0
      %537 = vmatpush1.msra.mxu0 %v200
      %538 = vmatprep.subr.mxu0 0.0
      %539 = vmatpush1.msra.mxu0 %v201
      %540 = vmatprep.subr.mxu0 0.0
      %541 = vmatpush1.msra.mxu0 %v202
      %542 = vmatprep.subr.mxu0 0.0
      %543 = vmatpush1.msra.mxu0 %v203
      %544 = vmatprep.subr.mxu0 0.0
      %545 = vmatpush1.msra.mxu0 %v204
      %546 = vmatprep.subr.mxu0 0.0
      %547 = vmatpush1.msra.mxu0 %v205
      %548 = vmatprep.subr.mxu0 0.0
      %549 = vmatpush1.msra.mxu0 %v206
      %550 = vmatprep.subr.mxu0 0.0
      %551 = vmatpush1.msra.mxu0 %v207
      %552 = vmatprep.subr.mxu0 0.0
      %553 = vmatpush1.msra.mxu0 0.0
      %554 = vmatprep.subr.mxu0 0.0
      %555 = vmatpush1.msra.mxu0 0.0
      %556 = vmatprep.subr.mxu0 0.0
      %557 = vmatpush1.msra.mxu0 0.0
      %558 = vmatprep.subr.mxu0 0.0
      %559 = vmatpush1.msra.mxu0 0.0
      %560 = vmatprep.subr.mxu0 0.0
      %561 = vmatpush1.msra.mxu0 0.0
      %562 = vmatprep.subr.mxu0 0.0
      %563 = vmatpush1.msra.mxu0 0.0
      %564 = vmatprep.subr.mxu0 0.0
      %565 = vmatpush1.msra.mxu0 0.0
      %566 = vmatprep.subr.mxu0 0.0
      %567 = vmatpush1.msra.mxu0 0.0
      %568 = vmatprep.subr.mxu0 0.0
      %569 = vmatpush1.msra.mxu0 0.0
      %570 = vmatprep.subr.mxu0 0.0
      %571 = vmatpush1.msra.mxu0 0.0
      %572 = vmatprep.subr.mxu0 0.0
      %573 = vmatpush1.msra.mxu0 0.0
      %574 = vmatprep.subr.mxu0 0.0
      %575 = vmatpush1.msra.mxu0 0.0
      %576 = vmatprep.subr.mxu0 0.0
      %577 = vmatpush1.msra.mxu0 0.0
      %578 = vmatprep.subr.mxu0 0.0
      %579 = vmatpush1.msra.mxu0 0.0
      %580 = vmatprep.subr.mxu0 0.0
      %581 = vmatpush1.msra.mxu0 0.0
      %582 = vmatprep.subr.mxu0 0.0
      %583 = vmatpush1.msra.mxu0 0.0
      %584 = vmatprep.subr.mxu0 0.0
      %585 = vmatpush1.msra.mxu0 0.0
      %586 = vmatprep.subr.mxu0 0.0
      %587 = vmatpush1.msra.mxu0 0.0
      %588 = vmatprep.subr.mxu0 0.0
      %589 = vmatpush1.msra.mxu0 0.0
      %590 = vmatprep.subr.mxu0 0.0
      %591 = vmatpush1.msra.mxu0 0.0
      %592 = vmatprep.subr.mxu0 0.0
      %593 = vmatpush1.msra.mxu0 0.0
      %594 = vmatprep.subr.mxu0 0.0
      %595 = vmatpush1.msra.mxu0 0.0
      %596 = vmatprep.subr.mxu0 0.0
      %597 = vmatpush1.msra.mxu0 0.0
      %598 = vmatprep.subr.mxu0 0.0
      %599 = vmatpush1.msra.mxu0 0.0
      %600 = vmatprep.mubr.f32.mxu0 0.0
      %601 = vmatmul.mubr.f32.gmra.mrb[0].mxu0 %v528
      %v602 = vpop.f32.mrb[0].mxu0
      %v603 = vadd.f32 0.0, %v602
      %v604 = vpop.f32.mrb[0].mxu0
      %605 = vmatprep.mubr.f32.mxu0 0.0
      %606 = vmatmul.mubr.f32.gmra.mrb[0].mxu0 %v530
      %v607 = vpop.f32.mrb[0].mxu0
      %v608 = vadd.f32 0.0, %v607
      %v609 = vpop.f32.mrb[0].mxu0
      %610 = vmatprep.mubr.f32.mxu0 0.0
      %611 = vmatmul.mubr.f32.gmra.mrb[0].mxu0 %v532
      %v612 = vpop.f32.mrb[0].mxu0
      %v613 = vadd.f32 0.0, %v612
      %v614 = vpop.f32.mrb[0].mxu0
      %615 = vmatprep.mubr.f32.mxu0 0.0
      %616 = vmatmul.mubr.f32.gmra.mrb[0].mxu0 %v534
      %v617 = vpop.f32.mrb[0].mxu0
      %v618 = vadd.f32 0.0, %v617
      %v619 = vpop.f32.mrb[0].mxu0
      %620 = vdwg.mxu0
      %v621 = vadd.f32 %v516, %v603
      %v622 = vadd.f32 %v517, %v608
      %v623 = vadd.f32 %v518, %v613
      %v624 = vadd.f32 %v519, %v618
      %vm625 = vcmask 1043456
      %v626 = vrot.slane %v172, 4
      %v627 = vrot.slane %v173, 4
      %v628 = vsel %vm625, %v626, %v627
      %v629 = vrot.slane %v174, 4
      %v630 = vsel %vm625, %v627, %v629
      %v631 = vrot.slane %v175, 4
      %v632 = vsel %vm625, %v629, %v631
      %v633 = vsel %vm228, %v628, 0
      %v635 = vsel %vm228, %v630, 0
      %v637 = vsel %vm228, %v632, 0
      %v639 = vsel %vm228, %v631, 0
      %641 = vmatprep.subr.mxu0 0.0
      %642 = vmatpush1.msra.mxu0 %v208
      %643 = vmatprep.subr.mxu0 0.0
      %644 = vmatpush1.msra.mxu0 %v209
      %645 = vmatprep.subr.mxu0 0.0
      %646 = vmatpush1.msra.mxu0 %v210
      %647 = vmatprep.subr.mxu0 0.0
      %648 = vmatpush1.msra.mxu0 %v211
      %649 = vmatprep.subr.mxu0 0.0
      %650 = vmatpush1.msra.mxu0 %v212
      %651 = vmatprep.subr.mxu0 0.0
      %652 = vmatpush1.msra.mxu0 %v213
      %653 = vmatprep.subr.mxu0 0.0
      %654 = vmatpush1.msra.mxu0 %v214
      %655 = vmatprep.subr.mxu0 0.0
      %656 = vmatpush1.msra.mxu0 %v215
      %657 = vmatprep.subr.mxu0 0.0
      %658 = vmatpush1.msra.mxu0 0.0
      %659 = vmatprep.subr.mxu0 0.0
      %660 = vmatpush1.msra.mxu0 0.0
      %661 = vmatprep.subr.mxu0 0.0
      %662 = vmatpush1.msra.mxu0 0.0
      %663 = vmatprep.subr.mxu0 0.0
      %664 = vmatpush1.msra.mxu0 0.0
      %665 = vmatprep.subr.mxu0 0.0
      %666 = vmatpush1.msra.mxu0 0.0
      %667 = vmatprep.subr.mxu0 0.0
      %668 = vmatpush1.msra.mxu0 0.0
      %669 = vmatprep.subr.mxu0 0.0
      %670 = vmatpush1.msra.mxu0 0.0
      %671 = vmatprep.subr.mxu0 0.0
      %672 = vmatpush1.msra.mxu0 0.0
      %673 = vmatprep.subr.mxu0 0.0
      %674 = vmatpush1.msra.mxu0 0.0
      %675 = vmatprep.subr.mxu0 0.0
      %676 = vmatpush1.msra.mxu0 0.0
      %677 = vmatprep.subr.mxu0 0.0
      %678 = vmatpush1.msra.mxu0 0.0
      %679 = vmatprep.subr.mxu0 0.0
      %680 = vmatpush1.msra.mxu0 0.0
      %681 = vmatprep.subr.mxu0 0.0
      %682 = vmatpush1.msra.mxu0 0.0
      %683 = vmatprep.subr.mxu0 0.0
      %684 = vmatpush1.msra.mxu0 0.0
      %685 = vmatprep.subr.mxu0 0.0
      %686 = vmatpush1.msra.mxu0 0.0
      %687 = vmatprep.subr.mxu0 0.0
      %688 = vmatpush1.msra.mxu0 0.0
      %689 = vmatprep.subr.mxu0 0.0
      %690 = vmatpush1.msra.mxu0 0.0
      %691 = vmatprep.subr.mxu0 0.0
      %692 = vmatpush1.msra.mxu0 0.0
      %693 = vmatprep.subr.mxu0 0.0
      %694 = vmatpush1.msra.mxu0 0.0
      %695 = vmatprep.subr.mxu0 0.0
      %696 = vmatpush1.msra.mxu0 0.0
      %697 = vmatprep.subr.mxu0 0.0
      %698 = vmatpush1.msra.mxu0 0.0
      %699 = vmatprep.subr.mxu0 0.0
      %700 = vmatpush1.msra.mxu0 0.0
      %701 = vmatprep.subr.mxu0 0.0
      %702 = vmatpush1.msra.mxu0 0.0
      %703 = vmatprep.subr.mxu0 0.0
      %704 = vmatpush1.msra.mxu0 0.0
      %705 = vmatprep.mubr.f32.mxu0 0.0
      %706 = vmatmul.mubr.f32.gmra.mrb[0].mxu0 %v633
      %v707 = vpop.f32.mrb[0].mxu0
      %v708 = vadd.f32 0.0, %v707
      %v709 = vpop.f32.mrb[0].mxu0
      %710 = vmatprep.mubr.f32.mxu0 0.0
      %711 = vmatmul.mubr.f32.gmra.mrb[0].mxu0 %v635
      %v712 = vpop.f32.mrb[0].mxu0
      %v713 = vadd.f32 0.0, %v712
      %v714 = vpop.f32.mrb[0].mxu0
      %715 = vmatprep.mubr.f32.mxu0 0.0
      %716 = vmatmul.mubr.f32.gmra.mrb[0].mxu0 %v637
      %v717 = vpop.f32.mrb[0].mxu0
      %v718 = vadd.f32 0.0, %v717
      %v719 = vpop.f32.mrb[0].mxu0
      %720 = vmatprep.mubr.f32.mxu0 0.0
      %721 = vmatmul.mubr.f32.gmra.mrb[0].mxu0 %v639
      %v722 = vpop.f32.mrb[0].mxu0
      %v723 = vadd.f32 0.0, %v722
      %v724 = vpop.f32.mrb[0].mxu0
      %725 = vdwg.mxu0
      %v726 = vadd.f32 %v621, %v708
      %v727 = vadd.f32 %v622, %v713
      %v728 = vadd.f32 %v623, %v718
      %v729 = vadd.f32 %v624, %v723
      %v730 = vld [vmem:[%s2] sm:$0x1]
      %v732 = vlaneseq
      %v733 = vshrl.u32 %v732, 7
      %v734 = vsub.s32 0, %v733
      %v735 = vrot.slane %v730, %v734
      %v737 = vadd.f32 %v726, %v735
      %v738 = vadd.f32 %v727, %v735
      %v739 = vadd.f32 %v728, %v735
      %v740 = vadd.f32 %v729, %v735
      %vm741 = vcmp.ge.f32.partialorder %v737, 0.0
      %vm742 = vcmp.ge.f32.partialorder %v738, 0.0
      %vm743 = vcmp.ge.f32.partialorder %v739, 0.0
      %vm744 = vcmp.ge.f32.partialorder %v740, 0.0
      %v745 = vmul.f32 %v737, 0.1
      %v746 = vmul.f32 %v738, 0.1
      %v747 = vmul.f32 %v739, 0.1
      %v748 = vmul.f32 %v740, 0.1
      %v749 = vsel %vm741, %v737, %v745
      %v750 = vsel %vm742, %v738, %v746
      %v751 = vsel %vm743, %v739, %v747
      %v752 = vsel %vm744, %v740, %v748
      %vm753 = vcmask 516096
      %754 = vst.msk [vmem:[%s170] sm:$0x1] %vm753, %v749
      %s755 = scalar_lea.vmem %s170, 1
      %756 = vst.msk [vmem:[%s755] sm:$0x1] %vm753, %v750
      %s757 = scalar_lea.vmem %s170, 2
      %758 = vst.msk [vmem:[%s757] sm:$0x1] %vm753, %v751
      %s759 = scalar_lea.vmem %s170, 3
      %760 = vst.msk [vmem:[%s759] sm:$0x1] %vm753, %v752
      %s761 = smul.u32 4, %s14
      %p762 = scmp.lt.s32.totalorder %s761, 7
      %s763 = scalar_select %p762, %s761, 7
      %s764 = scalar_lea.vmem %s3, %s763
      // Predicated region
      $region33: #{_lambda_.10} parent=31 // pred_check
        %p765 = pneg %p100
      $region34: #{_lambda_.10} parent=31 // pred_check_branch
        %767 = sbr.rel (%p765) target = $region36
      $region35: #{_lambda_.10} parent=31 // pred_region
        %s768 = smul.u32 4, %s14
      $region36: #{_lambda_.10} parent=31 // pred_fallthru
        _
    $region32: #{_lambda_.10} parent=5 // pred_fallthru
      _
    %p769 = scmp.le.s32.totalorder 2, %s9
    // Predicated region
    $region37: #{_lambda_.10} parent=5 // pred_check
      %p770 = pneg %p769
    $region38: #{_lambda_.10} parent=5 // pred_check_branch
      %772 = sbr.rel (%p770) target = $region40
    $region39: #{_lambda_.10} parent=5 // pred_region
      %s773 = ssub.s32 %s9, 2
      // Predicated region
      $region41: #{_lambda_.10} parent=39 // pred_check
        %p774 = pneg %p106
      $region42: #{_lambda_.10} parent=39 // pred_check_branch
        %776 = sbr.rel (%p774) target = $region44
      $region43: #{_lambda_.10} parent=39 // pred_region
        %s777 = smul.u32 4, %s15
        %p778 = scmp.lt.s32.totalorder %s777, 7
        %s779 = scalar_select %p778, %s777, 7
        %s780 = scalar_lea.vmem %s3, %s779
      $region44: #{_lambda_.10} parent=39 // pred_fallthru
        _
    $region40: #{_lambda_.10} parent=5 // pred_fallthru
      _
  $region6: #{_lambda_.10} parent=0 // loop_footer
    %s13 = sadd.s32 1, %s9
  $region7: #{_lambda_.10} parent=0 // loop_footer_branch
    %8 = sbr.rel target = $region3
  $region8: #{_lambda_.10} parent=0 // loop_exit
    _

</llo_original>
